<compile_context>
chip_gen: v7x
topology: tpu7x:2x2x1
jax: 0.10.0
libtpu: 0.0.40
codegen_flags: <defaults>
</compile_context>

<pallas_src>
import functools

import numpy as np

import jax
import jax.numpy as jnp
from jax import lax
from jax.experimental import pallas as pl
from jax.experimental.pallas import tpu as pltpu


# ---------------------------------------------------------------------------
# Fused Pallas kernel: conv1+relu+pool -> conv2+relu+pool -> fc+tanh
# ---------------------------------------------------------------------------
def _net_bulk_kernel(x_ref, t1_ref, b1_ref, t2_ref, b2_ref, tf_ref, bf_ref,
                     o_ref, z1_ref, z2_ref, *, tb, mblk):
    f32 = jnp.float32
    bf16 = jnp.bfloat16

    b1 = b1_ref[...]                                   # (1, 128) f32
    b2 = b2_ref[...]                                   # (1, 128) f32

    # ---- conv1 (Toeplitz matmuls) + bias + ReLU + 2x2 max-pool -------------
    # Pooled row po = 2u + pi is stored at z1_ref[pi, u*tb + b, q*8 + co].
    # M rows (u*tb + b) are processed in mblk-row sub-blocks; the two f32
    # (mblk, 256) accumulators stay register-resident across the kh loop.
    n_sub1 = (7 * tb) // mblk
    for pi in range(2):
        def c1_body(j, carry, pi=pi):
            m0 = pl.multiple_of(j * mblk, mblk)
            acc0 = jnp.zeros((mblk, 256), f32)         # eh = 0
            acc1 = jnp.zeros((mblk, 256), f32)         # eh = 1
            for kh in range(5):
                t1k = t1_ref[kh]                       # (128, 256) bf16
                s0 = 2 * pi + kh                       # input row h = 4u + s
                s1 = s0 + 1
                x0 = x_ref[0, s0 % 4, s0 // 4, pl.ds(m0, mblk), :]
                x1 = x_ref[0, s1 % 4, s1 // 4, pl.ds(m0, mblk), :]
                acc0 = acc0 + jnp.dot(x0, t1k, preferred_element_type=f32)
                acc1 = acc1 + jnp.dot(x1, t1k, preferred_element_type=f32)
            m = jnp.maximum(acc0, acc1)                # pool over H parity
            m = jnp.maximum(m[:, :128], m[:, 128:])    # pool over W parity
            z1_ref[pi, pl.ds(m0, mblk), :] = (
                jnp.maximum(m + b1, 0.0).astype(bf16))
            return carry
        lax.fori_loop(0, n_sub1, c1_body, 0)

    # ---- conv2 (Toeplitz matmuls) + bias + ReLU + 2x2 max-pool -------------
    # M row = p2*tb + b (p2 = pooled conv2 row); mblk divides tb so each
    # sub-block stays inside a single p2 and the needed z1 slice is simply
    # offset by (s//2)*tb.
    n_sub2 = (5 * tb) // mblk
    def c2_body(j, carry):
        m0 = pl.multiple_of(j * mblk, mblk)
        acc0 = jnp.zeros((mblk, 256), f32)
        acc1 = jnp.zeros((mblk, 256), f32)
        for kh in range(5):
            t2k = t2_ref[kh]                           # (128, 256) bf16
            for eh in range(2):
                s = eh + kh                            # z1 pooled row = 2*p2+s
                start = pl.multiple_of(m0 + (s // 2) * tb, mblk)
                xs = z1_ref[s % 2, pl.ds(start, mblk), :]
                d = jnp.dot(xs, t2k, preferred_element_type=f32)
                if eh == 0:
                    acc0 = acc0 + d
                else:
                    acc1 = acc1 + d
        m = jnp.maximum(acc0, acc1)                    # pool over H parity
        m = jnp.maximum(m[:, :128], m[:, 128:])        # pool over W parity
        z2_ref[pl.ds(m0, mblk), :] = jnp.maximum(m + b2, 0.0).astype(bf16)
        return carry
    lax.fori_loop(0, n_sub2, c2_body, 0)

    # ---- fc1 (400 -> 80, padded to 128 lanes) + tanh ------------------------
    acc3 = jnp.zeros((tb, 128), f32)
    for p2 in range(5):
        acc3 = acc3 + jnp.dot(z2_ref[pl.ds(p2 * tb, tb), :], tf_ref[p2],
                              preferred_element_type=f32)
    o_ref[...] = jnp.tanh(acc3 + bf_ref[...])


# ---------------------------------------------------------------------------
# Host-side layout plumbing (cheap; operates on the ~12 KB/image input)
# ---------------------------------------------------------------------------
def _round_up(n, m):
    return ((n + m - 1) // m) * m


def _prep_input(x_nchw, bp, tb):
    """Pack NCHW input into lane-dense, H-phase-split bf16 tiles.

    Returns (G, 4, 2, 7*tb, 128): [batch tile g, phase r, offset o,
    row u*tb + b_local, lane w*4 + c]; value = x[b, c, 4*(u+o) + r, w].
    """
    B = x_nchw.shape[0]
    x = x_nchw.astype(jnp.bfloat16)                          # cast early
    x = jnp.transpose(x, (2, 0, 3, 1))                       # (32, B, 32, 3)
    x = jnp.pad(x, ((0, 0), (0, bp - B), (0, 0), (0, 1)))    # pad B, C 3->4
    x = x.reshape(32, bp, 128)                               # lane = w*4 + c
    x = x.reshape(8, 4, bp, 128)                             # h = 4*u' + r
    x = jnp.stack([x[0:7], x[1:8]], axis=0)                  # (2, 7, 4, Bp, 128)
    g = bp // tb
    x = x.reshape(2, 7, 4, g, tb, 128)
    x = jnp.transpose(x, (3, 2, 0, 1, 4, 5))                 # (g, r, o, u, tb, 128)
    return x.reshape(g, 4, 2, 7 * tb, 128)


def net_bulk_forward(x_nchw, params, *, block_b=128):
    B = x_nchw.shape[0]
    assert x_nchw.shape[1:] == (3, 32, 32), x_nchw.shape

    b16 = _round_up(B, 16)
    tb = max(16, min(_round_up(block_b, 16), b16, 256))      # batch tile
    if b16 >= 32:                                            # >=2 grid steps so the
        tb = min(tb, max(16, _round_up(b16 // 2, 16)))       # parallel axis feeds both v7x TCs
    bp = _round_up(B, tb)
    g = bp // tb
    mblk = 64 if tb % 64 == 0 else (32 if tb % 32 == 0 else 16)
    assert tb % mblk == 0

    xq = _prep_input(x_nchw, bp, tb)
    kernel = functools.partial(_net_bulk_kernel, tb=tb, mblk=mblk)

    out = pl.pallas_call(
        kernel,
        out_shape=jax.ShapeDtypeStruct((bp, 128), jnp.float32),
        grid=(g,),
        in_specs=[
            pl.BlockSpec((1, 4, 2, 7 * tb, 128), lambda i: (i, 0, 0, 0, 0)),
            pl.BlockSpec((5, 128, 256), lambda i: (0, 0, 0)),   # conv1 Toeplitz
            pl.BlockSpec((1, 128), lambda i: (0, 0)),           # conv1 bias row
            pl.BlockSpec((5, 128, 256), lambda i: (0, 0, 0)),   # conv2 Toeplitz
            pl.BlockSpec((1, 128), lambda i: (0, 0)),           # conv2 bias row
            pl.BlockSpec((5, 128, 128), lambda i: (0, 0, 0)),   # fc mats (padded)
            pl.BlockSpec((1, 128), lambda i: (0, 0)),           # fc bias (padded)
        ],
        out_specs=pl.BlockSpec((tb, 128), lambda i: (i, 0)),
        scratch_shapes=[
            pltpu.VMEM((2, 7 * tb, 128), jnp.bfloat16),          # z1 (pooled conv1)
            pltpu.VMEM((5 * tb, 128), jnp.bfloat16),             # z2 (pooled conv2)
        ],
        compiler_params=pltpu.CompilerParams(
            dimension_semantics=("parallel",),
            vmem_limit_bytes=48 * 1024 * 1024,                   # v7x-safe (<64 MiB)
        ),
    )(xq, params["t1"], params["b1"], params["t2"], params["b2"],
      params["tf"], params["bf"])
    return out[:B, :80]


# ---------------------------------------------------------------------------
# Parameters: PyTorch-layout weights -> lane-dense Toeplitz matrices (once)
# ---------------------------------------------------------------------------
def init_raw_params(key):
    """Deterministic stand-in for Net_Bulk's trained parameters (PyTorch layout)."""
    ks = jax.random.split(key, 6)
    return dict(
        w1=jax.random.normal(ks[0], (6, 3, 5, 5), jnp.float32) * 0.1,
        b1=jax.random.normal(ks[1], (6,), jnp.float32) * 0.1,
        w2=jax.random.normal(ks[2], (16, 6, 5, 5), jnp.float32) * 0.1,
        b2=jax.random.normal(ks[3], (16,), jnp.float32) * 0.1,
        wfc=jax.random.normal(ks[4], (80, 16 * 5 * 5), jnp.float32) * 0.05,
        bfc=jax.random.normal(ks[5], (80,), jnp.float32) * 0.05,
    )


def pack_params(raw):
    """Build banded Toeplitz weight matrices (host-side, done once)."""
    w1 = np.asarray(raw["w1"], np.float32)
    b1 = np.asarray(raw["b1"], np.float32)
    w2 = np.asarray(raw["w2"], np.float32)
    b2 = np.asarray(raw["b2"], np.float32)
    wfc = np.asarray(raw["wfc"], np.float32)
    bfc = np.asarray(raw["bfc"], np.float32)

    # conv1: rows = w*4 + ci (C_in 3 padded to 4), cols = ew*128 + q*8 + co.
    t1 = np.zeros((5, 128, 256), np.float32)
    for kh in range(5):
        for ew in range(2):
            for q in range(14):
                for kw in range(5):
                    w = 2 * q + ew + kw
                    t1[kh, w * 4:w * 4 + 3,
                       ew * 128 + q * 8:ew * 128 + q * 8 + 6] = w1[:, :, kh, kw].T
    b1row = np.zeros((1, 128), np.float32)
    for q in range(14):
        b1row[0, q * 8:q * 8 + 6] = b1

    # conv2: rows = q*8 + ci (ci < 6), cols = ew*128 + q2*16 + co.
    t2 = np.zeros((5, 128, 256), np.float32)
    for kh in range(5):
        for ew in range(2):
            for q2 in range(5):
                for kw in range(5):
                    q = 2 * q2 + ew + kw
                    t2[kh, q * 8:q * 8 + 6,
                       ew * 128 + q2 * 16:ew * 128 + q2 * 16 + 16] = w2[:, :, kh, kw].T
    b2row = np.zeros((1, 128), np.float32)
    for q2 in range(5):
        b2row[0, q2 * 16:q2 * 16 + 16] = b2

    # fc: rows = q2*16 + co, one (128, 128) matrix per p2 (cols 80..127 zero).
    # PyTorch flatten of (B, 16, 5, 5) uses feature index co*25 + p2*5 + q2.
    tf = np.zeros((5, 128, 128), np.float32)
    for p2 in range(5):
        for q2 in range(5):
            cols = np.arange(16) * 25 + p2 * 5 + q2
            tf[p2, q2 * 16:q2 * 16 + 16, :80] = wfc[:, cols].T
    bfrow = np.zeros((1, 128), np.float32)
    bfrow[0, :80] = bfc

    return dict(
        t1=jnp.asarray(t1, jnp.bfloat16),
        b1=jnp.asarray(b1row, jnp.float32),
        t2=jnp.asarray(t2, jnp.bfloat16),
        b2=jnp.asarray(b2row, jnp.float32),
        tf=jnp.asarray(tf, jnp.bfloat16),
        bf=jnp.asarray(bfrow, jnp.float32),
    )


# ---------------------------------------------------------------------------
# Plain-XLA reference (faithful translation of the PyTorch module)
# ---------------------------------------------------------------------------
def reference_forward(x_nchw, raw):
    x = jnp.transpose(x_nchw, (0, 2, 3, 1))  # NHWC

    def conv(x, w, b):
        y = lax.conv_general_dilated(
            x, jnp.transpose(w, (2, 3, 1, 0)), (1, 1), "VALID",
            dimension_numbers=("NHWC", "HWIO", "NHWC"))
        return y + b

    def pool(x):
        return lax.reduce_window(x, -jnp.inf, lax.max,
                                 (1, 2, 2, 1), (1, 2, 2, 1), "VALID")

    y = pool(jnp.maximum(conv(x, raw["w1"], raw["b1"]), 0.0))
    y = pool(jnp.maximum(conv(y, raw["w2"], raw["b2"]), 0.0))
    flat = jnp.transpose(y, (0, 3, 1, 2)).reshape(x.shape[0], -1)
    return jnp.tanh(flat @ raw["wfc"].T + raw["bfc"])


if __name__ == "__main__":
    key = jax.random.PRNGKey(0)
    pkey, xkey = jax.random.split(key)
    raw = init_raw_params(pkey)
    params = pack_params(raw)

    # SVHN-style input: the 16*5*5 flatten requires 3x32x32 images. batch=2.
    x = jax.random.normal(xkey, (2, 3, 32, 32), jnp.float32)

    fwd = jax.jit(net_bulk_forward)
    out = jax.block_until_ready(fwd(x, params))
    assert out.shape == (2, 80), out.shape
    assert bool(jnp.all(jnp.isfinite(out)))

    # Cross-check vs. the f32 XLA reference (kernel uses bf16 MXU operands with
    # f32 accumulation, so allow a loose absolute tolerance).
    ref = jax.block_until_ready(reference_forward(x, raw))
    err = float(jnp.max(jnp.abs(out - ref)))
    assert err < 0.25, f"max abs err vs reference: {err}"
    print("KERNEL_OK")
</pallas_src>

<mosaic_0001>
module attributes {stable_mosaic.version = 11 : i64} {
  func.func @_net_bulk_kernel(%arg0: i32, %arg1: memref<1x4x2x112x128xbf16, #tpu.memory_space<vmem>>, %arg2: memref<5x128x256xbf16, #tpu.memory_space<vmem>>, %arg3: memref<1x128xf32, #tpu.memory_space<vmem>>, %arg4: memref<5x128x256xbf16, #tpu.memory_space<vmem>>, %arg5: memref<1x128xf32, #tpu.memory_space<vmem>>, %arg6: memref<5x128x128xbf16, #tpu.memory_space<vmem>>, %arg7: memref<1x128xf32, #tpu.memory_space<vmem>>, %arg8: memref<16x128xf32, #tpu.memory_space<vmem>>, %arg9: memref<2x112x128xbf16, #tpu.memory_space<vmem>>, %arg10: memref<80x128xbf16, #tpu.memory_space<vmem>>) attributes {dimension_semantics = [#tpu.dimension_semantics<parallel>], iteration_bounds = array<i64: 1>, scalar_prefetch = 0 : i64, scratch_operands = 2 : i64, tpu.core_type = #tpu.core_type<tc>, window_params = [{transform_indices = @transform_0, window_bounds = array<i64: 1, 4, 2, 112, 128>}, {pipeline_mode = #tpu.pipeline_mode<synchronous>, transform_indices = @transform_1, window_bounds = array<i64: 5, 128, 256>}, {pipeline_mode = #tpu.pipeline_mode<synchronous>, transform_indices = @transform_2, window_bounds = array<i64: 1, 128>}, {pipeline_mode = #tpu.pipeline_mode<synchronous>, transform_indices = @transform_3, window_bounds = array<i64: 5, 128, 256>}, {pipeline_mode = #tpu.pipeline_mode<synchronous>, transform_indices = @transform_4, window_bounds = array<i64: 1, 128>}, {pipeline_mode = #tpu.pipeline_mode<synchronous>, transform_indices = @transform_5, window_bounds = array<i64: 5, 128, 128>}, {pipeline_mode = #tpu.pipeline_mode<synchronous>, transform_indices = @transform_6, window_bounds = array<i64: 1, 128>}, {transform_indices = @transform_7, window_bounds = array<i64: 16, 128>}]} {
    %c0 = arith.constant 0 : index
    %c0_0 = arith.constant 0 : index
    %0 = vector.load %arg3[%c0, %c0_0] : memref<1x128xf32, #tpu.memory_space<vmem>>, vector<1x128xf32>
    %c0_1 = arith.constant 0 : index
    %c0_2 = arith.constant 0 : index
    %1 = vector.load %arg5[%c0_1, %c0_2] : memref<1x128xf32, #tpu.memory_space<vmem>>, vector<1x128xf32>
    %c0_i32 = arith.constant 0 : i32
    %c7_i32 = arith.constant 7 : i32
    %2 = arith.addi %c0_i32, %c7_i32 : i32
    %c1_i32 = arith.constant 1 : i32
    scf.for %arg11 = %c0_i32 to %2 step %c1_i32  : i32 {
      %c16_i32 = arith.constant 16 : i32
      %36 = arith.muli %arg11, %c16_i32 : i32
      %37 = tpu.assume_multiple %36, 16 : i32
      %cst_37 = arith.constant 0.000000e+00 : f32
      %38 = vector.broadcast %cst_37 : f32 to vector<16x256xf32>
      %cst_38 = arith.constant 0.000000e+00 : f32
      %39 = vector.broadcast %cst_38 : f32 to vector<16x256xf32>
      %c0_39 = arith.constant 0 : index
      %c0_40 = arith.constant 0 : index
      %c0_41 = arith.constant 0 : index
      %40 = vector.load %arg2[%c0_39, %c0_40, %c0_41] : memref<5x128x256xbf16, #tpu.memory_space<vmem>>, vector<1x128x256xbf16>
      %41 = vector.shape_cast %40 : vector<1x128x256xbf16> to vector<128x256xbf16>
      %c0_42 = arith.constant 0 : index
      %c0_43 = arith.constant 0 : index
      %c0_44 = arith.constant 0 : index
      %42 = arith.index_cast %37 : i32 to index
      %c0_45 = arith.constant 0 : index
      %43 = vector.load %arg1[%c0_42, %c0_43, %c0_44, %42, %c0_45] : memref<1x4x2x112x128xbf16, #tpu.memory_space<vmem>>, vector<1x1x1x16x128xbf16>
      %44 = vector.shape_cast %43 : vector<1x1x1x16x128xbf16> to vector<16x128xbf16>
      %c0_46 = arith.constant 0 : index
      %c1_47 = arith.constant 1 : index
      %c0_48 = arith.constant 0 : index
      %45 = arith.index_cast %37 : i32 to index
      %c0_49 = arith.constant 0 : index
      %46 = vector.load %arg1[%c0_46, %c1_47, %c0_48, %45, %c0_49] : memref<1x4x2x112x128xbf16, #tpu.memory_space<vmem>>, vector<1x1x1x16x128xbf16>
      %47 = vector.shape_cast %46 : vector<1x1x1x16x128xbf16> to vector<16x128xbf16>
      %cst_50 = arith.constant dense<0.000000e+00> : vector<16x256xf32>
      %48 = tpu.matmul %44, %41, %cst_50 {dimension_numbers = #tpu.dot_dimension_numbers<[1], [0], [0], [1], [0, 0, 1, 1], [], []>} : vector<16x128xbf16>, vector<128x256xbf16>, vector<16x256xf32> -> vector<16x256xf32>
      %49 = arith.addf %38, %48 : vector<16x256xf32>
      %cst_51 = arith.constant dense<0.000000e+00> : vector<16x256xf32>
      %50 = tpu.matmul %47, %41, %cst_51 {dimension_numbers = #tpu.dot_dimension_numbers<[1], [0], [0], [1], [0, 0, 1, 1], [], []>} : vector<16x128xbf16>, vector<128x256xbf16>, vector<16x256xf32> -> vector<16x256xf32>
      %51 = arith.addf %39, %50 : vector<16x256xf32>
      %c1_52 = arith.constant 1 : index
      %c0_53 = arith.constant 0 : index
      %c0_54 = arith.constant 0 : index
      %52 = vector.load %arg2[%c1_52, %c0_53, %c0_54] : memref<5x128x256xbf16, #tpu.memory_space<vmem>>, vector<1x128x256xbf16>
      %53 = vector.shape_cast %52 : vector<1x128x256xbf16> to vector<128x256xbf16>
      %c0_55 = arith.constant 0 : index
      %c1_56 = arith.constant 1 : index
      %c0_57 = arith.constant 0 : index
      %54 = arith.index_cast %37 : i32 to index
      %c0_58 = arith.constant 0 : index
      %55 = vector.load %arg1[%c0_55, %c1_56, %c0_57, %54, %c0_58] : memref<1x4x2x112x128xbf16, #tpu.memory_space<vmem>>, vector<1x1x1x16x128xbf16>
      %56 = vector.shape_cast %55 : vector<1x1x1x16x128xbf16> to vector<16x128xbf16>
      %c0_59 = arith.constant 0 : index
      %c2_60 = arith.constant 2 : index
      %c0_61 = arith.constant 0 : index
      %57 = arith.index_cast %37 : i32 to index
      %c0_62 = arith.constant 0 : index
      %58 = vector.load %arg1[%c0_59, %c2_60, %c0_61, %57, %c0_62] : memref<1x4x2x112x128xbf16, #tpu.memory_space<vmem>>, vector<1x1x1x16x128xbf16>
      %59 = vector.shape_cast %58 : vector<1x1x1x16x128xbf16> to vector<16x128xbf16>
      %cst_63 = arith.constant dense<0.000000e+00> : vector<16x256xf32>
      %60 = tpu.matmul %56, %53, %cst_63 {dimension_numbers = #tpu.dot_dimension_numbers<[1], [0], [0], [1], [0, 0, 1, 1], [], []>} : vector<16x128xbf16>, vector<128x256xbf16>, vector<16x256xf32> -> vector<16x256xf32>
      %61 = arith.addf %49, %60 : vector<16x256xf32>
      %cst_64 = arith.constant dense<0.000000e+00> : vector<16x256xf32>
      %62 = tpu.matmul %59, %53, %cst_64 {dimension_numbers = #tpu.dot_dimension_numbers<[1], [0], [0], [1], [0, 0, 1, 1], [], []>} : vector<16x128xbf16>, vector<128x256xbf16>, vector<16x256xf32> -> vector<16x256xf32>
      %63 = arith.addf %51, %62 : vector<16x256xf32>
      %c2_65 = arith.constant 2 : index
      %c0_66 = arith.constant 0 : index
      %c0_67 = arith.constant 0 : index
      %64 = vector.load %arg2[%c2_65, %c0_66, %c0_67] : memref<5x128x256xbf16, #tpu.memory_space<vmem>>, vector<1x128x256xbf16>
      %65 = vector.shape_cast %64 : vector<1x128x256xbf16> to vector<128x256xbf16>
      %c0_68 = arith.constant 0 : index
      %c2_69 = arith.constant 2 : index
      %c0_70 = arith.constant 0 : index
      %66 = arith.index_cast %37 : i32 to index
      %c0_71 = arith.constant 0 : index
      %67 = vector.load %arg1[%c0_68, %c2_69, %c0_70, %66, %c0_71] : memref<1x4x2x112x128xbf16, #tpu.memory_space<vmem>>, vector<1x1x1x16x128xbf16>
      %68 = vector.shape_cast %67 : vector<1x1x1x16x128xbf16> to vector<16x128xbf16>
      %c0_72 = arith.constant 0 : index
      %c3_73 = arith.constant 3 : index
      %c0_74 = arith.constant 0 : index
      %69 = arith.index_cast %37 : i32 to index
      %c0_75 = arith.constant 0 : index
      %70 = vector.load %arg1[%c0_72, %c3_73, %c0_74, %69, %c0_75] : memref<1x4x2x112x128xbf16, #tpu.memory_space<vmem>>, vector<1x1x1x16x128xbf16>
      %71 = vector.shape_cast %70 : vector<1x1x1x16x128xbf16> to vector<16x128xbf16>
      %cst_76 = arith.constant dense<0.000000e+00> : vector<16x256xf32>
      %72 = tpu.matmul %68, %65, %cst_76 {dimension_numbers = #tpu.dot_dimension_numbers<[1], [0], [0], [1], [0, 0, 1, 1], [], []>} : vector<16x128xbf16>, vector<128x256xbf16>, vector<16x256xf32> -> vector<16x256xf32>
      %73 = arith.addf %61, %72 : vector<16x256xf32>
      %cst_77 = arith.constant dense<0.000000e+00> : vector<16x256xf32>
      %74 = tpu.matmul %71, %65, %cst_77 {dimension_numbers = #tpu.dot_dimension_numbers<[1], [0], [0], [1], [0, 0, 1, 1], [], []>} : vector<16x128xbf16>, vector<128x256xbf16>, vector<16x256xf32> -> vector<16x256xf32>
      %75 = arith.addf %63, %74 : vector<16x256xf32>
      %c3_78 = arith.constant 3 : index
      %c0_79 = arith.constant 0 : index
      %c0_80 = arith.constant 0 : index
      %76 = vector.load %arg2[%c3_78, %c0_79, %c0_80] : memref<5x128x256xbf16, #tpu.memory_space<vmem>>, vector<1x128x256xbf16>
      %77 = vector.shape_cast %76 : vector<1x128x256xbf16> to vector<128x256xbf16>
      %c0_81 = arith.constant 0 : index
      %c3_82 = arith.constant 3 : index
      %c0_83 = arith.constant 0 : index
      %78 = arith.index_cast %37 : i32 to index
      %c0_84 = arith.constant 0 : index
      %79 = vector.load %arg1[%c0_81, %c3_82, %c0_83, %78, %c0_84] : memref<1x4x2x112x128xbf16, #tpu.memory_space<vmem>>, vector<1x1x1x16x128xbf16>
      %80 = vector.shape_cast %79 : vector<1x1x1x16x128xbf16> to vector<16x128xbf16>
      %c0_85 = arith.constant 0 : index
      %c0_86 = arith.constant 0 : index
      %c1_87 = arith.constant 1 : index
      %81 = arith.index_cast %37 : i32 to index
      %c0_88 = arith.constant 0 : index
      %82 = vector.load %arg1[%c0_85, %c0_86, %c1_87, %81, %c0_88] : memref<1x4x2x112x128xbf16, #tpu.memory_space<vmem>>, vector<1x1x1x16x128xbf16>
      %83 = vector.shape_cast %82 : vector<1x1x1x16x128xbf16> to vector<16x128xbf16>
      %cst_89 = arith.constant dense<0.000000e+00> : vector<16x256xf32>
      %84 = tpu.matmul %80, %77, %cst_89 {dimension_numbers = #tpu.dot_dimension_numbers<[1], [0], [0], [1], [0, 0, 1, 1], [], []>} : vector<16x128xbf16>, vector<128x256xbf16>, vector<16x256xf32> -> vector<16x256xf32>
      %85 = arith.addf %73, %84 : vector<16x256xf32>
      %cst_90 = arith.constant dense<0.000000e+00> : vector<16x256xf32>
      %86 = tpu.matmul %83, %77, %cst_90 {dimension_numbers = #tpu.dot_dimension_numbers<[1], [0], [0], [1], [0, 0, 1, 1], [], []>} : vector<16x128xbf16>, vector<128x256xbf16>, vector<16x256xf32> -> vector<16x256xf32>
      %87 = arith.addf %75, %86 : vector<16x256xf32>
      %c4_91 = arith.constant 4 : index
      %c0_92 = arith.constant 0 : index
      %c0_93 = arith.constant 0 : index
      %88 = vector.load %arg2[%c4_91, %c0_92, %c0_93] : memref<5x128x256xbf16, #tpu.memory_space<vmem>>, vector<1x128x256xbf16>
      %89 = vector.shape_cast %88 : vector<1x128x256xbf16> to vector<128x256xbf16>
      %c0_94 = arith.constant 0 : index
      %c0_95 = arith.constant 0 : index
      %c1_96 = arith.constant 1 : index
      %90 = arith.index_cast %37 : i32 to index
      %c0_97 = arith.constant 0 : index
      %91 = vector.load %arg1[%c0_94, %c0_95, %c1_96, %90, %c0_97] : memref<1x4x2x112x128xbf16, #tpu.memory_space<vmem>>, vector<1x1x1x16x128xbf16>
      %92 = vector.shape_cast %91 : vector<1x1x1x16x128xbf16> to vector<16x128xbf16>
      %c0_98 = arith.constant 0 : index
      %c1_99 = arith.constant 1 : index
      %c1_100 = arith.constant 1 : index
      %93 = arith.index_cast %37 : i32 to index
      %c0_101 = arith.constant 0 : index
      %94 = vector.load %arg1[%c0_98, %c1_99, %c1_100, %93, %c0_101] : memref<1x4x2x112x128xbf16, #tpu.memory_space<vmem>>, vector<1x1x1x16x128xbf16>
      %95 = vector.shape_cast %94 : vector<1x1x1x16x128xbf16> to vector<16x128xbf16>
      %cst_102 = arith.constant dense<0.000000e+00> : vector<16x256xf32>
      %96 = tpu.matmul %92, %89, %cst_102 {dimension_numbers = #tpu.dot_dimension_numbers<[1], [0], [0], [1], [0, 0, 1, 1], [], []>} : vector<16x128xbf16>, vector<128x256xbf16>, vector<16x256xf32> -> vector<16x256xf32>
      %97 = arith.addf %85, %96 : vector<16x256xf32>
      %cst_103 = arith.constant dense<0.000000e+00> : vector<16x256xf32>
      %98 = tpu.matmul %95, %89, %cst_103 {dimension_numbers = #tpu.dot_dimension_numbers<[1], [0], [0], [1], [0, 0, 1, 1], [], []>} : vector<16x128xbf16>, vector<128x256xbf16>, vector<16x256xf32> -> vector<16x256xf32>
      %99 = arith.addf %87, %98 : vector<16x256xf32>
      %100 = arith.maximumf %97, %99 : vector<16x256xf32>
      %101 = vector.extract_strided_slice %100 {offsets = [0, 0], sizes = [16, 128], strides = [1, 1]} : vector<16x256xf32> to vector<16x128xf32>
      %102 = vector.extract_strided_slice %100 {offsets = [0, 128], sizes = [16, 128], strides = [1, 1]} : vector<16x256xf32> to vector<16x128xf32>
      %103 = arith.maximumf %101, %102 : vector<16x128xf32>
      %104 = vector.broadcast %0 : vector<1x128xf32> to vector<16x128xf32>
      %105 = arith.addf %103, %104 : vector<16x128xf32>
      %cst_104 = arith.constant 0.000000e+00 : f32
      %106 = vector.broadcast %cst_104 : f32 to vector<16x128xf32>
      %107 = arith.maximumf %105, %106 : vector<16x128xf32>
      %108 = arith.truncf %107 : vector<16x128xf32> to vector<16x128xbf16>
      %c0_105 = arith.constant 0 : index
      %109 = arith.index_cast %37 : i32 to index
      %c0_106 = arith.constant 0 : index
      %110 = vector.load %arg9[%c0_105, %109, %c0_106] : memref<2x112x128xbf16, #tpu.memory_space<vmem>>, vector<1x16x128xbf16>
      %111 = vector.shape_cast %110 : vector<1x16x128xbf16> to vector<16x128xbf16>
      %112 = vector.shape_cast %108 : vector<16x128xbf16> to vector<1x16x128xbf16>
      tpu.vector_store %arg9[%c0_105, %109, %c0_106], %112 {strides = array<i32>} : memref<2x112x128xbf16, #tpu.memory_space<vmem>>, vector<1x16x128xbf16>,
    }
    %c7_i32_3 = arith.constant 7 : i32
    %c0_i32_4 = arith.constant 0 : i32
    %c7_i32_5 = arith.constant 7 : i32
    %3 = arith.addi %c0_i32_4, %c7_i32_5 : i32
    %c1_i32_6 = arith.constant 1 : i32
    scf.for %arg11 = %c0_i32_4 to %3 step %c1_i32_6  : i32 {
      %c16_i32 = arith.constant 16 : i32
      %36 = arith.muli %arg11, %c16_i32 : i32
      %37 = tpu.assume_multiple %36, 16 : i32
      %cst_37 = arith.constant 0.000000e+00 : f32
      %38 = vector.broadcast %cst_37 : f32 to vector<16x256xf32>
      %cst_38 = arith.constant 0.000000e+00 : f32
      %39 = vector.broadcast %cst_38 : f32 to vector<16x256xf32>
      %c0_39 = arith.constant 0 : index
      %c0_40 = arith.constant 0 : index
      %c0_41 = arith.constant 0 : index
      %40 = vector.load %arg2[%c0_39, %c0_40, %c0_41] : memref<5x128x256xbf16, #tpu.memory_space<vmem>>, vector<1x128x256xbf16>
      %41 = vector.shape_cast %40 : vector<1x128x256xbf16> to vector<128x256xbf16>
      %c0_42 = arith.constant 0 : index
      %c2_43 = arith.constant 2 : index
      %c0_44 = arith.constant 0 : index
      %42 = arith.index_cast %37 : i32 to index
      %c0_45 = arith.constant 0 : index
      %43 = vector.load %arg1[%c0_42, %c2_43, %c0_44, %42, %c0_45] : memref<1x4x2x112x128xbf16, #tpu.memory_space<vmem>>, vector<1x1x1x16x128xbf16>
      %44 = vector.shape_cast %43 : vector<1x1x1x16x128xbf16> to vector<16x128xbf16>
      %c0_46 = arith.constant 0 : index
      %c3_47 = arith.constant 3 : index
      %c0_48 = arith.constant 0 : index
      %45 = arith.index_cast %37 : i32 to index
      %c0_49 = arith.constant 0 : index
      %46 = vector.load %arg1[%c0_46, %c3_47, %c0_48, %45, %c0_49] : memref<1x4x2x112x128xbf16, #tpu.memory_space<vmem>>, vector<1x1x1x16x128xbf16>
      %47 = vector.shape_cast %46 : vector<1x1x1x16x128xbf16> to vector<16x128xbf16>
      %cst_50 = arith.constant dense<0.000000e+00> : vector<16x256xf32>
      %48 = tpu.matmul %44, %41, %cst_50 {dimension_numbers = #tpu.dot_dimension_numbers<[1], [0], [0], [1], [0, 0, 1, 1], [], []>} : vector<16x128xbf16>, vector<128x256xbf16>, vector<16x256xf32> -> vector<16x256xf32>
      %49 = arith.addf %38, %48 : vector<16x256xf32>
      %cst_51 = arith.constant dense<0.000000e+00> : vector<16x256xf32>
      %50 = tpu.matmul %47, %41, %cst_51 {dimension_numbers = #tpu.dot_dimension_numbers<[1], [0], [0], [1], [0, 0, 1, 1], [], []>} : vector<16x128xbf16>, vector<128x256xbf16>, vector<16x256xf32> -> vector<16x256xf32>
      %51 = arith.addf %39, %50 : vector<16x256xf32>
      %c1_52 = arith.constant 1 : index
      %c0_53 = arith.constant 0 : index
      %c0_54 = arith.constant 0 : index
      %52 = vector.load %arg2[%c1_52, %c0_53, %c0_54] : memref<5x128x256xbf16, #tpu.memory_space<vmem>>, vector<1x128x256xbf16>
      %53 = vector.shape_cast %52 : vector<1x128x256xbf16> to vector<128x256xbf16>
      %c0_55 = arith.constant 0 : index
      %c3_56 = arith.constant 3 : index
      %c0_57 = arith.constant 0 : index
      %54 = arith.index_cast %37 : i32 to index
      %c0_58 = arith.constant 0 : index
      %55 = vector.load %arg1[%c0_55, %c3_56, %c0_57, %54, %c0_58] : memref<1x4x2x112x128xbf16, #tpu.memory_space<vmem>>, vector<1x1x1x16x128xbf16>
      %56 = vector.shape_cast %55 : vector<1x1x1x16x128xbf16> to vector<16x128xbf16>
      %c0_59 = arith.constant 0 : index
      %c0_60 = arith.constant 0 : index
      %c1_61 = arith.constant 1 : index
      %57 = arith.index_cast %37 : i32 to index
      %c0_62 = arith.constant 0 : index
      %58 = vector.load %arg1[%c0_59, %c0_60, %c1_61, %57, %c0_62] : memref<1x4x2x112x128xbf16, #tpu.memory_space<vmem>>, vector<1x1x1x16x128xbf16>
      %59 = vector.shape_cast %58 : vector<1x1x1x16x128xbf16> to vector<16x128xbf16>
      %cst_63 = arith.constant dense<0.000000e+00> : vector<16x256xf32>
      %60 = tpu.matmul %56, %53, %cst_63 {dimension_numbers = #tpu.dot_dimension_numbers<[1], [0], [0], [1], [0, 0, 1, 1], [], []>} : vector<16x128xbf16>, vector<128x256xbf16>, vector<16x256xf32> -> vector<16x256xf32>
      %61 = arith.addf %49, %60 : vector<16x256xf32>
      %cst_64 = arith.constant dense<0.000000e+00> : vector<16x256xf32>
      %62 = tpu.matmul %59, %53, %cst_64 {dimension_numbers = #tpu.dot_dimension_numbers<[1], [0], [0], [1], [0, 0, 1, 1], [], []>} : vector<16x128xbf16>, vector<128x256xbf16>, vector<16x256xf32> -> vector<16x256xf32>
      %63 = arith.addf %51, %62 : vector<16x256xf32>
      %c2_65 = arith.constant 2 : index
      %c0_66 = arith.constant 0 : index
      %c0_67 = arith.constant 0 : index
      %64 = vector.load %arg2[%c2_65, %c0_66, %c0_67] : memref<5x128x256xbf16, #tpu.memory_space<vmem>>, vector<1x128x256xbf16>
      %65 = vector.shape_cast %64 : vector<1x128x256xbf16> to vector<128x256xbf16>
      %c0_68 = arith.constant 0 : index
      %c0_69 = arith.constant 0 : index
      %c1_70 = arith.constant 1 : index
      %66 = arith.index_cast %37 : i32 to index
      %c0_71 = arith.constant 0 : index
      %67 = vector.load %arg1[%c0_68, %c0_69, %c1_70, %66, %c0_71] : memref<1x4x2x112x128xbf16, #tpu.memory_space<vmem>>, vector<1x1x1x16x128xbf16>
      %68 = vector.shape_cast %67 : vector<1x1x1x16x128xbf16> to vector<16x128xbf16>
      %c0_72 = arith.constant 0 : index
      %c1_73 = arith.constant 1 : index
      %c1_74 = arith.constant 1 : index
      %69 = arith.index_cast %37 : i32 to index
      %c0_75 = arith.constant 0 : index
      %70 = vector.load %arg1[%c0_72, %c1_73, %c1_74, %69, %c0_75] : memref<1x4x2x112x128xbf16, #tpu.memory_space<vmem>>, vector<1x1x1x16x128xbf16>
      %71 = vector.shape_cast %70 : vector<1x1x1x16x128xbf16> to vector<16x128xbf16>
      %cst_76 = arith.constant dense<0.000000e+00> : vector<16x256xf32>
      %72 = tpu.matmul %68, %65, %cst_76 {dimension_numbers = #tpu.dot_dimension_numbers<[1], [0], [0], [1], [0, 0, 1, 1], [], []>} : vector<16x128xbf16>, vector<128x256xbf16>, vector<16x256xf32> -> vector<16x256xf32>
      %73 = arith.addf %61, %72 : vector<16x256xf32>
      %cst_77 = arith.constant dense<0.000000e+00> : vector<16x256xf32>
      %74 = tpu.matmul %71, %65, %cst_77 {dimension_numbers = #tpu.dot_dimension_numbers<[1], [0], [0], [1], [0, 0, 1, 1], [], []>} : vector<16x128xbf16>, vector<128x256xbf16>, vector<16x256xf32> -> vector<16x256xf32>
      %75 = arith.addf %63, %74 : vector<16x256xf32>
      %c3_78 = arith.constant 3 : index
      %c0_79 = arith.constant 0 : index
      %c0_80 = arith.constant 0 : index
      %76 = vector.load %arg2[%c3_78, %c0_79, %c0_80] : memref<5x128x256xbf16, #tpu.memory_space<vmem>>, vector<1x128x256xbf16>
      %77 = vector.shape_cast %76 : vector<1x128x256xbf16> to vector<128x256xbf16>
      %c0_81 = arith.constant 0 : index
      %c1_82 = arith.constant 1 : index
      %c1_83 = arith.constant 1 : index
      %78 = arith.index_cast %37 : i32 to index
      %c0_84 = arith.constant 0 : index
      %79 = vector.load %arg1[%c0_81, %c1_82, %c1_83, %78, %c0_84] : memref<1x4x2x112x128xbf16, #tpu.memory_space<vmem>>, vector<1x1x1x16x128xbf16>
      %80 = vector.shape_cast %79 : vector<1x1x1x16x128xbf16> to vector<16x128xbf16>
      %c0_85 = arith.constant 0 : index
      %c2_86 = arith.constant 2 : index
      %c1_87 = arith.constant 1 : index
      %81 = arith.index_cast %37 : i32 to index
      %c0_88 = arith.constant 0 : index
      %82 = vector.load %arg1[%c0_85, %c2_86, %c1_87, %81, %c0_88] : memref<1x4x2x112x128xbf16, #tpu.memory_space<vmem>>, vector<1x1x1x16x128xbf16>
      %83 = vector.shape_cast %82 : vector<1x1x1x16x128xbf16> to vector<16x128xbf16>
      %cst_89 = arith.constant dense<0.000000e+00> : vector<16x256xf32>
      %84 = tpu.matmul %80, %77, %cst_89 {dimension_numbers = #tpu.dot_dimension_numbers<[1], [0], [0], [1], [0, 0, 1, 1], [], []>} : vector<16x128xbf16>, vector<128x256xbf16>, vector<16x256xf32> -> vector<16x256xf32>
      %85 = arith.addf %73, %84 : vector<16x256xf32>
      %cst_90 = arith.constant dense<0.000000e+00> : vector<16x256xf32>
      %86 = tpu.matmul %83, %77, %cst_90 {dimension_numbers = #tpu.dot_dimension_numbers<[1], [0], [0], [1], [0, 0, 1, 1], [], []>} : vector<16x128xbf16>, vector<128x256xbf16>, vector<16x256xf32> -> vector<16x256xf32>
      %87 = arith.addf %75, %86 : vector<16x256xf32>
      %c4_91 = arith.constant 4 : index
      %c0_92 = arith.constant 0 : index
      %c0_93 = arith.constant 0 : index
      %88 = vector.load %arg2[%c4_91, %c0_92, %c0_93] : memref<5x128x256xbf16, #tpu.memory_space<vmem>>, vector<1x128x256xbf16>
      %89 = vector.shape_cast %88 : vector<1x128x256xbf16> to vector<128x256xbf16>
      %c0_94 = arith.constant 0 : index
      %c2_95 = arith.constant 2 : index
      %c1_96 = arith.constant 1 : index
      %90 = arith.index_cast %37 : i32 to index
      %c0_97 = arith.constant 0 : index
      %91 = vector.load %arg1[%c0_94, %c2_95, %c1_96, %90, %c0_97] : memref<1x4x2x112x128xbf16, #tpu.memory_space<vmem>>, vector<1x1x1x16x128xbf16>
      %92 = vector.shape_cast %91 : vector<1x1x1x16x128xbf16> to vector<16x128xbf16>
      %c0_98 = arith.constant 0 : index
      %c3_99 = arith.constant 3 : index
      %c1_100 = arith.constant 1 : index
      %93 = arith.index_cast %37 : i32 to index
      %c0_101 = arith.constant 0 : index
      %94 = vector.load %arg1[%c0_98, %c3_99, %c1_100, %93, %c0_101] : memref<1x4x2x112x128xbf16, #tpu.memory_space<vmem>>, vector<1x1x1x16x128xbf16>
      %95 = vector.shape_cast %94 : vector<1x1x1x16x128xbf16> to vector<16x128xbf16>
      %cst_102 = arith.constant dense<0.000000e+00> : vector<16x256xf32>
      %96 = tpu.matmul %92, %89, %cst_102 {dimension_numbers = #tpu.dot_dimension_numbers<[1], [0], [0], [1], [0, 0, 1, 1], [], []>} : vector<16x128xbf16>, vector<128x256xbf16>, vector<16x256xf32> -> vector<16x256xf32>
      %97 = arith.addf %85, %96 : vector<16x256xf32>
      %cst_103 = arith.constant dense<0.000000e+00> : vector<16x256xf32>
      %98 = tpu.matmul %95, %89, %cst_103 {dimension_numbers = #tpu.dot_dimension_numbers<[1], [0], [0], [1], [0, 0, 1, 1], [], []>} : vector<16x128xbf16>, vector<128x256xbf16>, vector<16x256xf32> -> vector<16x256xf32>
      %99 = arith.addf %87, %98 : vector<16x256xf32>
      %100 = arith.maximumf %97, %99 : vector<16x256xf32>
      %101 = vector.extract_strided_slice %100 {offsets = [0, 0], sizes = [16, 128], strides = [1, 1]} : vector<16x256xf32> to vector<16x128xf32>
      %102 = vector.extract_strided_slice %100 {offsets = [0, 128], sizes = [16, 128], strides = [1, 1]} : vector<16x256xf32> to vector<16x128xf32>
      %103 = arith.maximumf %101, %102 : vector<16x128xf32>
      %104 = vector.broadcast %0 : vector<1x128xf32> to vector<16x128xf32>
      %105 = arith.addf %103, %104 : vector<16x128xf32>
      %cst_104 = arith.constant 0.000000e+00 : f32
      %106 = vector.broadcast %cst_104 : f32 to vector<16x128xf32>
      %107 = arith.maximumf %105, %106 : vector<16x128xf32>
      %108 = arith.truncf %107 : vector<16x128xf32> to vector<16x128xbf16>
      %c1_105 = arith.constant 1 : index
      %109 = arith.index_cast %37 : i32 to index
      %c0_106 = arith.constant 0 : index
      %110 = vector.load %arg9[%c1_105, %109, %c0_106] : memref<2x112x128xbf16, #tpu.memory_space<vmem>>, vector<1x16x128xbf16>
      %111 = vector.shape_cast %110 : vector<1x16x128xbf16> to vector<16x128xbf16>
      %112 = vector.shape_cast %108 : vector<16x128xbf16> to vector<1x16x128xbf16>
      tpu.vector_store %arg9[%c1_105, %109, %c0_106], %112 {strides = array<i32>} : memref<2x112x128xbf16, #tpu.memory_space<vmem>>, vector<1x16x128xbf16>,
    }
    %c7_i32_7 = arith.constant 7 : i32
    %c0_i32_8 = arith.constant 0 : i32
    %c5_i32 = arith.constant 5 : i32
    %4 = arith.addi %c0_i32_8, %c5_i32 : i32
    %c1_i32_9 = arith.constant 1 : i32
    scf.for %arg11 = %c0_i32_8 to %4 step %c1_i32_9  : i32 {
      %c16_i32 = arith.constant 16 : i32
      %36 = arith.muli %arg11, %c16_i32 : i32
      %37 = tpu.assume_multiple %36, 16 : i32
      %cst_37 = arith.constant 0.000000e+00 : f32
      %38 = vector.broadcast %cst_37 : f32 to vector<16x256xf32>
      %cst_38 = arith.constant 0.000000e+00 : f32
      %39 = vector.broadcast %cst_38 : f32 to vector<16x256xf32>
      %c0_39 = arith.constant 0 : index
      %c0_40 = arith.constant 0 : index
      %c0_41 = arith.constant 0 : index
      %40 = vector.load %arg4[%c0_39, %c0_40, %c0_41] : memref<5x128x256xbf16, #tpu.memory_space<vmem>>, vector<1x128x256xbf16>
      %41 = vector.shape_cast %40 : vector<1x128x256xbf16> to vector<128x256xbf16>
      %c0_i32_42 = arith.constant 0 : i32
      %42 = arith.addi %37, %c0_i32_42 : i32
      %43 = tpu.assume_multiple %42, 16 : i32
      %c0_43 = arith.constant 0 : index
      %44 = arith.index_cast %43 : i32 to index
      %c0_44 = arith.constant 0 : index
      %45 = vector.load %arg9[%c0_43, %44, %c0_44] : memref<2x112x128xbf16, #tpu.memory_space<vmem>>, vector<1x16x128xbf16>
      %46 = vector.shape_cast %45 : vector<1x16x128xbf16> to vector<16x128xbf16>
      %cst_45 = arith.constant dense<0.000000e+00> : vector<16x256xf32>
      %47 = tpu.matmul %46, %41, %cst_45 {dimension_numbers = #tpu.dot_dimension_numbers<[1], [0], [0], [1], [0, 0, 1, 1], [], []>} : vector<16x128xbf16>, vector<128x256xbf16>, vector<16x256xf32> -> vector<16x256xf32>
      %48 = arith.addf %38, %47 : vector<16x256xf32>
      %c0_i32_46 = arith.constant 0 : i32
      %49 = arith.addi %37, %c0_i32_46 : i32
      %50 = tpu.assume_multiple %49, 16 : i32
      %c1_47 = arith.constant 1 : index
      %51 = arith.index_cast %50 : i32 to index
      %c0_48 = arith.constant 0 : index
      %52 = vector.load %arg9[%c1_47, %51, %c0_48] : memref<2x112x128xbf16, #tpu.memory_space<vmem>>, vector<1x16x128xbf16>
      %53 = vector.shape_cast %52 : vector<1x16x128xbf16> to vector<16x128xbf16>
      %cst_49 = arith.constant dense<0.000000e+00> : vector<16x256xf32>
      %54 = tpu.matmul %53, %41, %cst_49 {dimension_numbers = #tpu.dot_dimension_numbers<[1], [0], [0], [1], [0, 0, 1, 1], [], []>} : vector<16x128xbf16>, vector<128x256xbf16>, vector<16x256xf32> -> vector<16x256xf32>
      %55 = arith.addf %39, %54 : vector<16x256xf32>
      %c1_50 = arith.constant 1 : index
      %c0_51 = arith.constant 0 : index
      %c0_52 = arith.constant 0 : index
      %56 = vector.load %arg4[%c1_50, %c0_51, %c0_52] : memref<5x128x256xbf16, #tpu.memory_space<vmem>>, vector<1x128x256xbf16>
      %57 = vector.shape_cast %56 : vector<1x128x256xbf16> to vector<128x256xbf16>
      %c0_i32_53 = arith.constant 0 : i32
      %58 = arith.addi %37, %c0_i32_53 : i32
      %59 = tpu.assume_multiple %58, 16 : i32
      %c1_54 = arith.constant 1 : index
      %60 = arith.index_cast %59 : i32 to index
      %c0_55 = arith.constant 0 : index
      %61 = vector.load %arg9[%c1_54, %60, %c0_55] : memref<2x112x128xbf16, #tpu.memory_space<vmem>>, vector<1x16x128xbf16>
      %62 = vector.shape_cast %61 : vector<1x16x128xbf16> to vector<16x128xbf16>
      %cst_56 = arith.constant dense<0.000000e+00> : vector<16x256xf32>
      %63 = tpu.matmul %62, %57, %cst_56 {dimension_numbers = #tpu.dot_dimension_numbers<[1], [0], [0], [1], [0, 0, 1, 1], [], []>} : vector<16x128xbf16>, vector<128x256xbf16>, vector<16x256xf32> -> vector<16x256xf32>
      %64 = arith.addf %48, %63 : vector<16x256xf32>
      %c16_i32_57 = arith.constant 16 : i32
      %65 = arith.addi %37, %c16_i32_57 : i32
      %66 = tpu.assume_multiple %65, 16 : i32
      %c0_58 = arith.constant 0 : index
      %67 = arith.index_cast %66 : i32 to index
      %c0_59 = arith.constant 0 : index
      %68 = vector.load %arg9[%c0_58, %67, %c0_59] : memref<2x112x128xbf16, #tpu.memory_space<vmem>>, vector<1x16x128xbf16>
      %69 = vector.shape_cast %68 : vector<1x16x128xbf16> to vector<16x128xbf16>
      %cst_60 = arith.constant dense<0.000000e+00> : vector<16x256xf32>
      %70 = tpu.matmul %69, %57, %cst_60 {dimension_numbers = #tpu.dot_dimension_numbers<[1], [0], [0], [1], [0, 0, 1, 1], [], []>} : vector<16x128xbf16>, vector<128x256xbf16>, vector<16x256xf32> -> vector<16x256xf32>
      %71 = arith.addf %55, %70 : vector<16x256xf32>
      %c2_61 = arith.constant 2 : index
      %c0_62 = arith.constant 0 : index
      %c0_63 = arith.constant 0 : index
      %72 = vector.load %arg4[%c2_61, %c0_62, %c0_63] : memref<5x128x256xbf16, #tpu.memory_space<vmem>>, vector<1x128x256xbf16>
      %73 = vector.shape_cast %72 : vector<1x128x256xbf16> to vector<128x256xbf16>
      %c16_i32_64 = arith.constant 16 : i32
      %74 = arith.addi %37, %c16_i32_64 : i32
      %75 = tpu.assume_multiple %74, 16 : i32
      %c0_65 = arith.constant 0 : index
      %76 = arith.index_cast %75 : i32 to index
      %c0_66 = arith.constant 0 : index
      %77 = vector.load %arg9[%c0_65, %76, %c0_66] : memref<2x112x128xbf16, #tpu.memory_space<vmem>>, vector<1x16x128xbf16>
      %78 = vector.shape_cast %77 : vector<1x16x128xbf16> to vector<16x128xbf16>
      %cst_67 = arith.constant dense<0.000000e+00> : vector<16x256xf32>
      %79 = tpu.matmul %78, %73, %cst_67 {dimension_numbers = #tpu.dot_dimension_numbers<[1], [0], [0], [1], [0, 0, 1, 1], [], []>} : vector<16x128xbf16>, vector<128x256xbf16>, vector<16x256xf32> -> vector<16x256xf32>
      %80 = arith.addf %64, %79 : vector<16x256xf32>
      %c16_i32_68 = arith.constant 16 : i32
      %81 = arith.addi %37, %c16_i32_68 : i32
      %82 = tpu.assume_multiple %81, 16 : i32
      %c1_69 = arith.constant 1 : index
      %83 = arith.index_cast %82 : i32 to index
      %c0_70 = arith.constant 0 : index
      %84 = vector.load %arg9[%c1_69, %83, %c0_70] : memref<2x112x128xbf16, #tpu.memory_space<vmem>>, vector<1x16x128xbf16>
      %85 = vector.shape_cast %84 : vector<1x16x128xbf16> to vector<16x128xbf16>
      %cst_71 = arith.constant dense<0.000000e+00> : vector<16x256xf32>
      %86 = tpu.matmul %85, %73, %cst_71 {dimension_numbers = #tpu.dot_dimension_numbers<[1], [0], [0], [1], [0, 0, 1, 1], [], []>} : vector<16x128xbf16>, vector<128x256xbf16>, vector<16x256xf32> -> vector<16x256xf32>
      %87 = arith.addf %71, %86 : vector<16x256xf32>
      %c3_72 = arith.constant 3 : index
      %c0_73 = arith.constant 0 : index
      %c0_74 = arith.constant 0 : index
      %88 = vector.load %arg4[%c3_72, %c0_73, %c0_74] : memref<5x128x256xbf16, #tpu.memory_space<vmem>>, vector<1x128x256xbf16>
      %89 = vector.shape_cast %88 : vector<1x128x256xbf16> to vector<128x256xbf16>
      %c16_i32_75 = arith.constant 16 : i32
      %90 = arith.addi %37, %c16_i32_75 : i32
      %91 = tpu.assume_multiple %90, 16 : i32
      %c1_76 = arith.constant 1 : index
      %92 = arith.index_cast %91 : i32 to index
      %c0_77 = arith.constant 0 : index
      %93 = vector.load %arg9[%c1_76, %92, %c0_77] : memref<2x112x128xbf16, #tpu.memory_space<vmem>>, vector<1x16x128xbf16>
      %94 = vector.shape_cast %93 : vector<1x16x128xbf16> to vector<16x128xbf16>
      %cst_78 = arith.constant dense<0.000000e+00> : vector<16x256xf32>
      %95 = tpu.matmul %94, %89, %cst_78 {dimension_numbers = #tpu.dot_dimension_numbers<[1], [0], [0], [1], [0, 0, 1, 1], [], []>} : vector<16x128xbf16>, vector<128x256xbf16>, vector<16x256xf32> -> vector<16x256xf32>
      %96 = arith.addf %80, %95 : vector<16x256xf32>
      %c32_i32 = arith.constant 32 : i32
      %97 = arith.addi %37, %c32_i32 : i32
      %98 = tpu.assume_multiple %97, 16 : i32
      %c0_79 = arith.constant 0 : index
      %99 = arith.index_cast %98 : i32 to index
      %c0_80 = arith.constant 0 : index
      %100 = vector.load %arg9[%c0_79, %99, %c0_80] : memref<2x112x128xbf16, #tpu.memory_space<vmem>>, vector<1x16x128xbf16>
      %101 = vector.shape_cast %100 : vector<1x16x128xbf16> to vector<16x128xbf16>
      %cst_81 = arith.constant dense<0.000000e+00> : vector<16x256xf32>
      %102 = tpu.matmul %101, %89, %cst_81 {dimension_numbers = #tpu.dot_dimension_numbers<[1], [0], [0], [1], [0, 0, 1, 1], [], []>} : vector<16x128xbf16>, vector<128x256xbf16>, vector<16x256xf32> -> vector<16x256xf32>
      %103 = arith.addf %87, %102 : vector<16x256xf32>
      %c4_82 = arith.constant 4 : index
      %c0_83 = arith.constant 0 : index
      %c0_84 = arith.constant 0 : index
      %104 = vector.load %arg4[%c4_82, %c0_83, %c0_84] : memref<5x128x256xbf16, #tpu.memory_space<vmem>>, vector<1x128x256xbf16>
      %105 = vector.shape_cast %104 : vector<1x128x256xbf16> to vector<128x256xbf16>
      %c32_i32_85 = arith.constant 32 : i32
      %106 = arith.addi %37, %c32_i32_85 : i32
      %107 = tpu.assume_multiple %106, 16 : i32
      %c0_86 = arith.constant 0 : index
      %108 = arith.index_cast %107 : i32 to index
      %c0_87 = arith.constant 0 : index
      %109 = vector.load %arg9[%c0_86, %108, %c0_87] : memref<2x112x128xbf16, #tpu.memory_space<vmem>>, vector<1x16x128xbf16>
      %110 = vector.shape_cast %109 : vector<1x16x128xbf16> to vector<16x128xbf16>
      %cst_88 = arith.constant dense<0.000000e+00> : vector<16x256xf32>
      %111 = tpu.matmul %110, %105, %cst_88 {dimension_numbers = #tpu.dot_dimension_numbers<[1], [0], [0], [1], [0, 0, 1, 1], [], []>} : vector<16x128xbf16>, vector<128x256xbf16>, vector<16x256xf32> -> vector<16x256xf32>
      %112 = arith.addf %96, %111 : vector<16x256xf32>
      %c32_i32_89 = arith.constant 32 : i32
      %113 = arith.addi %37, %c32_i32_89 : i32
      %114 = tpu.assume_multiple %113, 16 : i32
      %c1_90 = arith.constant 1 : index
      %115 = arith.index_cast %114 : i32 to index
      %c0_91 = arith.constant 0 : index
      %116 = vector.load %arg9[%c1_90, %115, %c0_91] : memref<2x112x128xbf16, #tpu.memory_space<vmem>>, vector<1x16x128xbf16>
      %117 = vector.shape_cast %116 : vector<1x16x128xbf16> to vector<16x128xbf16>
      %cst_92 = arith.constant dense<0.000000e+00> : vector<16x256xf32>
      %118 = tpu.matmul %117, %105, %cst_92 {dimension_numbers = #tpu.dot_dimension_numbers<[1], [0], [0], [1], [0, 0, 1, 1], [], []>} : vector<16x128xbf16>, vector<128x256xbf16>, vector<16x256xf32> -> vector<16x256xf32>
      %119 = arith.addf %103, %118 : vector<16x256xf32>
      %120 = arith.maximumf %112, %119 : vector<16x256xf32>
      %121 = vector.extract_strided_slice %120 {offsets = [0, 0], sizes = [16, 128], strides = [1, 1]} : vector<16x256xf32> to vector<16x128xf32>
      %122 = vector.extract_strided_slice %120 {offsets = [0, 128], sizes = [16, 128], strides = [1, 1]} : vector<16x256xf32> to vector<16x128xf32>
      %123 = arith.maximumf %121, %122 : vector<16x128xf32>
      %124 = vector.broadcast %1 : vector<1x128xf32> to vector<16x128xf32>
      %125 = arith.addf %123, %124 : vector<16x128xf32>
      %cst_93 = arith.constant 0.000000e+00 : f32
      %126 = vector.broadcast %cst_93 : f32 to vector<16x128xf32>
      %127 = arith.maximumf %125, %126 : vector<16x128xf32>
      %128 = arith.truncf %127 : vector<16x128xf32> to vector<16x128xbf16>
      %129 = arith.index_cast %37 : i32 to index
      %c0_94 = arith.constant 0 : index
      %130 = vector.load %arg10[%129, %c0_94] : memref<80x128xbf16, #tpu.memory_space<vmem>>, vector<16x128xbf16>
      tpu.vector_store %arg10[%129, %c0_94], %128 {strides = array<i32>} : memref<80x128xbf16, #tpu.memory_space<vmem>>, vector<16x128xbf16>,
    }
    %c5_i32_10 = arith.constant 5 : i32
    %cst = arith.constant 0.000000e+00 : f32
    %5 = vector.broadcast %cst : f32 to vector<16x128xf32>
    %c0_11 = arith.constant 0 : index
    %c0_12 = arith.constant 0 : index
    %6 = vector.load %arg10[%c0_11, %c0_12] : memref<80x128xbf16, #tpu.memory_space<vmem>>, vector<16x128xbf16>
    %c0_13 = arith.constant 0 : index
    %c0_14 = arith.constant 0 : index
    %c0_15 = arith.constant 0 : index
    %7 = vector.load %arg6[%c0_13, %c0_14, %c0_15] : memref<5x128x128xbf16, #tpu.memory_space<vmem>>, vector<1x128x128xbf16>
    %8 = vector.shape_cast %7 : vector<1x128x128xbf16> to vector<128x128xbf16>
    %cst_16 = arith.constant dense<0.000000e+00> : vector<16x128xf32>
    %9 = tpu.matmul %6, %8, %cst_16 {dimension_numbers = #tpu.dot_dimension_numbers<[1], [0], [0], [1], [0, 0, 1, 1], [], []>} : vector<16x128xbf16>, vector<128x128xbf16>, vector<16x128xf32> -> vector<16x128xf32>
    %10 = arith.addf %5, %9 : vector<16x128xf32>
    %c16 = arith.constant 16 : index
    %c0_17 = arith.constant 0 : index
    %11 = vector.load %arg10[%c16, %c0_17] : memref<80x128xbf16, #tpu.memory_space<vmem>>, vector<16x128xbf16>
    %c1 = arith.constant 1 : index
    %c0_18 = arith.constant 0 : index
    %c0_19 = arith.constant 0 : index
    %12 = vector.load %arg6[%c1, %c0_18, %c0_19] : memref<5x128x128xbf16, #tpu.memory_space<vmem>>, vector<1x128x128xbf16>
    %13 = vector.shape_cast %12 : vector<1x128x128xbf16> to vector<128x128xbf16>
    %cst_20 = arith.constant dense<0.000000e+00> : vector<16x128xf32>
    %14 = tpu.matmul %11, %13, %cst_20 {dimension_numbers = #tpu.dot_dimension_numbers<[1], [0], [0], [1], [0, 0, 1, 1], [], []>} : vector<16x128xbf16>, vector<128x128xbf16>, vector<16x128xf32> -> vector<16x128xf32>
    %15 = arith.addf %10, %14 : vector<16x128xf32>
    %c32 = arith.constant 32 : index
    %c0_21 = arith.constant 0 : index
    %16 = vector.load %arg10[%c32, %c0_21] : memref<80x128xbf16, #tpu.memory_space<vmem>>, vector<16x128xbf16>
    %c2 = arith.constant 2 : index
    %c0_22 = arith.constant 0 : index
    %c0_23 = arith.constant 0 : index
    %17 = vector.load %arg6[%c2, %c0_22, %c0_23] : memref<5x128x128xbf16, #tpu.memory_space<vmem>>, vector<1x128x128xbf16>
    %18 = vector.shape_cast %17 : vector<1x128x128xbf16> to vector<128x128xbf16>
    %cst_24 = arith.constant dense<0.000000e+00> : vector<16x128xf32>
    %19 = tpu.matmul %16, %18, %cst_24 {dimension_numbers = #tpu.dot_dimension_numbers<[1], [0], [0], [1], [0, 0, 1, 1], [], []>} : vector<16x128xbf16>, vector<128x128xbf16>, vector<16x128xf32> -> vector<16x128xf32>
    %20 = arith.addf %15, %19 : vector<16x128xf32>
    %c48 = arith.constant 48 : index
    %c0_25 = arith.constant 0 : index
    %21 = vector.load %arg10[%c48, %c0_25] : memref<80x128xbf16, #tpu.memory_space<vmem>>, vector<16x128xbf16>
    %c3 = arith.constant 3 : index
    %c0_26 = arith.constant 0 : index
    %c0_27 = arith.constant 0 : index
    %22 = vector.load %arg6[%c3, %c0_26, %c0_27] : memref<5x128x128xbf16, #tpu.memory_space<vmem>>, vector<1x128x128xbf16>
    %23 = vector.shape_cast %22 : vector<1x128x128xbf16> to vector<128x128xbf16>
    %cst_28 = arith.constant dense<0.000000e+00> : vector<16x128xf32>
    %24 = tpu.matmul %21, %23, %cst_28 {dimension_numbers = #tpu.dot_dimension_numbers<[1], [0], [0], [1], [0, 0, 1, 1], [], []>} : vector<16x128xbf16>, vector<128x128xbf16>, vector<16x128xf32> -> vector<16x128xf32>
    %25 = arith.addf %20, %24 : vector<16x128xf32>
    %c64 = arith.constant 64 : index
    %c0_29 = arith.constant 0 : index
    %26 = vector.load %arg10[%c64, %c0_29] : memref<80x128xbf16, #tpu.memory_space<vmem>>, vector<16x128xbf16>
    %c4 = arith.constant 4 : index
    %c0_30 = arith.constant 0 : index
    %c0_31 = arith.constant 0 : index
    %27 = vector.load %arg6[%c4, %c0_30, %c0_31] : memref<5x128x128xbf16, #tpu.memory_space<vmem>>, vector<1x128x128xbf16>
    %28 = vector.shape_cast %27 : vector<1x128x128xbf16> to vector<128x128xbf16>
    %cst_32 = arith.constant dense<0.000000e+00> : vector<16x128xf32>
    %29 = tpu.matmul %26, %28, %cst_32 {dimension_numbers = #tpu.dot_dimension_numbers<[1], [0], [0], [1], [0, 0, 1, 1], [], []>} : vector<16x128xbf16>, vector<128x128xbf16>, vector<16x128xf32> -> vector<16x128xf32>
    %30 = arith.addf %25, %29 : vector<16x128xf32>
    %c0_33 = arith.constant 0 : index
    %c0_34 = arith.constant 0 : index
    %31 = vector.load %arg7[%c0_33, %c0_34] : memref<1x128xf32, #tpu.memory_space<vmem>>, vector<1x128xf32>
    %32 = vector.broadcast %31 : vector<1x128xf32> to vector<16x128xf32>
    %33 = arith.addf %30, %32 : vector<16x128xf32>
    %34 = math.tanh %33 : vector<16x128xf32>
    %c0_35 = arith.constant 0 : index
    %c0_36 = arith.constant 0 : index
    %35 = vector.load %arg8[%c0_35, %c0_36] : memref<16x128xf32, #tpu.memory_space<vmem>>, vector<16x128xf32>
    tpu.vector_store %arg8[%c0_35, %c0_36], %34 {strides = array<i32>} : memref<16x128xf32, #tpu.memory_space<vmem>>, vector<16x128xf32>,
    return
  }
  func.func @transform_0(%arg0: i32) -> (i32, i32, i32, i32, i32) {
    %c0_i32 = arith.constant 0 : i32
    %c0_i32_0 = arith.constant 0 : i32
    %c0_i32_1 = arith.constant 0 : i32
    %c0_i32_2 = arith.constant 0 : i32
    %c0_i32_3 = arith.constant 0 : i32
    return %arg0, %c0_i32, %c0_i32_0, %c0_i32_1, %c0_i32_2 : i32, i32, i32, i32, i32
  }
  func.func @transform_1(%arg0: i32) -> (i32, i32, i32) {
    %c0_i32 = arith.constant 0 : i32
    %c0_i32_0 = arith.constant 0 : i32
    %c0_i32_1 = arith.constant 0 : i32
    %c0_i32_2 = arith.constant 0 : i32
    return %c0_i32, %c0_i32_0, %c0_i32_1 : i32, i32, i32
  }
  func.func @transform_2(%arg0: i32) -> (i32, i32) {
    %c0_i32 = arith.constant 0 : i32
    %c0_i32_0 = arith.constant 0 : i32
    %c0_i32_1 = arith.constant 0 : i32
    return %c0_i32, %c0_i32_0 : i32, i32
  }
  func.func @transform_3(%arg0: i32) -> (i32, i32, i32) {
    %c0_i32 = arith.constant 0 : i32
    %c0_i32_0 = arith.constant 0 : i32
    %c0_i32_1 = arith.constant 0 : i32
    %c0_i32_2 = arith.constant 0 : i32
    return %c0_i32, %c0_i32_0, %c0_i32_1 : i32, i32, i32
  }
  func.func @transform_4(%arg0: i32) -> (i32, i32) {
    %c0_i32 = arith.constant 0 : i32
    %c0_i32_0 = arith.constant 0 : i32
    %c0_i32_1 = arith.constant 0 : i32
    return %c0_i32, %c0_i32_0 : i32, i32
  }
  func.func @transform_5(%arg0: i32) -> (i32, i32, i32) {
    %c0_i32 = arith.constant 0 : i32
    %c0_i32_0 = arith.constant 0 : i32
    %c0_i32_1 = arith.constant 0 : i32
    %c0_i32_2 = arith.constant 0 : i32
    return %c0_i32, %c0_i32_0, %c0_i32_1 : i32, i32, i32
  }
  func.func @transform_6(%arg0: i32) -> (i32, i32) {
    %c0_i32 = arith.constant 0 : i32
    %c0_i32_0 = arith.constant 0 : i32
    %c0_i32_1 = arith.constant 0 : i32
    return %c0_i32, %c0_i32_0 : i32, i32
  }
  func.func @transform_7(%arg0: i32) -> (i32, i32) {
    %c0_i32 = arith.constant 0 : i32
    %c0_i32_0 = arith.constant 0 : i32
    return %arg0, %c0_i32 : i32, i32
  }
}

</mosaic_0001>

<llo_original>
// kernel: net_bulk_forward.1
$region0: #{net_bulk_forward.1}
  #allocation0 [shape = 'u32[]', space=smem, size = 0x4, offset = 0x4, fixed_abs, tag = 'smem constant byte address 0x4 - core index']
  #allocation1 [shape = 'u32[144,128]{1,0:T(1,128)}', space=vmem, size = 0x12000, scoped, tag = 'internal scratch']
  #allocation2 [shape = 'bf16[2,112,128]{2,1,0:T(16,128)(2,1)}', space=vmem, size = 0xe000, scoped, tag = 'scratch operand']
  #allocation3 [shape = 'bf16[80,128]{1,0:T(16,128)(2,1)}', space=vmem, size = 0x5000, scoped, tag = 'scratch operand']
  %s0 = inlined_call_operand.vmem [shape: bf16[1,4,2,112,128], index: 0, kind: input, shape index: {}]
  %s1 = inlined_call_operand.vmem [shape: bf16[5,128,256], index: 1, kind: input, shape index: {}]
  %s2 = inlined_call_operand.vmem [shape: f32[1,128], index: 2, kind: input, shape index: {}]
  %s3 = inlined_call_operand.vmem [shape: bf16[5,128,256], index: 3, kind: input, shape index: {}]
  %s4 = inlined_call_operand.vmem [shape: f32[1,128], index: 4, kind: input, shape index: {}]
  %s5 = inlined_call_operand.vmem [shape: bf16[5,128,128], index: 5, kind: input, shape index: {}]
  %s6 = inlined_call_operand.vmem [shape: f32[1,128], index: 6, kind: input, shape index: {}]
  %s7 = inlined_call_operand.vmem [shape: f32[16,128], index: 7, kind: output, shape index: {}]
  %s8 = sld [smem:[#allocation0]]
  $region59: #{net_bulk_forward.1} parent=0
    _
  %s10 = ssub.s32 1, %s8
  %s11 = scalar_select 0, %s10, %s8
  // Predicated region
  $region2: #{net_bulk_forward.1} parent=0 // pred_check
    _
  $region3: #{net_bulk_forward.1} parent=0 // pred_check_branch
    %13 = sbr.rel (0) target = $region5
  $region4: #{net_bulk_forward.1} parent=0 // pred_region
    _
  $region5: #{net_bulk_forward.1} parent=0 // pred_fallthru
    _
  // Predicated region
  $region6: #{net_bulk_forward.1} parent=0 // pred_check
    _
  $region7: #{net_bulk_forward.1} parent=0 // pred_check_branch
    %15 = sbr.rel (0) target = $region9
  $region8: #{net_bulk_forward.1} parent=0 // pred_region
    _
  $region9: #{net_bulk_forward.1} parent=0 // pred_fallthru
    _
  // Predicated region
  $region10: #{net_bulk_forward.1} parent=0 // pred_check
    _
  $region11: #{net_bulk_forward.1} parent=0 // pred_check_branch
    %17 = sbr.rel (0) target = $region13
  $region12: #{net_bulk_forward.1} parent=0 // pred_region
    _
  $region13: #{net_bulk_forward.1} parent=0 // pred_fallthru
    _
  // Predicated region
  $region14: #{net_bulk_forward.1} parent=0 // pred_check
    _
  $region15: #{net_bulk_forward.1} parent=0 // pred_check_branch
    %19 = sbr.rel (0) target = $region17
  $region16: #{net_bulk_forward.1} parent=0 // pred_region
    _
  $region17: #{net_bulk_forward.1} parent=0 // pred_fallthru
    _
  // Predicated region
  $region18: #{net_bulk_forward.1} parent=0 // pred_check
    _
  $region19: #{net_bulk_forward.1} parent=0 // pred_check_branch
    %21 = sbr.rel (0) target = $region21
  $region20: #{net_bulk_forward.1} parent=0 // pred_region
    _
  $region21: #{net_bulk_forward.1} parent=0 // pred_fallthru
    _
  // Predicated region
  $region22: #{net_bulk_forward.1} parent=0 // pred_check
    _
  $region23: #{net_bulk_forward.1} parent=0 // pred_check_branch
    %23 = sbr.rel (0) target = $region25
  $region24: #{net_bulk_forward.1} parent=0 // pred_region
    _
  $region25: #{net_bulk_forward.1} parent=0 // pred_fallthru
    _
  // Predicated region
  $region26: #{net_bulk_forward.1} parent=0 // pred_check
    _
  $region27: #{net_bulk_forward.1} parent=0 // pred_check_branch
    %25 = sbr.rel (0) target = $region29
  $region28: #{net_bulk_forward.1} parent=0 // pred_region
    _
  $region29: #{net_bulk_forward.1} parent=0 // pred_fallthru
    _
  %v27 = vld [vmem:[%s2] sm:$0x1]
  %v28 = vld [vmem:[%s4] sm:$0x1]
  loop: start=0, step=1, limit=7
  $region30: #{net_bulk_forward.1} parent=0 // loop_pre_header
    _
  $region31: #{net_bulk_forward.1} parent=0 // loop_header
    %s30 = sphi 0, %s34
    %p31 = scmp.ge.s32.totalorder %s30, 7
  $region32: #{net_bulk_forward.1} parent=0 // loop_header_branch
    %33 = sbr.rel (%p31) target = $region36
  $region33: #{net_bulk_forward.1} parent=0 // loop_body
    %s35 = smul.u32 %s30, 16
    %v36 = vld [vmem:[%s1] sm:$0xff]
    %v37 = vld [vmem:[%s1 + $0x8] sm:$0xff]
    %v38 = vld [vmem:[%s1 + $0x10] sm:$0xff]
    %v39 = vld [vmem:[%s1 + $0x18] sm:$0xff]
    %v40 = vld [vmem:[%s1 + $0x20] sm:$0xff]
    %v41 = vld [vmem:[%s1 + $0x28] sm:$0xff]
    %v42 = vld [vmem:[%s1 + $0x30] sm:$0xff]
    %v43 = vld [vmem:[%s1 + $0x38] sm:$0xff]
    %v44 = vld [vmem:[%s1 + $0x40] sm:$0xff]
    %v45 = vld [vmem:[%s1 + $0x48] sm:$0xff]
    %v46 = vld [vmem:[%s1 + $0x50] sm:$0xff]
    %v47 = vld [vmem:[%s1 + $0x58] sm:$0xff]
    %v48 = vld [vmem:[%s1 + $0x60] sm:$0xff]
    %v49 = vld [vmem:[%s1 + $0x68] sm:$0xff]
    %v50 = vld [vmem:[%s1 + $0x70] sm:$0xff]
    %v51 = vld [vmem:[%s1 + $0x78] sm:$0xff]
    %s52 = sshra.s32 %s35, 3
    %s53 = sand.u32 %s35, 7
    %s54 = smul.addr %s52, 4
    %s55 = scalar_lea.vmem %s0, %s54
    %v56 = vld [vmem:[%s55] sm:$0xf]
    %v57 = vld [vmem:[%s55 + $0x4] sm:$0xf]
    %s58 = sadd.s32 %s52, 28
    %s59 = smul.addr %s58, 4
    %s60 = scalar_lea.vmem %s0, %s59
    %v61 = vld [vmem:[%s60] sm:$0xf]
    %v62 = vld [vmem:[%s60 + $0x4] sm:$0xf]
    %s63 = scalar_lea.vmem %s1, 128
    %v64 = vld [vmem:[%s63] sm:$0xff]
    %v65 = vld [vmem:[%s63 + $0x8] sm:$0xff]
    %v66 = vld [vmem:[%s63 + $0x10] sm:$0xff]
    %v67 = vld [vmem:[%s63 + $0x18] sm:$0xff]
    %v68 = vld [vmem:[%s63 + $0x20] sm:$0xff]
    %v69 = vld [vmem:[%s63 + $0x28] sm:$0xff]
    %v70 = vld [vmem:[%s63 + $0x30] sm:$0xff]
    %v71 = vld [vmem:[%s63 + $0x38] sm:$0xff]
    %v72 = vld [vmem:[%s63 + $0x40] sm:$0xff]
    %v73 = vld [vmem:[%s63 + $0x48] sm:$0xff]
    %v74 = vld [vmem:[%s63 + $0x50] sm:$0xff]
    %v75 = vld [vmem:[%s63 + $0x58] sm:$0xff]
    %v76 = vld [vmem:[%s63 + $0x60] sm:$0xff]
    %v77 = vld [vmem:[%s63 + $0x68] sm:$0xff]
    %v78 = vld [vmem:[%s63 + $0x70] sm:$0xff]
    %v79 = vld [vmem:[%s63 + $0x78] sm:$0xff]
    %s80 = sadd.s32 %s52, 56
    %s81 = smul.addr %s80, 4
    %s82 = scalar_lea.vmem %s0, %s81
    %v83 = vld [vmem:[%s82] sm:$0xf]
    %v84 = vld [vmem:[%s82 + $0x4] sm:$0xf]
    %v87 = vunpack.c.l.b16 %v61
    %v88 = vunpack.c.l.b16 %v62
    %v89 = vpack.c.b16 %v88, %v87
    %v107 = vunpack.c.l.b16 %v64
    %v108 = vunpack.c.h.b16 %v64
    %v109 = vunpack.c.l.b16 %v65
    %v110 = vunpack.c.h.b16 %v65
    %v111 = vunpack.c.l.b16 %v66
    %v112 = vunpack.c.h.b16 %v66
    %v113 = vunpack.c.l.b16 %v67
    %v114 = vunpack.c.h.b16 %v67
    %v115 = vunpack.c.l.b16 %v68
    %v116 = vunpack.c.h.b16 %v68
    %v117 = vunpack.c.l.b16 %v69
    %v118 = vunpack.c.h.b16 %v69
    %v119 = vunpack.c.l.b16 %v70
    %v120 = vunpack.c.h.b16 %v70
    %v121 = vunpack.c.l.b16 %v71
    %v122 = vunpack.c.h.b16 %v71
    %v123 = vunpack.c.l.b16 %v72
    %v124 = vunpack.c.h.b16 %v72
    %v125 = vunpack.c.l.b16 %v73
    %v126 = vunpack.c.h.b16 %v73
    %v127 = vunpack.c.l.b16 %v74
    %v128 = vunpack.c.h.b16 %v74
    %v129 = vunpack.c.l.b16 %v75
    %v130 = vunpack.c.h.b16 %v75
    %v131 = vunpack.c.l.b16 %v76
    %v132 = vunpack.c.h.b16 %v76
    %v133 = vunpack.c.l.b16 %v77
    %v134 = vunpack.c.h.b16 %v77
    %v135 = vunpack.c.l.b16 %v78
    %v136 = vunpack.c.h.b16 %v78
    %v137 = vunpack.c.l.b16 %v79
    %v138 = vunpack.c.h.b16 %v79
    %v139 = vpack.c.b16 %v109, %v107
    %v140 = vpack.c.b16 %v110, %v108
    %v141 = vpack.c.b16 %v113, %v111
    %v142 = vpack.c.b16 %v114, %v112
    %v143 = vpack.c.b16 %v117, %v115
    %v144 = vpack.c.b16 %v118, %v116
    %v145 = vpack.c.b16 %v121, %v119
    %v146 = vpack.c.b16 %v122, %v120
    %v147 = vpack.c.b16 %v125, %v123
    %v148 = vpack.c.b16 %v126, %v124
    %v149 = vpack.c.b16 %v129, %v127
    %v150 = vpack.c.b16 %v130, %v128
    %v151 = vpack.c.b16 %v133, %v131
    %v152 = vpack.c.b16 %v134, %v132
    %v153 = vpack.c.b16 %v137, %v135
    %v154 = vpack.c.b16 %v138, %v136
    %171 = vmatprep.subr.bf16.mxu0 %v140
    %172 = vmatpush1.bf16.msra.mxu0 %v139
    %173 = vmatprep.subr.bf16.mxu0 %v142
    %174 = vmatpush1.bf16.msra.mxu0 %v141
    %175 = vmatprep.subr.bf16.mxu0 %v144
    %176 = vmatpush1.bf16.msra.mxu0 %v143
    %177 = vmatprep.subr.bf16.mxu0 %v146
    %178 = vmatpush1.bf16.msra.mxu0 %v145
    %179 = vmatprep.subr.bf16.mxu0 %v148
    %180 = vmatpush1.bf16.msra.mxu0 %v147
    %181 = vmatprep.subr.bf16.mxu0 %v150
    %182 = vmatpush1.bf16.msra.mxu0 %v149
    %183 = vmatprep.subr.bf16.mxu0 %v152
    %184 = vmatpush1.bf16.msra.mxu0 %v151
    %185 = vmatprep.subr.bf16.mxu0 %v154
    %186 = vmatpush1.bf16.msra.mxu0 %v153
    %187 = vmatprep.subr.bf16.mxu0 0
    %188 = vmatpush1.bf16.msra.mxu0 0
    %189 = vmatprep.subr.bf16.mxu0 0
    %190 = vmatpush1.bf16.msra.mxu0 0
    %191 = vmatprep.subr.bf16.mxu0 0
    %192 = vmatpush1.bf16.msra.mxu0 0
    %193 = vmatprep.subr.bf16.mxu0 0
    %194 = vmatpush1.bf16.msra.mxu0 0
    %195 = vmatprep.subr.bf16.mxu0 0
    %196 = vmatpush1.bf16.msra.mxu0 0
    %197 = vmatprep.subr.bf16.mxu0 0
    %198 = vmatpush1.bf16.msra.mxu0 0
    %199 = vmatprep.subr.bf16.mxu0 0
    %200 = vmatpush1.bf16.msra.mxu0 0
    %201 = vmatprep.subr.bf16.mxu0 0
    %202 = vmatpush1.bf16.msra.mxu0 0
    %203 = vmatprep.mubr.bf16.mxu0 0
    %204 = vmatmul.mubr.bf16.gmra.mrb[0].mxu0 %v89
    %v205 = vpop.f32.mrb[0].mxu0
    %v206 = vadd.f32 0.0, %v205
    %v207 = vpop.f32.mrb[0].mxu0
    %v208 = vadd.f32 0.0, %v207
    %v209 = vpop.f32.mrb[0].mxu0
    %v210 = vadd.f32 0.0, %v209
    %v211 = vpop.f32.mrb[0].mxu0
    %v212 = vadd.f32 0.0, %v211
    %213 = vdwg.mxu0
    %v216 = vunpack.c.l.b16 %v56
    %v217 = vunpack.c.l.b16 %v57
    %v218 = vpack.c.b16 %v217, %v216
    %v236 = vunpack.c.l.b16 %v36
    %v237 = vunpack.c.h.b16 %v36
    %v238 = vunpack.c.l.b16 %v37
    %v239 = vunpack.c.h.b16 %v37
    %v240 = vunpack.c.l.b16 %v38
    %v241 = vunpack.c.h.b16 %v38
    %v242 = vunpack.c.l.b16 %v39
    %v243 = vunpack.c.h.b16 %v39
    %v244 = vunpack.c.l.b16 %v40
    %v245 = vunpack.c.h.b16 %v40
    %v246 = vunpack.c.l.b16 %v41
    %v247 = vunpack.c.h.b16 %v41
    %v248 = vunpack.c.l.b16 %v42
    %v249 = vunpack.c.h.b16 %v42
    %v250 = vunpack.c.l.b16 %v43
    %v251 = vunpack.c.h.b16 %v43
    %v252 = vunpack.c.l.b16 %v44
    %v253 = vunpack.c.h.b16 %v44
    %v254 = vunpack.c.l.b16 %v45
    %v255 = vunpack.c.h.b16 %v45
    %v256 = vunpack.c.l.b16 %v46
    %v257 = vunpack.c.h.b16 %v46
    %v258 = vunpack.c.l.b16 %v47
    %v259 = vunpack.c.h.b16 %v47
    %v260 = vunpack.c.l.b16 %v48
    %v261 = vunpack.c.h.b16 %v48
    %v262 = vunpack.c.l.b16 %v49
    %v263 = vunpack.c.h.b16 %v49
    %v264 = vunpack.c.l.b16 %v50
    %v265 = vunpack.c.h.b16 %v50
    %v266 = vunpack.c.l.b16 %v51
    %v267 = vunpack.c.h.b16 %v51
    %v268 = vpack.c.b16 %v238, %v236
    %v269 = vpack.c.b16 %v239, %v237
    %v270 = vpack.c.b16 %v242, %v240
    %v271 = vpack.c.b16 %v243, %v241
    %v272 = vpack.c.b16 %v246, %v244
    %v273 = vpack.c.b16 %v247, %v245
    %v274 = vpack.c.b16 %v250, %v248
    %v275 = vpack.c.b16 %v251, %v249
    %v276 = vpack.c.b16 %v254, %v252
    %v277 = vpack.c.b16 %v255, %v253
    %v278 = vpack.c.b16 %v258, %v256
    %v279 = vpack.c.b16 %v259, %v257
    %v280 = vpack.c.b16 %v262, %v260
    %v281 = vpack.c.b16 %v263, %v261
    %v282 = vpack.c.b16 %v266, %v264
    %v283 = vpack.c.b16 %v267, %v265
    %300 = vmatprep.subr.bf16.mxu0 %v269
    %301 = vmatpush1.bf16.msra.mxu0 %v268
    %302 = vmatprep.subr.bf16.mxu0 %v271
    %303 = vmatpush1.bf16.msra.mxu0 %v270
    %304 = vmatprep.subr.bf16.mxu0 %v273
    %305 = vmatpush1.bf16.msra.mxu0 %v272
    %306 = vmatprep.subr.bf16.mxu0 %v275
    %307 = vmatpush1.bf16.msra.mxu0 %v274
    %308 = vmatprep.subr.bf16.mxu0 %v277
    %309 = vmatpush1.bf16.msra.mxu0 %v276
    %310 = vmatprep.subr.bf16.mxu0 %v279
    %311 = vmatpush1.bf16.msra.mxu0 %v278
    %312 = vmatprep.subr.bf16.mxu0 %v281
    %313 = vmatpush1.bf16.msra.mxu0 %v280
    %314 = vmatprep.subr.bf16.mxu0 %v283
    %315 = vmatpush1.bf16.msra.mxu0 %v282
    %316 = vmatprep.subr.bf16.mxu0 0
    %317 = vmatpush1.bf16.msra.mxu0 0
    %318 = vmatprep.subr.bf16.mxu0 0
    %319 = vmatpush1.bf16.msra.mxu0 0
    %320 = vmatprep.subr.bf16.mxu0 0
    %321 = vmatpush1.bf16.msra.mxu0 0
    %322 = vmatprep.subr.bf16.mxu0 0
    %323 = vmatpush1.bf16.msra.mxu0 0
    %324 = vmatprep.subr.bf16.mxu0 0
    %325 = vmatpush1.bf16.msra.mxu0 0
    %326 = vmatprep.subr.bf16.mxu0 0
    %327 = vmatpush1.bf16.msra.mxu0 0
    %328 = vmatprep.subr.bf16.mxu0 0
    %329 = vmatpush1.bf16.msra.mxu0 0
    %330 = vmatprep.subr.bf16.mxu0 0
    %331 = vmatpush1.bf16.msra.mxu0 0
    %332 = vmatprep.mubr.bf16.mxu0 0
    %333 = vmatmul.mubr.bf16.gmra.mrb[0].mxu0 %v218
    %v334 = vpop.f32.mrb[0].mxu0
    %v335 = vadd.f32 %v206, %v334
    %v336 = vpop.f32.mrb[0].mxu0
    %v337 = vadd.f32 %v208, %v336
    %v338 = vpop.f32.mrb[0].mxu0
    %v339 = vadd.f32 %v210, %v338
    %v340 = vpop.f32.mrb[0].mxu0
    %v341 = vadd.f32 %v212, %v340
    %342 = vdwg.mxu0
    %v345 = vunpack.c.l.b16 %v83
    %v346 = vunpack.c.l.b16 %v84
    %v347 = vpack.c.b16 %v346, %v345
    %349 = vmatprep.subr.bf16.mxu0 %v140
    %350 = vmatpush1.bf16.msra.mxu0 %v139
    %351 = vmatprep.subr.bf16.mxu0 %v142
    %352 = vmatpush1.bf16.msra.mxu0 %v141
    %353 = vmatprep.subr.bf16.mxu0 %v144
    %354 = vmatpush1.bf16.msra.mxu0 %v143
    %355 = vmatprep.subr.bf16.mxu0 %v146
    %356 = vmatpush1.bf16.msra.mxu0 %v145
    %357 = vmatprep.subr.bf16.mxu0 %v148
    %358 = vmatpush1.bf16.msra.mxu0 %v147
    %359 = vmatprep.subr.bf16.mxu0 %v150
    %360 = vmatpush1.bf16.msra.mxu0 %v149
    %361 = vmatprep.subr.bf16.mxu0 %v152
    %362 = vmatpush1.bf16.msra.mxu0 %v151
    %363 = vmatprep.subr.bf16.mxu0 %v154
    %364 = vmatpush1.bf16.msra.mxu0 %v153
    %365 = vmatprep.subr.bf16.mxu0 0
    %366 = vmatpush1.bf16.msra.mxu0 0
    %367 = vmatprep.subr.bf16.mxu0 0
    %368 = vmatpush1.bf16.msra.mxu0 0
    %369 = vmatprep.subr.bf16.mxu0 0
    %370 = vmatpush1.bf16.msra.mxu0 0
    %371 = vmatprep.subr.bf16.mxu0 0
    %372 = vmatpush1.bf16.msra.mxu0 0
    %373 = vmatprep.subr.bf16.mxu0 0
    %374 = vmatpush1.bf16.msra.mxu0 0
    %375 = vmatprep.subr.bf16.mxu0 0
    %376 = vmatpush1.bf16.msra.mxu0 0
    %377 = vmatprep.subr.bf16.mxu0 0
    %378 = vmatpush1.bf16.msra.mxu0 0
    %379 = vmatprep.subr.bf16.mxu0 0
    %380 = vmatpush1.bf16.msra.mxu0 0
    %381 = vmatprep.mubr.bf16.mxu0 0
    %382 = vmatmul.mubr.bf16.gmra.mrb[0].mxu0 %v347
    %v383 = vpop.f32.mrb[0].mxu0
    %v384 = vadd.f32 0.0, %v383
    %v385 = vpop.f32.mrb[0].mxu0
    %v386 = vadd.f32 0.0, %v385
    %v387 = vpop.f32.mrb[0].mxu0
    %v388 = vadd.f32 0.0, %v387
    %v389 = vpop.f32.mrb[0].mxu0
    %v390 = vadd.f32 0.0, %v389
    %391 = vdwg.mxu0
    %392 = vmatprep.subr.bf16.mxu0 %v269
    %393 = vmatpush1.bf16.msra.mxu0 %v268
    %394 = vmatprep.subr.bf16.mxu0 %v271
    %395 = vmatpush1.bf16.msra.mxu0 %v270
    %396 = vmatprep.subr.bf16.mxu0 %v273
    %397 = vmatpush1.bf16.msra.mxu0 %v272
    %398 = vmatprep.subr.bf16.mxu0 %v275
    %399 = vmatpush1.bf16.msra.mxu0 %v274
    %400 = vmatprep.subr.bf16.mxu0 %v277
    %401 = vmatpush1.bf16.msra.mxu0 %v276
    %402 = vmatprep.subr.bf16.mxu0 %v279
    %403 = vmatpush1.bf16.msra.mxu0 %v278
    %404 = vmatprep.subr.bf16.mxu0 %v281
    %405 = vmatpush1.bf16.msra.mxu0 %v280
    %406 = vmatprep.subr.bf16.mxu0 %v283
    %407 = vmatpush1.bf16.msra.mxu0 %v282
    %408 = vmatprep.subr.bf16.mxu0 0
    %409 = vmatpush1.bf16.msra.mxu0 0
    %410 = vmatprep.subr.bf16.mxu0 0
    %411 = vmatpush1.bf16.msra.mxu0 0
    %412 = vmatprep.subr.bf16.mxu0 0
    %413 = vmatpush1.bf16.msra.mxu0 0
    %414 = vmatprep.subr.bf16.mxu0 0
    %415 = vmatpush1.bf16.msra.mxu0 0
    %416 = vmatprep.subr.bf16.mxu0 0
    %417 = vmatpush1.bf16.msra.mxu0 0
    %418 = vmatprep.subr.bf16.mxu0 0
    %419 = vmatpush1.bf16.msra.mxu0 0
    %420 = vmatprep.subr.bf16.mxu0 0
    %421 = vmatpush1.bf16.msra.mxu0 0
    %422 = vmatprep.subr.bf16.mxu0 0
    %423 = vmatpush1.bf16.msra.mxu0 0
    %424 = vmatprep.mubr.bf16.mxu0 0
    %425 = vmatmul.mubr.bf16.gmra.mrb[0].mxu0 %v89
    %v426 = vpop.f32.mrb[0].mxu0
    %v427 = vadd.f32 %v384, %v426
    %v428 = vpop.f32.mrb[0].mxu0
    %v429 = vadd.f32 %v386, %v428
    %v430 = vpop.f32.mrb[0].mxu0
    %v431 = vadd.f32 %v388, %v430
    %v432 = vpop.f32.mrb[0].mxu0
    %v433 = vadd.f32 %v390, %v432
    %434 = vdwg.mxu0
    %s435 = scalar_lea.vmem %s1, 256
    %v436 = vld [vmem:[%s435] sm:$0xff]
    %v437 = vld [vmem:[%s435 + $0x8] sm:$0xff]
    %v438 = vld [vmem:[%s435 + $0x10] sm:$0xff]
    %v439 = vld [vmem:[%s435 + $0x18] sm:$0xff]
    %v440 = vld [vmem:[%s435 + $0x20] sm:$0xff]
    %v441 = vld [vmem:[%s435 + $0x28] sm:$0xff]
    %v442 = vld [vmem:[%s435 + $0x30] sm:$0xff]
    %v443 = vld [vmem:[%s435 + $0x38] sm:$0xff]
    %v444 = vld [vmem:[%s435 + $0x40] sm:$0xff]
    %v445 = vld [vmem:[%s435 + $0x48] sm:$0xff]
    %v446 = vld [vmem:[%s435 + $0x50] sm:$0xff]
    %v447 = vld [vmem:[%s435 + $0x58] sm:$0xff]
    %v448 = vld [vmem:[%s435 + $0x60] sm:$0xff]
    %v449 = vld [vmem:[%s435 + $0x68] sm:$0xff]
    %v450 = vld [vmem:[%s435 + $0x70] sm:$0xff]
    %v451 = vld [vmem:[%s435 + $0x78] sm:$0xff]
    %s452 = sadd.s32 %s52, 84
    %s453 = smul.addr %s452, 4
    %s454 = scalar_lea.vmem %s0, %s453
    %v455 = vld [vmem:[%s454] sm:$0xf]
    %v456 = vld [vmem:[%s454 + $0x4] sm:$0xf]
    %v473 = vunpack.c.l.b16 %v436
    %v474 = vunpack.c.h.b16 %v436
    %v475 = vunpack.c.l.b16 %v437
    %v476 = vunpack.c.h.b16 %v437
    %v477 = vunpack.c.l.b16 %v438
    %v478 = vunpack.c.h.b16 %v438
    %v479 = vunpack.c.l.b16 %v439
    %v480 = vunpack.c.h.b16 %v439
    %v481 = vunpack.c.l.b16 %v440
    %v482 = vunpack.c.h.b16 %v440
    %v483 = vunpack.c.l.b16 %v441
    %v484 = vunpack.c.h.b16 %v441
    %v485 = vunpack.c.l.b16 %v442
    %v486 = vunpack.c.h.b16 %v442
    %v487 = vunpack.c.l.b16 %v443
    %v488 = vunpack.c.h.b16 %v443
    %v489 = vunpack.c.l.b16 %v444
    %v490 = vunpack.c.h.b16 %v444
    %v491 = vunpack.c.l.b16 %v445
    %v492 = vunpack.c.h.b16 %v445
    %v493 = vunpack.c.l.b16 %v446
    %v494 = vunpack.c.h.b16 %v446
    %v495 = vunpack.c.l.b16 %v447
    %v496 = vunpack.c.h.b16 %v447
    %v497 = vunpack.c.l.b16 %v448
    %v498 = vunpack.c.h.b16 %v448
    %v499 = vunpack.c.l.b16 %v449
    %v500 = vunpack.c.h.b16 %v449
    %v501 = vunpack.c.l.b16 %v450
    %v502 = vunpack.c.h.b16 %v450
    %v503 = vunpack.c.l.b16 %v451
    %v504 = vunpack.c.h.b16 %v451
    %v505 = vpack.c.b16 %v475, %v473
    %v506 = vpack.c.b16 %v476, %v474
    %v507 = vpack.c.b16 %v479, %v477
    %v508 = vpack.c.b16 %v480, %v478
    %v509 = vpack.c.b16 %v483, %v481
    %v510 = vpack.c.b16 %v484, %v482
    %v511 = vpack.c.b16 %v487, %v485
    %v512 = vpack.c.b16 %v488, %v486
    %v513 = vpack.c.b16 %v491, %v489
    %v514 = vpack.c.b16 %v492, %v490
    %v515 = vpack.c.b16 %v495, %v493
    %v516 = vpack.c.b16 %v496, %v494
    %v517 = vpack.c.b16 %v499, %v497
    %v518 = vpack.c.b16 %v500, %v498
    %v519 = vpack.c.b16 %v503, %v501
    %v520 = vpack.c.b16 %v504, %v502
    %537 = vmatprep.subr.bf16.mxu0 %v506
    %538 = vmatpush1.bf16.msra.mxu0 %v505
    %539 = vmatprep.subr.bf16.mxu0 %v508
    %540 = vmatpush1.bf16.msra.mxu0 %v507
    %541 = vmatprep.subr.bf16.mxu0 %v510
    %542 = vmatpush1.bf16.msra.mxu0 %v509
    %543 = vmatprep.subr.bf16.mxu0 %v512
    %544 = vmatpush1.bf16.msra.mxu0 %v511
    %545 = vmatprep.subr.bf16.mxu0 %v514
    %546 = vmatpush1.bf16.msra.mxu0 %v513
    %547 = vmatprep.subr.bf16.mxu0 %v516
    %548 = vmatpush1.bf16.msra.mxu0 %v515
    %549 = vmatprep.subr.bf16.mxu0 %v518
    %550 = vmatpush1.bf16.msra.mxu0 %v517
    %551 = vmatprep.subr.bf16.mxu0 %v520
    %552 = vmatpush1.bf16.msra.mxu0 %v519
    %553 = vmatprep.subr.bf16.mxu0 0
    %554 = vmatpush1.bf16.msra.mxu0 0
    %555 = vmatprep.subr.bf16.mxu0 0
    %556 = vmatpush1.bf16.msra.mxu0 0
    %557 = vmatprep.subr.bf16.mxu0 0
    %558 = vmatpush1.bf16.msra.mxu0 0
    %559 = vmatprep.subr.bf16.mxu0 0
    %560 = vmatpush1.bf16.msra.mxu0 0
    %561 = vmatprep.subr.bf16.mxu0 0
    %562 = vmatpush1.bf16.msra.mxu0 0
    %563 = vmatprep.subr.bf16.mxu0 0
    %564 = vmatpush1.bf16.msra.mxu0 0
    %565 = vmatprep.subr.bf16.mxu0 0
    %566 = vmatpush1.bf16.msra.mxu0 0
    %567 = vmatprep.subr.bf16.mxu0 0
    %568 = vmatpush1.bf16.msra.mxu0 0
    %569 = vmatprep.mubr.bf16.mxu0 0
    %570 = vmatmul.mubr.bf16.gmra.mrb[0].mxu0 %v347
    %v571 = vpop.f32.mrb[0].mxu0
    %v572 = vadd.f32 0.0, %v571
    %v573 = vpop.f32.mrb[0].mxu0
    %v574 = vadd.f32 0.0, %v573
    %v575 = vpop.f32.mrb[0].mxu0
    %v576 = vadd.f32 0.0, %v575
    %v577 = vpop.f32.mrb[0].mxu0
    %v578 = vadd.f32 0.0, %v577
    %579 = vdwg.mxu0
    %v580 = vadd.f32 %v335, %v572
    %v581 = vadd.f32 %v337, %v574
    %v582 = vadd.f32 %v339, %v576
    %v583 = vadd.f32 %v341, %v578
    %v586 = vunpack.c.l.b16 %v455
    %v587 = vunpack.c.l.b16 %v456
    %v588 = vpack.c.b16 %v587, %v586
    %590 = vmatprep.subr.bf16.mxu0 %v506
    %591 = vmatpush1.bf16.msra.mxu0 %v505
    %592 = vmatprep.subr.bf16.mxu0 %v508
    %593 = vmatpush1.bf16.msra.mxu0 %v507
    %594 = vmatprep.subr.bf16.mxu0 %v510
    %595 = vmatpush1.bf16.msra.mxu0 %v509
    %596 = vmatprep.subr.bf16.mxu0 %v512
    %597 = vmatpush1.bf16.msra.mxu0 %v511
    %598 = vmatprep.subr.bf16.mxu0 %v514
    %599 = vmatpush1.bf16.msra.mxu0 %v513
    %600 = vmatprep.subr.bf16.mxu0 %v516
    %601 = vmatpush1.bf16.msra.mxu0 %v515
    %602 = vmatprep.subr.bf16.mxu0 %v518
    %603 = vmatpush1.bf16.msra.mxu0 %v517
    %604 = vmatprep.subr.bf16.mxu0 %v520
    %605 = vmatpush1.bf16.msra.mxu0 %v519
    %606 = vmatprep.subr.bf16.mxu0 0
    %607 = vmatpush1.bf16.msra.mxu0 0
    %608 = vmatprep.subr.bf16.mxu0 0
    %609 = vmatpush1.bf16.msra.mxu0 0
    %610 = vmatprep.subr.bf16.mxu0 0
    %611 = vmatpush1.bf16.msra.mxu0 0
    %612 = vmatprep.subr.bf16.mxu0 0
    %613 = vmatpush1.bf16.msra.mxu0 0
    %614 = vmatprep.subr.bf16.mxu0 0
    %615 = vmatpush1.bf16.msra.mxu0 0
    %616 = vmatprep.subr.bf16.mxu0 0
    %617 = vmatpush1.bf16.msra.mxu0 0
    %618 = vmatprep.subr.bf16.mxu0 0
    %619 = vmatpush1.bf16.msra.mxu0 0
    %620 = vmatprep.subr.bf16.mxu0 0
    %621 = vmatpush1.bf16.msra.mxu0 0
    %622 = vmatprep.mubr.bf16.mxu0 0
    %623 = vmatmul.mubr.bf16.gmra.mrb[0].mxu0 %v588
    %v624 = vpop.f32.mrb[0].mxu0
    %v625 = vadd.f32 0.0, %v624
    %v626 = vpop.f32.mrb[0].mxu0
    %v627 = vadd.f32 0.0, %v626
    %v628 = vpop.f32.mrb[0].mxu0
    %v629 = vadd.f32 0.0, %v628
    %v630 = vpop.f32.mrb[0].mxu0
    %v631 = vadd.f32 0.0, %v630
    %632 = vdwg.mxu0
    %v633 = vadd.f32 %v427, %v625
    %v634 = vadd.f32 %v429, %v627
    %v635 = vadd.f32 %v431, %v629
    %v636 = vadd.f32 %v433, %v631
    %s637 = scalar_lea.vmem %s1, 384
    %v638 = vld [vmem:[%s637] sm:$0xff]
    %v639 = vld [vmem:[%s637 + $0x8] sm:$0xff]
    %v640 = vld [vmem:[%s637 + $0x10] sm:$0xff]
    %v641 = vld [vmem:[%s637 + $0x18] sm:$0xff]
    %v642 = vld [vmem:[%s637 + $0x20] sm:$0xff]
    %v643 = vld [vmem:[%s637 + $0x28] sm:$0xff]
    %v644 = vld [vmem:[%s637 + $0x30] sm:$0xff]
    %v645 = vld [vmem:[%s637 + $0x38] sm:$0xff]
    %v646 = vld [vmem:[%s637 + $0x40] sm:$0xff]
    %v647 = vld [vmem:[%s637 + $0x48] sm:$0xff]
    %v648 = vld [vmem:[%s637 + $0x50] sm:$0xff]
    %v649 = vld [vmem:[%s637 + $0x58] sm:$0xff]
    %v650 = vld [vmem:[%s637 + $0x60] sm:$0xff]
    %v651 = vld [vmem:[%s637 + $0x68] sm:$0xff]
    %v652 = vld [vmem:[%s637 + $0x70] sm:$0xff]
    %v653 = vld [vmem:[%s637 + $0x78] sm:$0xff]
    %s654 = sadd.s32 %s52, 14
    %s655 = smul.addr %s654, 4
    %s656 = scalar_lea.vmem %s0, %s655
    %v657 = vld [vmem:[%s656] sm:$0xf]
    %v658 = vld [vmem:[%s656 + $0x4] sm:$0xf]
    %v675 = vunpack.c.l.b16 %v638
    %v676 = vunpack.c.h.b16 %v638
    %v677 = vunpack.c.l.b16 %v639
    %v678 = vunpack.c.h.b16 %v639
    %v679 = vunpack.c.l.b16 %v640
    %v680 = vunpack.c.h.b16 %v640
    %v681 = vunpack.c.l.b16 %v641
    %v682 = vunpack.c.h.b16 %v641
    %v683 = vunpack.c.l.b16 %v642
    %v684 = vunpack.c.h.b16 %v642
    %v685 = vunpack.c.l.b16 %v643
    %v686 = vunpack.c.h.b16 %v643
    %v687 = vunpack.c.l.b16 %v644
    %v688 = vunpack.c.h.b16 %v644
    %v689 = vunpack.c.l.b16 %v645
    %v690 = vunpack.c.h.b16 %v645
    %v691 = vunpack.c.l.b16 %v646
    %v692 = vunpack.c.h.b16 %v646
    %v693 = vunpack.c.l.b16 %v647
    %v694 = vunpack.c.h.b16 %v647
    %v695 = vunpack.c.l.b16 %v648
    %v696 = vunpack.c.h.b16 %v648
    %v697 = vunpack.c.l.b16 %v649
    %v698 = vunpack.c.h.b16 %v649
    %v699 = vunpack.c.l.b16 %v650
    %v700 = vunpack.c.h.b16 %v650
    %v701 = vunpack.c.l.b16 %v651
    %v702 = vunpack.c.h.b16 %v651
    %v703 = vunpack.c.l.b16 %v652
    %v704 = vunpack.c.h.b16 %v652
    %v705 = vunpack.c.l.b16 %v653
    %v706 = vunpack.c.h.b16 %v653
    %v707 = vpack.c.b16 %v677, %v675
    %v708 = vpack.c.b16 %v678, %v676
    %v709 = vpack.c.b16 %v681, %v679
    %v710 = vpack.c.b16 %v682, %v680
    %v711 = vpack.c.b16 %v685, %v683
    %v712 = vpack.c.b16 %v686, %v684
    %v713 = vpack.c.b16 %v689, %v687
    %v714 = vpack.c.b16 %v690, %v688
    %v715 = vpack.c.b16 %v693, %v691
    %v716 = vpack.c.b16 %v694, %v692
    %v717 = vpack.c.b16 %v697, %v695
    %v718 = vpack.c.b16 %v698, %v696
    %v719 = vpack.c.b16 %v701, %v699
    %v720 = vpack.c.b16 %v702, %v700
    %v721 = vpack.c.b16 %v705, %v703
    %v722 = vpack.c.b16 %v706, %v704
    %739 = vmatprep.subr.bf16.mxu0 %v708
    %740 = vmatpush1.bf16.msra.mxu0 %v707
    %741 = vmatprep.subr.bf16.mxu0 %v710
    %742 = vmatpush1.bf16.msra.mxu0 %v709
    %743 = vmatprep.subr.bf16.mxu0 %v712
    %744 = vmatpush1.bf16.msra.mxu0 %v711
    %745 = vmatprep.subr.bf16.mxu0 %v714
    %746 = vmatpush1.bf16.msra.mxu0 %v713
    %747 = vmatprep.subr.bf16.mxu0 %v716
    %748 = vmatpush1.bf16.msra.mxu0 %v715
    %749 = vmatprep.subr.bf16.mxu0 %v718
    %750 = vmatpush1.bf16.msra.mxu0 %v717
    %751 = vmatprep.subr.bf16.mxu0 %v720
    %752 = vmatpush1.bf16.msra.mxu0 %v719
    %753 = vmatprep.subr.bf16.mxu0 %v722
    %754 = vmatpush1.bf16.msra.mxu0 %v721
    %755 = vmatprep.subr.bf16.mxu0 0
    %756 = vmatpush1.bf16.msra.mxu0 0
    %757 = vmatprep.subr.bf16.mxu0 0
    %758 = vmatpush1.bf16.msra.mxu0 0
    %759 = vmatprep.subr.bf16.mxu0 0
    %760 = vmatpush1.bf16.msra.mxu0 0
    %761 = vmatprep.subr.bf16.mxu0 0
    %762 = vmatpush1.bf16.msra.mxu0 0
    %763 = vmatprep.subr.bf16.mxu0 0
    %764 = vmatpush1.bf16.msra.mxu0 0
    %765 = vmatprep.subr.bf16.mxu0 0
    %766 = vmatpush1.bf16.msra.mxu0 0
    %767 = vmatprep.subr.bf16.mxu0 0
    %768 = vmatpush1.bf16.msra.mxu0 0
    %769 = vmatprep.subr.bf16.mxu0 0
    %770 = vmatpush1.bf16.msra.mxu0 0
    %771 = vmatprep.mubr.bf16.mxu0 0
    %772 = vmatmul.mubr.bf16.gmra.mrb[0].mxu0 %v588
    %v773 = vpop.f32.mrb[0].mxu0
    %v774 = vadd.f32 0.0, %v773
    %v775 = vpop.f32.mrb[0].mxu0
    %v776 = vadd.f32 0.0, %v775
    %v777 = vpop.f32.mrb[0].mxu0
    %v778 = vadd.f32 0.0, %v777
    %v779 = vpop.f32.mrb[0].mxu0
    %v780 = vadd.f32 0.0, %v779
    %781 = vdwg.mxu0
    %v782 = vadd.f32 %v580, %v774
    %v783 = vadd.f32 %v581, %v776
    %v784 = vadd.f32 %v582, %v778
    %v785 = vadd.f32 %v583, %v780
    %v788 = vunpack.c.l.b16 %v657
    %v789 = vunpack.c.l.b16 %v658
    %v790 = vpack.c.b16 %v789, %v788
    %792 = vmatprep.subr.bf16.mxu0 %v708
    %793 = vmatpush1.bf16.msra.mxu0 %v707
    %794 = vmatprep.subr.bf16.mxu0 %v710
    %795 = vmatpush1.bf16.msra.mxu0 %v709
    %796 = vmatprep.subr.bf16.mxu0 %v712
    %797 = vmatpush1.bf16.msra.mxu0 %v711
    %798 = vmatprep.subr.bf16.mxu0 %v714
    %799 = vmatpush1.bf16.msra.mxu0 %v713
    %800 = vmatprep.subr.bf16.mxu0 %v716
    %801 = vmatpush1.bf16.msra.mxu0 %v715
    %802 = vmatprep.subr.bf16.mxu0 %v718
    %803 = vmatpush1.bf16.msra.mxu0 %v717
    %804 = vmatprep.subr.bf16.mxu0 %v720
    %805 = vmatpush1.bf16.msra.mxu0 %v719
    %806 = vmatprep.subr.bf16.mxu0 %v722
    %807 = vmatpush1.bf16.msra.mxu0 %v721
    %808 = vmatprep.subr.bf16.mxu0 0
    %809 = vmatpush1.bf16.msra.mxu0 0
    %810 = vmatprep.subr.bf16.mxu0 0
    %811 = vmatpush1.bf16.msra.mxu0 0
    %812 = vmatprep.subr.bf16.mxu0 0
    %813 = vmatpush1.bf16.msra.mxu0 0
    %814 = vmatprep.subr.bf16.mxu0 0
    %815 = vmatpush1.bf16.msra.mxu0 0
    %816 = vmatprep.subr.bf16.mxu0 0
    %817 = vmatpush1.bf16.msra.mxu0 0
    %818 = vmatprep.subr.bf16.mxu0 0
    %819 = vmatpush1.bf16.msra.mxu0 0
    %820 = vmatprep.subr.bf16.mxu0 0
    %821 = vmatpush1.bf16.msra.mxu0 0
    %822 = vmatprep.subr.bf16.mxu0 0
    %823 = vmatpush1.bf16.msra.mxu0 0
    %824 = vmatprep.mubr.bf16.mxu0 0
    %825 = vmatmul.mubr.bf16.gmra.mrb[0].mxu0 %v790
    %v826 = vpop.f32.mrb[0].mxu0
    %v827 = vadd.f32 0.0, %v826
    %v828 = vpop.f32.mrb[0].mxu0
    %v829 = vadd.f32 0.0, %v828
    %v830 = vpop.f32.mrb[0].mxu0
    %v831 = vadd.f32 0.0, %v830
    %v832 = vpop.f32.mrb[0].mxu0
    %v833 = vadd.f32 0.0, %v832
    %834 = vdwg.mxu0
    %v835 = vadd.f32 %v633, %v827
    %v836 = vadd.f32 %v634, %v829
    %v837 = vadd.f32 %v635, %v831
    %v838 = vadd.f32 %v636, %v833
    %s839 = scalar_lea.vmem %s1, 512
    %v840 = vld [vmem:[%s839] sm:$0xff]
    %v841 = vld [vmem:[%s839 + $0x8] sm:$0xff]
    %v842 = vld [vmem:[%s839 + $0x10] sm:$0xff]
    %v843 = vld [vmem:[%s839 + $0x18] sm:$0xff]
    %v844 = vld [vmem:[%s839 + $0x20] sm:$0xff]
    %v845 = vld [vmem:[%s839 + $0x28] sm:$0xff]
    %v846 = vld [vmem:[%s839 + $0x30] sm:$0xff]
    %v847 = vld [vmem:[%s839 + $0x38] sm:$0xff]
    %v848 = vld [vmem:[%s839 + $0x40] sm:$0xff]
    %v849 = vld [vmem:[%s839 + $0x48] sm:$0xff]
    %v850 = vld [vmem:[%s839 + $0x50] sm:$0xff]
    %v851 = vld [vmem:[%s839 + $0x58] sm:$0xff]
    %v852 = vld [vmem:[%s839 + $0x60] sm:$0xff]
    %v853 = vld [vmem:[%s839 + $0x68] sm:$0xff]
    %v854 = vld [vmem:[%s839 + $0x70] sm:$0xff]
    %v855 = vld [vmem:[%s839 + $0x78] sm:$0xff]
    %s856 = sadd.s32 %s654, 28
    %s857 = smul.addr %s856, 4
    %s858 = scalar_lea.vmem %s0, %s857
    %v859 = vld [vmem:[%s858] sm:$0xf]
    %v860 = vld [vmem:[%s858 + $0x4] sm:$0xf]
    %v877 = vunpack.c.l.b16 %v840
    %v878 = vunpack.c.h.b16 %v840
    %v879 = vunpack.c.l.b16 %v841
    %v880 = vunpack.c.h.b16 %v841
    %v881 = vunpack.c.l.b16 %v842
    %v882 = vunpack.c.h.b16 %v842
    %v883 = vunpack.c.l.b16 %v843
    %v884 = vunpack.c.h.b16 %v843
    %v885 = vunpack.c.l.b16 %v844
    %v886 = vunpack.c.h.b16 %v844
    %v887 = vunpack.c.l.b16 %v845
    %v888 = vunpack.c.h.b16 %v845
    %v889 = vunpack.c.l.b16 %v846
    %v890 = vunpack.c.h.b16 %v846
    %v891 = vunpack.c.l.b16 %v847
    %v892 = vunpack.c.h.b16 %v847
    %v893 = vunpack.c.l.b16 %v848
    %v894 = vunpack.c.h.b16 %v848
    %v895 = vunpack.c.l.b16 %v849
    %v896 = vunpack.c.h.b16 %v849
    %v897 = vunpack.c.l.b16 %v850
    %v898 = vunpack.c.h.b16 %v850
    %v899 = vunpack.c.l.b16 %v851
    %v900 = vunpack.c.h.b16 %v851
    %v901 = vunpack.c.l.b16 %v852
    %v902 = vunpack.c.h.b16 %v852
    %v903 = vunpack.c.l.b16 %v853
    %v904 = vunpack.c.h.b16 %v853
    %v905 = vunpack.c.l.b16 %v854
    %v906 = vunpack.c.h.b16 %v854
    %v907 = vunpack.c.l.b16 %v855
    %v908 = vunpack.c.h.b16 %v855
    %v909 = vpack.c.b16 %v879, %v877
    %v910 = vpack.c.b16 %v880, %v878
    %v911 = vpack.c.b16 %v883, %v881
    %v912 = vpack.c.b16 %v884, %v882
    %v913 = vpack.c.b16 %v887, %v885
    %v914 = vpack.c.b16 %v888, %v886
    %v915 = vpack.c.b16 %v891, %v889
    %v916 = vpack.c.b16 %v892, %v890
    %v917 = vpack.c.b16 %v895, %v893
    %v918 = vpack.c.b16 %v896, %v894
    %v919 = vpack.c.b16 %v899, %v897
    %v920 = vpack.c.b16 %v900, %v898
    %v921 = vpack.c.b16 %v903, %v901
    %v922 = vpack.c.b16 %v904, %v902
    %v923 = vpack.c.b16 %v907, %v905
    %v924 = vpack.c.b16 %v908, %v906
    %941 = vmatprep.subr.bf16.mxu0 %v910
    %942 = vmatpush1.bf16.msra.mxu0 %v909
    %943 = vmatprep.subr.bf16.mxu0 %v912
    %944 = vmatpush1.bf16.msra.mxu0 %v911
    %945 = vmatprep.subr.bf16.mxu0 %v914
    %946 = vmatpush1.bf16.msra.mxu0 %v913
    %947 = vmatprep.subr.bf16.mxu0 %v916
    %948 = vmatpush1.bf16.msra.mxu0 %v915
    %949 = vmatprep.subr.bf16.mxu0 %v918
    %950 = vmatpush1.bf16.msra.mxu0 %v917
    %951 = vmatprep.subr.bf16.mxu0 %v920
    %952 = vmatpush1.bf16.msra.mxu0 %v919
    %953 = vmatprep.subr.bf16.mxu0 %v922
    %954 = vmatpush1.bf16.msra.mxu0 %v921
    %955 = vmatprep.subr.bf16.mxu0 %v924
    %956 = vmatpush1.bf16.msra.mxu0 %v923
    %957 = vmatprep.subr.bf16.mxu0 0
    %958 = vmatpush1.bf16.msra.mxu0 0
    %959 = vmatprep.subr.bf16.mxu0 0
    %960 = vmatpush1.bf16.msra.mxu0 0
    %961 = vmatprep.subr.bf16.mxu0 0
    %962 = vmatpush1.bf16.msra.mxu0 0
    %963 = vmatprep.subr.bf16.mxu0 0
    %964 = vmatpush1.bf16.msra.mxu0 0
    %965 = vmatprep.subr.bf16.mxu0 0
    %966 = vmatpush1.bf16.msra.mxu0 0
    %967 = vmatprep.subr.bf16.mxu0 0
    %968 = vmatpush1.bf16.msra.mxu0 0
    %969 = vmatprep.subr.bf16.mxu0 0
    %970 = vmatpush1.bf16.msra.mxu0 0
    %971 = vmatprep.subr.bf16.mxu0 0
    %972 = vmatpush1.bf16.msra.mxu0 0
    %973 = vmatprep.mubr.bf16.mxu0 0
    %974 = vmatmul.mubr.bf16.gmra.mrb[0].mxu0 %v790
    %v975 = vpop.f32.mrb[0].mxu0
    %v976 = vadd.f32 0.0, %v975
    %v977 = vpop.f32.mrb[0].mxu0
    %v978 = vadd.f32 0.0, %v977
    %v979 = vpop.f32.mrb[0].mxu0
    %v980 = vadd.f32 0.0, %v979
    %v981 = vpop.f32.mrb[0].mxu0
    %v982 = vadd.f32 0.0, %v981
    %983 = vdwg.mxu0
    %v984 = vadd.f32 %v782, %v976
    %v985 = vadd.f32 %v783, %v978
    %v986 = vadd.f32 %v784, %v980
    %v987 = vadd.f32 %v785, %v982
    %v990 = vunpack.c.l.b16 %v859
    %v991 = vunpack.c.l.b16 %v860
    %v992 = vpack.c.b16 %v991, %v990
    %994 = vmatprep.subr.bf16.mxu0 %v910
    %995 = vmatpush1.bf16.msra.mxu0 %v909
    %996 = vmatprep.subr.bf16.mxu0 %v912
    %997 = vmatpush1.bf16.msra.mxu0 %v911
    %998 = vmatprep.subr.bf16.mxu0 %v914
    %999 = vmatpush1.bf16.msra.mxu0 %v913
    %1000 = vmatprep.subr.bf16.mxu0 %v916
    %1001 = vmatpush1.bf16.msra.mxu0 %v915
    %1002 = vmatprep.subr.bf16.mxu0 %v918
    %1003 = vmatpush1.bf16.msra.mxu0 %v917
    %1004 = vmatprep.subr.bf16.mxu0 %v920
    %1005 = vmatpush1.bf16.msra.mxu0 %v919
    %1006 = vmatprep.subr.bf16.mxu0 %v922
    %1007 = vmatpush1.bf16.msra.mxu0 %v921
    %1008 = vmatprep.subr.bf16.mxu0 %v924
    %1009 = vmatpush1.bf16.msra.mxu0 %v923
    %1010 = vmatprep.subr.bf16.mxu0 0
    %1011 = vmatpush1.bf16.msra.mxu0 0
    %1012 = vmatprep.subr.bf16.mxu0 0
    %1013 = vmatpush1.bf16.msra.mxu0 0
    %1014 = vmatprep.subr.bf16.mxu0 0
    %1015 = vmatpush1.bf16.msra.mxu0 0
    %1016 = vmatprep.subr.bf16.mxu0 0
    %1017 = vmatpush1.bf16.msra.mxu0 0
    %1018 = vmatprep.subr.bf16.mxu0 0
    %1019 = vmatpush1.bf16.msra.mxu0 0
    %1020 = vmatprep.subr.bf16.mxu0 0
    %1021 = vmatpush1.bf16.msra.mxu0 0
    %1022 = vmatprep.subr.bf16.mxu0 0
    %1023 = vmatpush1.bf16.msra.mxu0 0
    %1024 = vmatprep.subr.bf16.mxu0 0
    %1025 = vmatpush1.bf16.msra.mxu0 0
    %1026 = vmatprep.mubr.bf16.mxu0 0
    %1027 = vmatmul.mubr.bf16.gmra.mrb[0].mxu0 %v992
    %v1028 = vpop.f32.mrb[0].mxu0
    %v1029 = vadd.f32 0.0, %v1028
    %v1030 = vpop.f32.mrb[0].mxu0
    %v1031 = vadd.f32 0.0, %v1030
    %v1032 = vpop.f32.mrb[0].mxu0
    %v1033 = vadd.f32 0.0, %v1032
    %v1034 = vpop.f32.mrb[0].mxu0
    %v1035 = vadd.f32 0.0, %v1034
    %1036 = vdwg.mxu0
    %v1037 = vadd.f32 %v835, %v1029
    %v1038 = vadd.f32 %v836, %v1031
    %v1039 = vadd.f32 %v837, %v1033
    %v1040 = vadd.f32 %v838, %v1035
    %v1041 = vmax.f32 %v984, %v1037
    %v1042 = vmax.f32 %v985, %v1038
    %v1043 = vmax.f32 %v986, %v1039
    %v1044 = vmax.f32 %v987, %v1040
    %v1045 = vmax.f32 %v1041, %v1042
    %v1046 = vmax.f32 %v1043, %v1044
    %v1048 = vlaneseq
    %v1049 = vshrl.u32 %v1048, 7
    %v1050 = vsub.s32 0, %v1049
    %v1051 = vrot.slane %v27, %v1050
    %v1053 = vadd.f32 %v1045, %v1051
    %v1054 = vadd.f32 %v1046, %v1051
    %v1055 = vmax.f32 %v1053, 0.0
    %v1056 = vmax.f32 %v1054, 0.0
    %v1057 = vpack.c.bf16 %v1056, %v1055
    %s1058 = sshra.s32 %s35, 4
    %s1059 = sand.u32 %s35, 15
    %s1060 = smul.addr %s1058, 8
    %s1061 = scalar_lea.vmem [#allocation2], %s1060
    %1062 = vst [vmem:[%s1061] sm:$0xff] %v1057
  $region34: #{net_bulk_forward.1} parent=0 // loop_footer
    %s34 = sadd.s32 1, %s30
  $region35: #{net_bulk_forward.1} parent=0 // loop_footer_branch
    %29 = sbr.rel target = $region31
  $region36: #{net_bulk_forward.1} parent=0 // loop_exit
    _
  loop: start=0, step=1, limit=7
  $region37: #{net_bulk_forward.1} parent=0 // loop_pre_header
    _
  $region38: #{net_bulk_forward.1} parent=0 // loop_header
    %s1064 = sphi 0, %s1068
    %p1065 = scmp.ge.s32.totalorder %s1064, 7
  $region39: #{net_bulk_forward.1} parent=0 // loop_header_branch
    %1067 = sbr.rel (%p1065) target = $region43
  $region40: #{net_bulk_forward.1} parent=0 // loop_body
    %s1069 = smul.u32 %s1064, 16
    %v1070 = vld [vmem:[%s1] sm:$0xff]
    %v1071 = vld [vmem:[%s1 + $0x8] sm:$0xff]
    %v1072 = vld [vmem:[%s1 + $0x10] sm:$0xff]
    %v1073 = vld [vmem:[%s1 + $0x18] sm:$0xff]
    %v1074 = vld [vmem:[%s1 + $0x20] sm:$0xff]
    %v1075 = vld [vmem:[%s1 + $0x28] sm:$0xff]
    %v1076 = vld [vmem:[%s1 + $0x30] sm:$0xff]
    %v1077 = vld [vmem:[%s1 + $0x38] sm:$0xff]
    %v1078 = vld [vmem:[%s1 + $0x40] sm:$0xff]
    %v1079 = vld [vmem:[%s1 + $0x48] sm:$0xff]
    %v1080 = vld [vmem:[%s1 + $0x50] sm:$0xff]
    %v1081 = vld [vmem:[%s1 + $0x58] sm:$0xff]
    %v1082 = vld [vmem:[%s1 + $0x60] sm:$0xff]
    %v1083 = vld [vmem:[%s1 + $0x68] sm:$0xff]
    %v1084 = vld [vmem:[%s1 + $0x70] sm:$0xff]
    %v1085 = vld [vmem:[%s1 + $0x78] sm:$0xff]
    %s1086 = sshra.s32 %s1069, 3
    %s1087 = sand.u32 %s1069, 7
    %s1088 = sadd.s32 %s1086, 56
    %s1089 = smul.addr %s1088, 4
    %s1090 = scalar_lea.vmem %s0, %s1089
    %v1091 = vld [vmem:[%s1090] sm:$0xf]
    %v1092 = vld [vmem:[%s1090 + $0x4] sm:$0xf]
    %s1093 = sadd.s32 %s1086, 84
    %s1094 = smul.addr %s1093, 4
    %s1095 = scalar_lea.vmem %s0, %s1094
    %v1096 = vld [vmem:[%s1095] sm:$0xf]
    %v1097 = vld [vmem:[%s1095 + $0x4] sm:$0xf]
    %s1098 = scalar_lea.vmem %s1, 128
    %v1099 = vld [vmem:[%s1098] sm:$0xff]
    %v1100 = vld [vmem:[%s1098 + $0x8] sm:$0xff]
    %v1101 = vld [vmem:[%s1098 + $0x10] sm:$0xff]
    %v1102 = vld [vmem:[%s1098 + $0x18] sm:$0xff]
    %v1103 = vld [vmem:[%s1098 + $0x20] sm:$0xff]
    %v1104 = vld [vmem:[%s1098 + $0x28] sm:$0xff]
    %v1105 = vld [vmem:[%s1098 + $0x30] sm:$0xff]
    %v1106 = vld [vmem:[%s1098 + $0x38] sm:$0xff]
    %v1107 = vld [vmem:[%s1098 + $0x40] sm:$0xff]
    %v1108 = vld [vmem:[%s1098 + $0x48] sm:$0xff]
    %v1109 = vld [vmem:[%s1098 + $0x50] sm:$0xff]
    %v1110 = vld [vmem:[%s1098 + $0x58] sm:$0xff]
    %v1111 = vld [vmem:[%s1098 + $0x60] sm:$0xff]
    %v1112 = vld [vmem:[%s1098 + $0x68] sm:$0xff]
    %v1113 = vld [vmem:[%s1098 + $0x70] sm:$0xff]
    %v1114 = vld [vmem:[%s1098 + $0x78] sm:$0xff]
    %s1115 = sadd.s32 %s1086, 14
    %s1116 = smul.addr %s1115, 4
    %s1117 = scalar_lea.vmem %s0, %s1116
    %v1118 = vld [vmem:[%s1117] sm:$0xf]
    %v1119 = vld [vmem:[%s1117 + $0x4] sm:$0xf]
    %v1122 = vunpack.c.l.b16 %v1096
    %v1123 = vunpack.c.l.b16 %v1097
    %v1124 = vpack.c.b16 %v1123, %v1122
    %v1142 = vunpack.c.l.b16 %v1099
    %v1143 = vunpack.c.h.b16 %v1099
    %v1144 = vunpack.c.l.b16 %v1100
    %v1145 = vunpack.c.h.b16 %v1100
    %v1146 = vunpack.c.l.b16 %v1101
    %v1147 = vunpack.c.h.b16 %v1101
    %v1148 = vunpack.c.l.b16 %v1102
    %v1149 = vunpack.c.h.b16 %v1102
    %v1150 = vunpack.c.l.b16 %v1103
    %v1151 = vunpack.c.h.b16 %v1103
    %v1152 = vunpack.c.l.b16 %v1104
    %v1153 = vunpack.c.h.b16 %v1104
    %v1154 = vunpack.c.l.b16 %v1105
    %v1155 = vunpack.c.h.b16 %v1105
    %v1156 = vunpack.c.l.b16 %v1106
    %v1157 = vunpack.c.h.b16 %v1106
    %v1158 = vunpack.c.l.b16 %v1107
    %v1159 = vunpack.c.h.b16 %v1107
    %v1160 = vunpack.c.l.b16 %v1108
    %v1161 = vunpack.c.h.b16 %v1108
    %v1162 = vunpack.c.l.b16 %v1109
    %v1163 = vunpack.c.h.b16 %v1109
    %v1164 = vunpack.c.l.b16 %v1110
    %v1165 = vunpack.c.h.b16 %v1110
    %v1166 = vunpack.c.l.b16 %v1111
    %v1167 = vunpack.c.h.b16 %v1111
    %v1168 = vunpack.c.l.b16 %v1112
    %v1169 = vunpack.c.h.b16 %v1112
    %v1170 = vunpack.c.l.b16 %v1113
    %v1171 = vunpack.c.h.b16 %v1113
    %v1172 = vunpack.c.l.b16 %v1114
    %v1173 = vunpack.c.h.b16 %v1114
    %v1174 = vpack.c.b16 %v1144, %v1142
    %v1175 = vpack.c.b16 %v1145, %v1143
    %v1176 = vpack.c.b16 %v1148, %v1146
    %v1177 = vpack.c.b16 %v1149, %v1147
    %v1178 = vpack.c.b16 %v1152, %v1150
    %v1179 = vpack.c.b16 %v1153, %v1151
    %v1180 = vpack.c.b16 %v1156, %v1154
    %v1181 = vpack.c.b16 %v1157, %v1155
    %v1182 = vpack.c.b16 %v1160, %v1158
    %v1183 = vpack.c.b16 %v1161, %v1159
    %v1184 = vpack.c.b16 %v1164, %v1162
    %v1185 = vpack.c.b16 %v1165, %v1163
    %v1186 = vpack.c.b16 %v1168, %v1166
    %v1187 = vpack.c.b16 %v1169, %v1167
    %v1188 = vpack.c.b16 %v1172, %v1170
    %v1189 = vpack.c.b16 %v1173, %v1171
    %1206 = vmatprep.subr.bf16.mxu0 %v1175
    %1207 = vmatpush1.bf16.msra.mxu0 %v1174
    %1208 = vmatprep.subr.bf16.mxu0 %v1177
    %1209 = vmatpush1.bf16.msra.mxu0 %v1176
    %1210 = vmatprep.subr.bf16.mxu0 %v1179
    %1211 = vmatpush1.bf16.msra.mxu0 %v1178
    %1212 = vmatprep.subr.bf16.mxu0 %v1181
    %1213 = vmatpush1.bf16.msra.mxu0 %v1180
    %1214 = vmatprep.subr.bf16.mxu0 %v1183
    %1215 = vmatpush1.bf16.msra.mxu0 %v1182
    %1216 = vmatprep.subr.bf16.mxu0 %v1185
    %1217 = vmatpush1.bf16.msra.mxu0 %v1184
    %1218 = vmatprep.subr.bf16.mxu0 %v1187
    %1219 = vmatpush1.bf16.msra.mxu0 %v1186
    %1220 = vmatprep.subr.bf16.mxu0 %v1189
    %1221 = vmatpush1.bf16.msra.mxu0 %v1188
    %1222 = vmatprep.subr.bf16.mxu0 0
    %1223 = vmatpush1.bf16.msra.mxu0 0
    %1224 = vmatprep.subr.bf16.mxu0 0
    %1225 = vmatpush1.bf16.msra.mxu0 0
    %1226 = vmatprep.subr.bf16.mxu0 0
    %1227 = vmatpush1.bf16.msra.mxu0 0
    %1228 = vmatprep.subr.bf16.mxu0 0
    %1229 = vmatpush1.bf16.msra.mxu0 0
    %1230 = vmatprep.subr.bf16.mxu0 0
    %1231 = vmatpush1.bf16.msra.mxu0 0
    %1232 = vmatprep.subr.bf16.mxu0 0
    %1233 = vmatpush1.bf16.msra.mxu0 0
    %1234 = vmatprep.subr.bf16.mxu0 0
    %1235 = vmatpush1.bf16.msra.mxu0 0
    %1236 = vmatprep.subr.bf16.mxu0 0
    %1237 = vmatpush1.bf16.msra.mxu0 0
    %1238 = vmatprep.mubr.bf16.mxu0 0
    %1239 = vmatmul.mubr.bf16.gmra.mrb[0].mxu0 %v1124
    %v1240 = vpop.f32.mrb[0].mxu0
    %v1241 = vadd.f32 0.0, %v1240
    %v1242 = vpop.f32.mrb[0].mxu0
    %v1243 = vadd.f32 0.0, %v1242
    %v1244 = vpop.f32.mrb[0].mxu0
    %v1245 = vadd.f32 0.0, %v1244
    %v1246 = vpop.f32.mrb[0].mxu0
    %v1247 = vadd.f32 0.0, %v1246
    %1248 = vdwg.mxu0
    %v1251 = vunpack.c.l.b16 %v1091
    %v1252 = vunpack.c.l.b16 %v1092
    %v1253 = vpack.c.b16 %v1252, %v1251
    %v1271 = vunpack.c.l.b16 %v1070
    %v1272 = vunpack.c.h.b16 %v1070
    %v1273 = vunpack.c.l.b16 %v1071
    %v1274 = vunpack.c.h.b16 %v1071
    %v1275 = vunpack.c.l.b16 %v1072
    %v1276 = vunpack.c.h.b16 %v1072
    %v1277 = vunpack.c.l.b16 %v1073
    %v1278 = vunpack.c.h.b16 %v1073
    %v1279 = vunpack.c.l.b16 %v1074
    %v1280 = vunpack.c.h.b16 %v1074
    %v1281 = vunpack.c.l.b16 %v1075
    %v1282 = vunpack.c.h.b16 %v1075
    %v1283 = vunpack.c.l.b16 %v1076
    %v1284 = vunpack.c.h.b16 %v1076
    %v1285 = vunpack.c.l.b16 %v1077
    %v1286 = vunpack.c.h.b16 %v1077
    %v1287 = vunpack.c.l.b16 %v1078
    %v1288 = vunpack.c.h.b16 %v1078
    %v1289 = vunpack.c.l.b16 %v1079
    %v1290 = vunpack.c.h.b16 %v1079
    %v1291 = vunpack.c.l.b16 %v1080
    %v1292 = vunpack.c.h.b16 %v1080
    %v1293 = vunpack.c.l.b16 %v1081
    %v1294 = vunpack.c.h.b16 %v1081
    %v1295 = vunpack.c.l.b16 %v1082
    %v1296 = vunpack.c.h.b16 %v1082
    %v1297 = vunpack.c.l.b16 %v1083
    %v1298 = vunpack.c.h.b16 %v1083
    %v1299 = vunpack.c.l.b16 %v1084
    %v1300 = vunpack.c.h.b16 %v1084
    %v1301 = vunpack.c.l.b16 %v1085
    %v1302 = vunpack.c.h.b16 %v1085
    %v1303 = vpack.c.b16 %v1273, %v1271
    %v1304 = vpack.c.b16 %v1274, %v1272
    %v1305 = vpack.c.b16 %v1277, %v1275
    %v1306 = vpack.c.b16 %v1278, %v1276
    %v1307 = vpack.c.b16 %v1281, %v1279
    %v1308 = vpack.c.b16 %v1282, %v1280
    %v1309 = vpack.c.b16 %v1285, %v1283
    %v1310 = vpack.c.b16 %v1286, %v1284
    %v1311 = vpack.c.b16 %v1289, %v1287
    %v1312 = vpack.c.b16 %v1290, %v1288
    %v1313 = vpack.c.b16 %v1293, %v1291
    %v1314 = vpack.c.b16 %v1294, %v1292
    %v1315 = vpack.c.b16 %v1297, %v1295
    %v1316 = vpack.c.b16 %v1298, %v1296
    %v1317 = vpack.c.b16 %v1301, %v1299
    %v1318 = vpack.c.b16 %v1302, %v1300
    %1335 = vmatprep.subr.bf16.mxu0 %v1304
    %1336 = vmatpush1.bf16.msra.mxu0 %v1303
    %1337 = vmatprep.subr.bf16.mxu0 %v1306
    %1338 = vmatpush1.bf16.msra.mxu0 %v1305
    %1339 = vmatprep.subr.bf16.mxu0 %v1308
    %1340 = vmatpush1.bf16.msra.mxu0 %v1307
    %1341 = vmatprep.subr.bf16.mxu0 %v1310
    %1342 = vmatpush1.bf16.msra.mxu0 %v1309
    %1343 = vmatprep.subr.bf16.mxu0 %v1312
    %1344 = vmatpush1.bf16.msra.mxu0 %v1311
    %1345 = vmatprep.subr.bf16.mxu0 %v1314
    %1346 = vmatpush1.bf16.msra.mxu0 %v1313
    %1347 = vmatprep.subr.bf16.mxu0 %v1316
    %1348 = vmatpush1.bf16.msra.mxu0 %v1315
    %1349 = vmatprep.subr.bf16.mxu0 %v1318
    %1350 = vmatpush1.bf16.msra.mxu0 %v1317
    %1351 = vmatprep.subr.bf16.mxu0 0
    %1352 = vmatpush1.bf16.msra.mxu0 0
    %1353 = vmatprep.subr.bf16.mxu0 0
    %1354 = vmatpush1.bf16.msra.mxu0 0
    %1355 = vmatprep.subr.bf16.mxu0 0
    %1356 = vmatpush1.bf16.msra.mxu0 0
    %1357 = vmatprep.subr.bf16.mxu0 0
    %1358 = vmatpush1.bf16.msra.mxu0 0
    %1359 = vmatprep.subr.bf16.mxu0 0
    %1360 = vmatpush1.bf16.msra.mxu0 0
    %1361 = vmatprep.subr.bf16.mxu0 0
    %1362 = vmatpush1.bf16.msra.mxu0 0
    %1363 = vmatprep.subr.bf16.mxu0 0
    %1364 = vmatpush1.bf16.msra.mxu0 0
    %1365 = vmatprep.subr.bf16.mxu0 0
    %1366 = vmatpush1.bf16.msra.mxu0 0
    %1367 = vmatprep.mubr.bf16.mxu0 0
    %1368 = vmatmul.mubr.bf16.gmra.mrb[0].mxu0 %v1253
    %v1369 = vpop.f32.mrb[0].mxu0
    %v1370 = vadd.f32 %v1241, %v1369
    %v1371 = vpop.f32.mrb[0].mxu0
    %v1372 = vadd.f32 %v1243, %v1371
    %v1373 = vpop.f32.mrb[0].mxu0
    %v1374 = vadd.f32 %v1245, %v1373
    %v1375 = vpop.f32.mrb[0].mxu0
    %v1376 = vadd.f32 %v1247, %v1375
    %1377 = vdwg.mxu0
    %v1380 = vunpack.c.l.b16 %v1118
    %v1381 = vunpack.c.l.b16 %v1119
    %v1382 = vpack.c.b16 %v1381, %v1380
    %1384 = vmatprep.subr.bf16.mxu0 %v1175
    %1385 = vmatpush1.bf16.msra.mxu0 %v1174
    %1386 = vmatprep.subr.bf16.mxu0 %v1177
    %1387 = vmatpush1.bf16.msra.mxu0 %v1176
    %1388 = vmatprep.subr.bf16.mxu0 %v1179
    %1389 = vmatpush1.bf16.msra.mxu0 %v1178
    %1390 = vmatprep.subr.bf16.mxu0 %v1181
    %1391 = vmatpush1.bf16.msra.mxu0 %v1180
    %1392 = vmatprep.subr.bf16.mxu0 %v1183
    %1393 = vmatpush1.bf16.msra.mxu0 %v1182
    %1394 = vmatprep.subr.bf16.mxu0 %v1185
    %1395 = vmatpush1.bf16.msra.mxu0 %v1184
    %1396 = vmatprep.subr.bf16.mxu0 %v1187
    %1397 = vmatpush1.bf16.msra.mxu0 %v1186
    %1398 = vmatprep.subr.bf16.mxu0 %v1189
    %1399 = vmatpush1.bf16.msra.mxu0 %v1188
    %1400 = vmatprep.subr.bf16.mxu0 0
    %1401 = vmatpush1.bf16.msra.mxu0 0
    %1402 = vmatprep.subr.bf16.mxu0 0
    %1403 = vmatpush1.bf16.msra.mxu0 0
    %1404 = vmatprep.subr.bf16.mxu0 0
    %1405 = vmatpush1.bf16.msra.mxu0 0
    %1406 = vmatprep.subr.bf16.mxu0 0
    %1407 = vmatpush1.bf16.msra.mxu0 0
    %1408 = vmatprep.subr.bf16.mxu0 0
    %1409 = vmatpush1.bf16.msra.mxu0 0
    %1410 = vmatprep.subr.bf16.mxu0 0
    %1411 = vmatpush1.bf16.msra.mxu0 0
    %1412 = vmatprep.subr.bf16.mxu0 0
    %1413 = vmatpush1.bf16.msra.mxu0 0
    %1414 = vmatprep.subr.bf16.mxu0 0
    %1415 = vmatpush1.bf16.msra.mxu0 0
    %1416 = vmatprep.mubr.bf16.mxu0 0
    %1417 = vmatmul.mubr.bf16.gmra.mrb[0].mxu0 %v1382
    %v1418 = vpop.f32.mrb[0].mxu0
    %v1419 = vadd.f32 0.0, %v1418
    %v1420 = vpop.f32.mrb[0].mxu0
    %v1421 = vadd.f32 0.0, %v1420
    %v1422 = vpop.f32.mrb[0].mxu0
    %v1423 = vadd.f32 0.0, %v1422
    %v1424 = vpop.f32.mrb[0].mxu0
    %v1425 = vadd.f32 0.0, %v1424
    %1426 = vdwg.mxu0
    %1427 = vmatprep.subr.bf16.mxu0 %v1304
    %1428 = vmatpush1.bf16.msra.mxu0 %v1303
    %1429 = vmatprep.subr.bf16.mxu0 %v1306
    %1430 = vmatpush1.bf16.msra.mxu0 %v1305
    %1431 = vmatprep.subr.bf16.mxu0 %v1308
    %1432 = vmatpush1.bf16.msra.mxu0 %v1307
    %1433 = vmatprep.subr.bf16.mxu0 %v1310
    %1434 = vmatpush1.bf16.msra.mxu0 %v1309
    %1435 = vmatprep.subr.bf16.mxu0 %v1312
    %1436 = vmatpush1.bf16.msra.mxu0 %v1311
    %1437 = vmatprep.subr.bf16.mxu0 %v1314
    %1438 = vmatpush1.bf16.msra.mxu0 %v1313
    %1439 = vmatprep.subr.bf16.mxu0 %v1316
    %1440 = vmatpush1.bf16.msra.mxu0 %v1315
    %1441 = vmatprep.subr.bf16.mxu0 %v1318
    %1442 = vmatpush1.bf16.msra.mxu0 %v1317
    %1443 = vmatprep.subr.bf16.mxu0 0
    %1444 = vmatpush1.bf16.msra.mxu0 0
    %1445 = vmatprep.subr.bf16.mxu0 0
    %1446 = vmatpush1.bf16.msra.mxu0 0
    %1447 = vmatprep.subr.bf16.mxu0 0
    %1448 = vmatpush1.bf16.msra.mxu0 0
    %1449 = vmatprep.subr.bf16.mxu0 0
    %1450 = vmatpush1.bf16.msra.mxu0 0
    %1451 = vmatprep.subr.bf16.mxu0 0
    %1452 = vmatpush1.bf16.msra.mxu0 0
    %1453 = vmatprep.subr.bf16.mxu0 0
    %1454 = vmatpush1.bf16.msra.mxu0 0
    %1455 = vmatprep.subr.bf16.mxu0 0
    %1456 = vmatpush1.bf16.msra.mxu0 0
    %1457 = vmatprep.subr.bf16.mxu0 0
    %1458 = vmatpush1.bf16.msra.mxu0 0
    %1459 = vmatprep.mubr.bf16.mxu0 0
    %1460 = vmatmul.mubr.bf16.gmra.mrb[0].mxu0 %v1124
    %v1461 = vpop.f32.mrb[0].mxu0
    %v1462 = vadd.f32 %v1419, %v1461
    %v1463 = vpop.f32.mrb[0].mxu0
    %v1464 = vadd.f32 %v1421, %v1463
    %v1465 = vpop.f32.mrb[0].mxu0
    %v1466 = vadd.f32 %v1423, %v1465
    %v1467 = vpop.f32.mrb[0].mxu0
    %v1468 = vadd.f32 %v1425, %v1467
    %1469 = vdwg.mxu0
    %s1470 = scalar_lea.vmem %s1, 256
    %v1471 = vld [vmem:[%s1470] sm:$0xff]
    %v1472 = vld [vmem:[%s1470 + $0x8] sm:$0xff]
    %v1473 = vld [vmem:[%s1470 + $0x10] sm:$0xff]
    %v1474 = vld [vmem:[%s1470 + $0x18] sm:$0xff]
    %v1475 = vld [vmem:[%s1470 + $0x20] sm:$0xff]
    %v1476 = vld [vmem:[%s1470 + $0x28] sm:$0xff]
    %v1477 = vld [vmem:[%s1470 + $0x30] sm:$0xff]
    %v1478 = vld [vmem:[%s1470 + $0x38] sm:$0xff]
    %v1479 = vld [vmem:[%s1470 + $0x40] sm:$0xff]
    %v1480 = vld [vmem:[%s1470 + $0x48] sm:$0xff]
    %v1481 = vld [vmem:[%s1470 + $0x50] sm:$0xff]
    %v1482 = vld [vmem:[%s1470 + $0x58] sm:$0xff]
    %v1483 = vld [vmem:[%s1470 + $0x60] sm:$0xff]
    %v1484 = vld [vmem:[%s1470 + $0x68] sm:$0xff]
    %v1485 = vld [vmem:[%s1470 + $0x70] sm:$0xff]
    %v1486 = vld [vmem:[%s1470 + $0x78] sm:$0xff]
    %s1487 = sadd.s32 %s1115, 28
    %s1488 = smul.addr %s1487, 4
    %s1489 = scalar_lea.vmem %s0, %s1488
    %v1490 = vld [vmem:[%s1489] sm:$0xf]
    %v1491 = vld [vmem:[%s1489 + $0x4] sm:$0xf]
    %v1508 = vunpack.c.l.b16 %v1471
    %v1509 = vunpack.c.h.b16 %v1471
    %v1510 = vunpack.c.l.b16 %v1472
    %v1511 = vunpack.c.h.b16 %v1472
    %v1512 = vunpack.c.l.b16 %v1473
    %v1513 = vunpack.c.h.b16 %v1473
    %v1514 = vunpack.c.l.b16 %v1474
    %v1515 = vunpack.c.h.b16 %v1474
    %v1516 = vunpack.c.l.b16 %v1475
    %v1517 = vunpack.c.h.b16 %v1475
    %v1518 = vunpack.c.l.b16 %v1476
    %v1519 = vunpack.c.h.b16 %v1476
    %v1520 = vunpack.c.l.b16 %v1477
    %v1521 = vunpack.c.h.b16 %v1477
    %v1522 = vunpack.c.l.b16 %v1478
    %v1523 = vunpack.c.h.b16 %v1478
    %v1524 = vunpack.c.l.b16 %v1479
    %v1525 = vunpack.c.h.b16 %v1479
    %v1526 = vunpack.c.l.b16 %v1480
    %v1527 = vunpack.c.h.b16 %v1480
    %v1528 = vunpack.c.l.b16 %v1481
    %v1529 = vunpack.c.h.b16 %v1481
    %v1530 = vunpack.c.l.b16 %v1482
    %v1531 = vunpack.c.h.b16 %v1482
    %v1532 = vunpack.c.l.b16 %v1483
    %v1533 = vunpack.c.h.b16 %v1483
    %v1534 = vunpack.c.l.b16 %v1484
    %v1535 = vunpack.c.h.b16 %v1484
    %v1536 = vunpack.c.l.b16 %v1485
    %v1537 = vunpack.c.h.b16 %v1485
    %v1538 = vunpack.c.l.b16 %v1486
    %v1539 = vunpack.c.h.b16 %v1486
    %v1540 = vpack.c.b16 %v1510, %v1508
    %v1541 = vpack.c.b16 %v1511, %v1509
    %v1542 = vpack.c.b16 %v1514, %v1512
    %v1543 = vpack.c.b16 %v1515, %v1513
    %v1544 = vpack.c.b16 %v1518, %v1516
    %v1545 = vpack.c.b16 %v1519, %v1517
    %v1546 = vpack.c.b16 %v1522, %v1520
    %v1547 = vpack.c.b16 %v1523, %v1521
    %v1548 = vpack.c.b16 %v1526, %v1524
    %v1549 = vpack.c.b16 %v1527, %v1525
    %v1550 = vpack.c.b16 %v1530, %v1528
    %v1551 = vpack.c.b16 %v1531, %v1529
    %v1552 = vpack.c.b16 %v1534, %v1532
    %v1553 = vpack.c.b16 %v1535, %v1533
    %v1554 = vpack.c.b16 %v1538, %v1536
    %v1555 = vpack.c.b16 %v1539, %v1537
    %1572 = vmatprep.subr.bf16.mxu0 %v1541
    %1573 = vmatpush1.bf16.msra.mxu0 %v1540
    %1574 = vmatprep.subr.bf16.mxu0 %v1543
    %1575 = vmatpush1.bf16.msra.mxu0 %v1542
    %1576 = vmatprep.subr.bf16.mxu0 %v1545
    %1577 = vmatpush1.bf16.msra.mxu0 %v1544
    %1578 = vmatprep.subr.bf16.mxu0 %v1547
    %1579 = vmatpush1.bf16.msra.mxu0 %v1546
    %1580 = vmatprep.subr.bf16.mxu0 %v1549
    %1581 = vmatpush1.bf16.msra.mxu0 %v1548
    %1582 = vmatprep.subr.bf16.mxu0 %v1551
    %1583 = vmatpush1.bf16.msra.mxu0 %v1550
    %1584 = vmatprep.subr.bf16.mxu0 %v1553
    %1585 = vmatpush1.bf16.msra.mxu0 %v1552
    %1586 = vmatprep.subr.bf16.mxu0 %v1555
    %1587 = vmatpush1.bf16.msra.mxu0 %v1554
    %1588 = vmatprep.subr.bf16.mxu0 0
    %1589 = vmatpush1.bf16.msra.mxu0 0
    %1590 = vmatprep.subr.bf16.mxu0 0
    %1591 = vmatpush1.bf16.msra.mxu0 0
    %1592 = vmatprep.subr.bf16.mxu0 0
    %1593 = vmatpush1.bf16.msra.mxu0 0
    %1594 = vmatprep.subr.bf16.mxu0 0
    %1595 = vmatpush1.bf16.msra.mxu0 0
    %1596 = vmatprep.subr.bf16.mxu0 0
    %1597 = vmatpush1.bf16.msra.mxu0 0
    %1598 = vmatprep.subr.bf16.mxu0 0
    %1599 = vmatpush1.bf16.msra.mxu0 0
    %1600 = vmatprep.subr.bf16.mxu0 0
    %1601 = vmatpush1.bf16.msra.mxu0 0
    %1602 = vmatprep.subr.bf16.mxu0 0
    %1603 = vmatpush1.bf16.msra.mxu0 0
    %1604 = vmatprep.mubr.bf16.mxu0 0
    %1605 = vmatmul.mubr.bf16.gmra.mrb[0].mxu0 %v1382
    %v1606 = vpop.f32.mrb[0].mxu0
    %v1607 = vadd.f32 0.0, %v1606
    %v1608 = vpop.f32.mrb[0].mxu0
    %v1609 = vadd.f32 0.0, %v1608
    %v1610 = vpop.f32.mrb[0].mxu0
    %v1611 = vadd.f32 0.0, %v1610
    %v1612 = vpop.f32.mrb[0].mxu0
    %v1613 = vadd.f32 0.0, %v1612
    %1614 = vdwg.mxu0
    %v1615 = vadd.f32 %v1370, %v1607
    %v1616 = vadd.f32 %v1372, %v1609
    %v1617 = vadd.f32 %v1374, %v1611
    %v1618 = vadd.f32 %v1376, %v1613
    %v1621 = vunpack.c.l.b16 %v1490
    %v1622 = vunpack.c.l.b16 %v1491
    %v1623 = vpack.c.b16 %v1622, %v1621
    %1625 = vmatprep.subr.bf16.mxu0 %v1541
    %1626 = vmatpush1.bf16.msra.mxu0 %v1540
    %1627 = vmatprep.subr.bf16.mxu0 %v1543
    %1628 = vmatpush1.bf16.msra.mxu0 %v1542
    %1629 = vmatprep.subr.bf16.mxu0 %v1545
    %1630 = vmatpush1.bf16.msra.mxu0 %v1544
    %1631 = vmatprep.subr.bf16.mxu0 %v1547
    %1632 = vmatpush1.bf16.msra.mxu0 %v1546
    %1633 = vmatprep.subr.bf16.mxu0 %v1549
    %1634 = vmatpush1.bf16.msra.mxu0 %v1548
    %1635 = vmatprep.subr.bf16.mxu0 %v1551
    %1636 = vmatpush1.bf16.msra.mxu0 %v1550
    %1637 = vmatprep.subr.bf16.mxu0 %v1553
    %1638 = vmatpush1.bf16.msra.mxu0 %v1552
    %1639 = vmatprep.subr.bf16.mxu0 %v1555
    %1640 = vmatpush1.bf16.msra.mxu0 %v1554
    %1641 = vmatprep.subr.bf16.mxu0 0
    %1642 = vmatpush1.bf16.msra.mxu0 0
    %1643 = vmatprep.subr.bf16.mxu0 0
    %1644 = vmatpush1.bf16.msra.mxu0 0
    %1645 = vmatprep.subr.bf16.mxu0 0
    %1646 = vmatpush1.bf16.msra.mxu0 0
    %1647 = vmatprep.subr.bf16.mxu0 0
    %1648 = vmatpush1.bf16.msra.mxu0 0
    %1649 = vmatprep.subr.bf16.mxu0 0
    %1650 = vmatpush1.bf16.msra.mxu0 0
    %1651 = vmatprep.subr.bf16.mxu0 0
    %1652 = vmatpush1.bf16.msra.mxu0 0
    %1653 = vmatprep.subr.bf16.mxu0 0
    %1654 = vmatpush1.bf16.msra.mxu0 0
    %1655 = vmatprep.subr.bf16.mxu0 0
    %1656 = vmatpush1.bf16.msra.mxu0 0
    %1657 = vmatprep.mubr.bf16.mxu0 0
    %1658 = vmatmul.mubr.bf16.gmra.mrb[0].mxu0 %v1623
    %v1659 = vpop.f32.mrb[0].mxu0
    %v1660 = vadd.f32 0.0, %v1659
    %v1661 = vpop.f32.mrb[0].mxu0
    %v1662 = vadd.f32 0.0, %v1661
    %v1663 = vpop.f32.mrb[0].mxu0
    %v1664 = vadd.f32 0.0, %v1663
    %v1665 = vpop.f32.mrb[0].mxu0
    %v1666 = vadd.f32 0.0, %v1665
    %1667 = vdwg.mxu0
    %v1668 = vadd.f32 %v1462, %v1660
    %v1669 = vadd.f32 %v1464, %v1662
    %v1670 = vadd.f32 %v1466, %v1664
    %v1671 = vadd.f32 %v1468, %v1666
    %s1672 = scalar_lea.vmem %s1, 384
    %v1673 = vld [vmem:[%s1672] sm:$0xff]
    %v1674 = vld [vmem:[%s1672 + $0x8] sm:$0xff]
    %v1675 = vld [vmem:[%s1672 + $0x10] sm:$0xff]
    %v1676 = vld [vmem:[%s1672 + $0x18] sm:$0xff]
    %v1677 = vld [vmem:[%s1672 + $0x20] sm:$0xff]
    %v1678 = vld [vmem:[%s1672 + $0x28] sm:$0xff]
    %v1679 = vld [vmem:[%s1672 + $0x30] sm:$0xff]
    %v1680 = vld [vmem:[%s1672 + $0x38] sm:$0xff]
    %v1681 = vld [vmem:[%s1672 + $0x40] sm:$0xff]
    %v1682 = vld [vmem:[%s1672 + $0x48] sm:$0xff]
    %v1683 = vld [vmem:[%s1672 + $0x50] sm:$0xff]
    %v1684 = vld [vmem:[%s1672 + $0x58] sm:$0xff]
    %v1685 = vld [vmem:[%s1672 + $0x60] sm:$0xff]
    %v1686 = vld [vmem:[%s1672 + $0x68] sm:$0xff]
    %v1687 = vld [vmem:[%s1672 + $0x70] sm:$0xff]
    %v1688 = vld [vmem:[%s1672 + $0x78] sm:$0xff]
    %s1689 = sadd.s32 %s1115, 56
    %s1690 = smul.addr %s1689, 4
    %s1691 = scalar_lea.vmem %s0, %s1690
    %v1692 = vld [vmem:[%s1691] sm:$0xf]
    %v1693 = vld [vmem:[%s1691 + $0x4] sm:$0xf]
    %v1710 = vunpack.c.l.b16 %v1673
    %v1711 = vunpack.c.h.b16 %v1673
    %v1712 = vunpack.c.l.b16 %v1674
    %v1713 = vunpack.c.h.b16 %v1674
    %v1714 = vunpack.c.l.b16 %v1675
    %v1715 = vunpack.c.h.b16 %v1675
    %v1716 = vunpack.c.l.b16 %v1676
    %v1717 = vunpack.c.h.b16 %v1676
    %v1718 = vunpack.c.l.b16 %v1677
    %v1719 = vunpack.c.h.b16 %v1677
    %v1720 = vunpack.c.l.b16 %v1678
    %v1721 = vunpack.c.h.b16 %v1678
    %v1722 = vunpack.c.l.b16 %v1679
    %v1723 = vunpack.c.h.b16 %v1679
    %v1724 = vunpack.c.l.b16 %v1680
    %v1725 = vunpack.c.h.b16 %v1680
    %v1726 = vunpack.c.l.b16 %v1681
    %v1727 = vunpack.c.h.b16 %v1681
    %v1728 = vunpack.c.l.b16 %v1682
    %v1729 = vunpack.c.h.b16 %v1682
    %v1730 = vunpack.c.l.b16 %v1683
    %v1731 = vunpack.c.h.b16 %v1683
    %v1732 = vunpack.c.l.b16 %v1684
    %v1733 = vunpack.c.h.b16 %v1684
    %v1734 = vunpack.c.l.b16 %v1685
    %v1735 = vunpack.c.h.b16 %v1685
    %v1736 = vunpack.c.l.b16 %v1686
    %v1737 = vunpack.c.h.b16 %v1686
    %v1738 = vunpack.c.l.b16 %v1687
    %v1739 = vunpack.c.h.b16 %v1687
    %v1740 = vunpack.c.l.b16 %v1688
    %v1741 = vunpack.c.h.b16 %v1688
    %v1742 = vpack.c.b16 %v1712, %v1710
    %v1743 = vpack.c.b16 %v1713, %v1711
    %v1744 = vpack.c.b16 %v1716, %v1714
    %v1745 = vpack.c.b16 %v1717, %v1715
    %v1746 = vpack.c.b16 %v1720, %v1718
    %v1747 = vpack.c.b16 %v1721, %v1719
    %v1748 = vpack.c.b16 %v1724, %v1722
    %v1749 = vpack.c.b16 %v1725, %v1723
    %v1750 = vpack.c.b16 %v1728, %v1726
    %v1751 = vpack.c.b16 %v1729, %v1727
    %v1752 = vpack.c.b16 %v1732, %v1730
    %v1753 = vpack.c.b16 %v1733, %v1731
    %v1754 = vpack.c.b16 %v1736, %v1734
    %v1755 = vpack.c.b16 %v1737, %v1735
    %v1756 = vpack.c.b16 %v1740, %v1738
    %v1757 = vpack.c.b16 %v1741, %v1739
    %1774 = vmatprep.subr.bf16.mxu0 %v1743
    %1775 = vmatpush1.bf16.msra.mxu0 %v1742
    %1776 = vmatprep.subr.bf16.mxu0 %v1745
    %1777 = vmatpush1.bf16.msra.mxu0 %v1744
    %1778 = vmatprep.subr.bf16.mxu0 %v1747
    %1779 = vmatpush1.bf16.msra.mxu0 %v1746
    %1780 = vmatprep.subr.bf16.mxu0 %v1749
    %1781 = vmatpush1.bf16.msra.mxu0 %v1748
    %1782 = vmatprep.subr.bf16.mxu0 %v1751
    %1783 = vmatpush1.bf16.msra.mxu0 %v1750
    %1784 = vmatprep.subr.bf16.mxu0 %v1753
    %1785 = vmatpush1.bf16.msra.mxu0 %v1752
    %1786 = vmatprep.subr.bf16.mxu0 %v1755
    %1787 = vmatpush1.bf16.msra.mxu0 %v1754
    %1788 = vmatprep.subr.bf16.mxu0 %v1757
    %1789 = vmatpush1.bf16.msra.mxu0 %v1756
    %1790 = vmatprep.subr.bf16.mxu0 0
    %1791 = vmatpush1.bf16.msra.mxu0 0
    %1792 = vmatprep.subr.bf16.mxu0 0
    %1793 = vmatpush1.bf16.msra.mxu0 0
    %1794 = vmatprep.subr.bf16.mxu0 0
    %1795 = vmatpush1.bf16.msra.mxu0 0
    %1796 = vmatprep.subr.bf16.mxu0 0
    %1797 = vmatpush1.bf16.msra.mxu0 0
    %1798 = vmatprep.subr.bf16.mxu0 0
    %1799 = vmatpush1.bf16.msra.mxu0 0
    %1800 = vmatprep.subr.bf16.mxu0 0
    %1801 = vmatpush1.bf16.msra.mxu0 0
    %1802 = vmatprep.subr.bf16.mxu0 0
    %1803 = vmatpush1.bf16.msra.mxu0 0
    %1804 = vmatprep.subr.bf16.mxu0 0
    %1805 = vmatpush1.bf16.msra.mxu0 0
    %1806 = vmatprep.mubr.bf16.mxu0 0
    %1807 = vmatmul.mubr.bf16.gmra.mrb[0].mxu0 %v1623
    %v1808 = vpop.f32.mrb[0].mxu0
    %v1809 = vadd.f32 0.0, %v1808
    %v1810 = vpop.f32.mrb[0].mxu0
    %v1811 = vadd.f32 0.0, %v1810
    %v1812 = vpop.f32.mrb[0].mxu0
    %v1813 = vadd.f32 0.0, %v1812
    %v1814 = vpop.f32.mrb[0].mxu0
    %v1815 = vadd.f32 0.0, %v1814
    %1816 = vdwg.mxu0
    %v1817 = vadd.f32 %v1615, %v1809
    %v1818 = vadd.f32 %v1616, %v1811
    %v1819 = vadd.f32 %v1617, %v1813
    %v1820 = vadd.f32 %v1618, %v1815
    %v1823 = vunpack.c.l.b16 %v1692
    %v1824 = vunpack.c.l.b16 %v1693
    %v1825 = vpack.c.b16 %v1824, %v1823
    %1827 = vmatprep.subr.bf16.mxu0 %v1743
    %1828 = vmatpush1.bf16.msra.mxu0 %v1742
    %1829 = vmatprep.subr.bf16.mxu0 %v1745
    %1830 = vmatpush1.bf16.msra.mxu0 %v1744
    %1831 = vmatprep.subr.bf16.mxu0 %v1747
    %1832 = vmatpush1.bf16.msra.mxu0 %v1746
    %1833 = vmatprep.subr.bf16.mxu0 %v1749
    %1834 = vmatpush1.bf16.msra.mxu0 %v1748
    %1835 = vmatprep.subr.bf16.mxu0 %v1751
    %1836 = vmatpush1.bf16.msra.mxu0 %v1750
    %1837 = vmatprep.subr.bf16.mxu0 %v1753
    %1838 = vmatpush1.bf16.msra.mxu0 %v1752
    %1839 = vmatprep.subr.bf16.mxu0 %v1755
    %1840 = vmatpush1.bf16.msra.mxu0 %v1754
    %1841 = vmatprep.subr.bf16.mxu0 %v1757
    %1842 = vmatpush1.bf16.msra.mxu0 %v1756
    %1843 = vmatprep.subr.bf16.mxu0 0
    %1844 = vmatpush1.bf16.msra.mxu0 0
    %1845 = vmatprep.subr.bf16.mxu0 0
    %1846 = vmatpush1.bf16.msra.mxu0 0
    %1847 = vmatprep.subr.bf16.mxu0 0
    %1848 = vmatpush1.bf16.msra.mxu0 0
    %1849 = vmatprep.subr.bf16.mxu0 0
    %1850 = vmatpush1.bf16.msra.mxu0 0
    %1851 = vmatprep.subr.bf16.mxu0 0
    %1852 = vmatpush1.bf16.msra.mxu0 0
    %1853 = vmatprep.subr.bf16.mxu0 0
    %1854 = vmatpush1.bf16.msra.mxu0 0
    %1855 = vmatprep.subr.bf16.mxu0 0
    %1856 = vmatpush1.bf16.msra.mxu0 0
    %1857 = vmatprep.subr.bf16.mxu0 0
    %1858 = vmatpush1.bf16.msra.mxu0 0
    %1859 = vmatprep.mubr.bf16.mxu0 0
    %1860 = vmatmul.mubr.bf16.gmra.mrb[0].mxu0 %v1825
    %v1861 = vpop.f32.mrb[0].mxu0
    %v1862 = vadd.f32 0.0, %v1861
    %v1863 = vpop.f32.mrb[0].mxu0
    %v1864 = vadd.f32 0.0, %v1863
    %v1865 = vpop.f32.mrb[0].mxu0
    %v1866 = vadd.f32 0.0, %v1865
    %v1867 = vpop.f32.mrb[0].mxu0
    %v1868 = vadd.f32 0.0, %v1867
    %1869 = vdwg.mxu0
    %v1870 = vadd.f32 %v1668, %v1862
    %v1871 = vadd.f32 %v1669, %v1864
    %v1872 = vadd.f32 %v1670, %v1866
    %v1873 = vadd.f32 %v1671, %v1868
    %s1874 = scalar_lea.vmem %s1, 512
    %v1875 = vld [vmem:[%s1874] sm:$0xff]
    %v1876 = vld [vmem:[%s1874 + $0x8] sm:$0xff]
    %v1877 = vld [vmem:[%s1874 + $0x10] sm:$0xff]
    %v1878 = vld [vmem:[%s1874 + $0x18] sm:$0xff]
    %v1879 = vld [vmem:[%s1874 + $0x20] sm:$0xff]
    %v1880 = vld [vmem:[%s1874 + $0x28] sm:$0xff]
    %v1881 = vld [vmem:[%s1874 + $0x30] sm:$0xff]
    %v1882 = vld [vmem:[%s1874 + $0x38] sm:$0xff]
    %v1883 = vld [vmem:[%s1874 + $0x40] sm:$0xff]
    %v1884 = vld [vmem:[%s1874 + $0x48] sm:$0xff]
    %v1885 = vld [vmem:[%s1874 + $0x50] sm:$0xff]
    %v1886 = vld [vmem:[%s1874 + $0x58] sm:$0xff]
    %v1887 = vld [vmem:[%s1874 + $0x60] sm:$0xff]
    %v1888 = vld [vmem:[%s1874 + $0x68] sm:$0xff]
    %v1889 = vld [vmem:[%s1874 + $0x70] sm:$0xff]
    %v1890 = vld [vmem:[%s1874 + $0x78] sm:$0xff]
    %s1891 = sadd.s32 %s1115, 84
    %s1892 = smul.addr %s1891, 4
    %s1893 = scalar_lea.vmem %s0, %s1892
    %v1894 = vld [vmem:[%s1893] sm:$0xf]
    %v1895 = vld [vmem:[%s1893 + $0x4] sm:$0xf]
    %v1912 = vunpack.c.l.b16 %v1875
    %v1913 = vunpack.c.h.b16 %v1875
    %v1914 = vunpack.c.l.b16 %v1876
    %v1915 = vunpack.c.h.b16 %v1876
    %v1916 = vunpack.c.l.b16 %v1877
    %v1917 = vunpack.c.h.b16 %v1877
    %v1918 = vunpack.c.l.b16 %v1878
    %v1919 = vunpack.c.h.b16 %v1878
    %v1920 = vunpack.c.l.b16 %v1879
    %v1921 = vunpack.c.h.b16 %v1879
    %v1922 = vunpack.c.l.b16 %v1880
    %v1923 = vunpack.c.h.b16 %v1880
    %v1924 = vunpack.c.l.b16 %v1881
    %v1925 = vunpack.c.h.b16 %v1881
    %v1926 = vunpack.c.l.b16 %v1882
    %v1927 = vunpack.c.h.b16 %v1882
    %v1928 = vunpack.c.l.b16 %v1883
    %v1929 = vunpack.c.h.b16 %v1883
    %v1930 = vunpack.c.l.b16 %v1884
    %v1931 = vunpack.c.h.b16 %v1884
    %v1932 = vunpack.c.l.b16 %v1885
    %v1933 = vunpack.c.h.b16 %v1885
    %v1934 = vunpack.c.l.b16 %v1886
    %v1935 = vunpack.c.h.b16 %v1886
    %v1936 = vunpack.c.l.b16 %v1887
    %v1937 = vunpack.c.h.b16 %v1887
    %v1938 = vunpack.c.l.b16 %v1888
    %v1939 = vunpack.c.h.b16 %v1888
    %v1940 = vunpack.c.l.b16 %v1889
    %v1941 = vunpack.c.h.b16 %v1889
    %v1942 = vunpack.c.l.b16 %v1890
    %v1943 = vunpack.c.h.b16 %v1890
    %v1944 = vpack.c.b16 %v1914, %v1912
    %v1945 = vpack.c.b16 %v1915, %v1913
    %v1946 = vpack.c.b16 %v1918, %v1916
    %v1947 = vpack.c.b16 %v1919, %v1917
    %v1948 = vpack.c.b16 %v1922, %v1920
    %v1949 = vpack.c.b16 %v1923, %v1921
    %v1950 = vpack.c.b16 %v1926, %v1924
    %v1951 = vpack.c.b16 %v1927, %v1925
    %v1952 = vpack.c.b16 %v1930, %v1928
    %v1953 = vpack.c.b16 %v1931, %v1929
    %v1954 = vpack.c.b16 %v1934, %v1932
    %v1955 = vpack.c.b16 %v1935, %v1933
    %v1956 = vpack.c.b16 %v1938, %v1936
    %v1957 = vpack.c.b16 %v1939, %v1937
    %v1958 = vpack.c.b16 %v1942, %v1940
    %v1959 = vpack.c.b16 %v1943, %v1941
    %1976 = vmatprep.subr.bf16.mxu0 %v1945
    %1977 = vmatpush1.bf16.msra.mxu0 %v1944
    %1978 = vmatprep.subr.bf16.mxu0 %v1947
    %1979 = vmatpush1.bf16.msra.mxu0 %v1946
    %1980 = vmatprep.subr.bf16.mxu0 %v1949
    %1981 = vmatpush1.bf16.msra.mxu0 %v1948
    %1982 = vmatprep.subr.bf16.mxu0 %v1951
    %1983 = vmatpush1.bf16.msra.mxu0 %v1950
    %1984 = vmatprep.subr.bf16.mxu0 %v1953
    %1985 = vmatpush1.bf16.msra.mxu0 %v1952
    %1986 = vmatprep.subr.bf16.mxu0 %v1955
    %1987 = vmatpush1.bf16.msra.mxu0 %v1954
    %1988 = vmatprep.subr.bf16.mxu0 %v1957
    %1989 = vmatpush1.bf16.msra.mxu0 %v1956
    %1990 = vmatprep.subr.bf16.mxu0 %v1959
    %1991 = vmatpush1.bf16.msra.mxu0 %v1958
    %1992 = vmatprep.subr.bf16.mxu0 0
    %1993 = vmatpush1.bf16.msra.mxu0 0
    %1994 = vmatprep.subr.bf16.mxu0 0
    %1995 = vmatpush1.bf16.msra.mxu0 0
    %1996 = vmatprep.subr.bf16.mxu0 0
    %1997 = vmatpush1.bf16.msra.mxu0 0
    %1998 = vmatprep.subr.bf16.mxu0 0
    %1999 = vmatpush1.bf16.msra.mxu0 0
    %2000 = vmatprep.subr.bf16.mxu0 0
    %2001 = vmatpush1.bf16.msra.mxu0 0
    %2002 = vmatprep.subr.bf16.mxu0 0
    %2003 = vmatpush1.bf16.msra.mxu0 0
    %2004 = vmatprep.subr.bf16.mxu0 0
    %2005 = vmatpush1.bf16.msra.mxu0 0
    %2006 = vmatprep.subr.bf16.mxu0 0
    %2007 = vmatpush1.bf16.msra.mxu0 0
    %2008 = vmatprep.mubr.bf16.mxu0 0
    %2009 = vmatmul.mubr.bf16.gmra.mrb[0].mxu0 %v1825
    %v2010 = vpop.f32.mrb[0].mxu0
    %v2011 = vadd.f32 0.0, %v2010
    %v2012 = vpop.f32.mrb[0].mxu0
    %v2013 = vadd.f32 0.0, %v2012
    %v2014 = vpop.f32.mrb[0].mxu0
    %v2015 = vadd.f32 0.0, %v2014
    %v2016 = vpop.f32.mrb[0].mxu0
    %v2017 = vadd.f32 0.0, %v2016
    %2018 = vdwg.mxu0
    %v2019 = vadd.f32 %v1817, %v2011
    %v2020 = vadd.f32 %v1818, %v2013
    %v2021 = vadd.f32 %v1819, %v2015
    %v2022 = vadd.f32 %v1820, %v2017
    %v2025 = vunpack.c.l.b16 %v1894
    %v2026 = vunpack.c.l.b16 %v1895
    %v2027 = vpack.c.b16 %v2026, %v2025
    %2029 = vmatprep.subr.bf16.mxu0 %v1945
    %2030 = vmatpush1.bf16.msra.mxu0 %v1944
    %2031 = vmatprep.subr.bf16.mxu0 %v1947
    %2032 = vmatpush1.bf16.msra.mxu0 %v1946
    %2033 = vmatprep.subr.bf16.mxu0 %v1949
    %2034 = vmatpush1.bf16.msra.mxu0 %v1948
    %2035 = vmatprep.subr.bf16.mxu0 %v1951
    %2036 = vmatpush1.bf16.msra.mxu0 %v1950
    %2037 = vmatprep.subr.bf16.mxu0 %v1953
    %2038 = vmatpush1.bf16.msra.mxu0 %v1952
    %2039 = vmatprep.subr.bf16.mxu0 %v1955
    %2040 = vmatpush1.bf16.msra.mxu0 %v1954
    %2041 = vmatprep.subr.bf16.mxu0 %v1957
    %2042 = vmatpush1.bf16.msra.mxu0 %v1956
    %2043 = vmatprep.subr.bf16.mxu0 %v1959
    %2044 = vmatpush1.bf16.msra.mxu0 %v1958
    %2045 = vmatprep.subr.bf16.mxu0 0
    %2046 = vmatpush1.bf16.msra.mxu0 0
    %2047 = vmatprep.subr.bf16.mxu0 0
    %2048 = vmatpush1.bf16.msra.mxu0 0
    %2049 = vmatprep.subr.bf16.mxu0 0
    %2050 = vmatpush1.bf16.msra.mxu0 0
    %2051 = vmatprep.subr.bf16.mxu0 0
    %2052 = vmatpush1.bf16.msra.mxu0 0
    %2053 = vmatprep.subr.bf16.mxu0 0
    %2054 = vmatpush1.bf16.msra.mxu0 0
    %2055 = vmatprep.subr.bf16.mxu0 0
    %2056 = vmatpush1.bf16.msra.mxu0 0
    %2057 = vmatprep.subr.bf16.mxu0 0
    %2058 = vmatpush1.bf16.msra.mxu0 0
    %2059 = vmatprep.subr.bf16.mxu0 0
    %2060 = vmatpush1.bf16.msra.mxu0 0
    %2061 = vmatprep.mubr.bf16.mxu0 0
    %2062 = vmatmul.mubr.bf16.gmra.mrb[0].mxu0 %v2027
    %v2063 = vpop.f32.mrb[0].mxu0
    %v2064 = vadd.f32 0.0, %v2063
    %v2065 = vpop.f32.mrb[0].mxu0
    %v2066 = vadd.f32 0.0, %v2065
    %v2067 = vpop.f32.mrb[0].mxu0
    %v2068 = vadd.f32 0.0, %v2067
    %v2069 = vpop.f32.mrb[0].mxu0
    %v2070 = vadd.f32 0.0, %v2069
    %2071 = vdwg.mxu0
    %v2072 = vadd.f32 %v1870, %v2064
    %v2073 = vadd.f32 %v1871, %v2066
    %v2074 = vadd.f32 %v1872, %v2068
    %v2075 = vadd.f32 %v1873, %v2070
    %v2076 = vmax.f32 %v2019, %v2072
    %v2077 = vmax.f32 %v2020, %v2073
    %v2078 = vmax.f32 %v2021, %v2074
    %v2079 = vmax.f32 %v2022, %v2075
    %v2080 = vmax.f32 %v2076, %v2077
    %v2081 = vmax.f32 %v2078, %v2079
    %v2083 = vlaneseq
    %v2084 = vshrl.u32 %v2083, 7
    %v2085 = vsub.s32 0, %v2084
    %v2086 = vrot.slane %v27, %v2085
    %v2088 = vadd.f32 %v2080, %v2086
    %v2089 = vadd.f32 %v2081, %v2086
    %v2090 = vmax.f32 %v2088, 0.0
    %v2091 = vmax.f32 %v2089, 0.0
    %v2092 = vpack.c.bf16 %v2091, %v2090
    %s2093 = sshra.s32 %s1069, 4
    %s2094 = sand.u32 %s1069, 15
    %s2095 = sadd.s32 %s2093, 7
    %s2096 = smul.addr %s2095, 8
    %s2097 = scalar_lea.vmem [#allocation2], %s2096
    %2098 = vst [vmem:[%s2097] sm:$0xff] %v2092
  $region41: #{net_bulk_forward.1} parent=0 // loop_footer
    %s1068 = sadd.s32 1, %s1064
  $region42: #{net_bulk_forward.1} parent=0 // loop_footer_branch
    %1063 = sbr.rel target = $region38
  $region43: #{net_bulk_forward.1} parent=0 // loop_exit
    _
  loop: start=0, step=1, limit=5
  $region44: #{net_bulk_forward.1} parent=0 // loop_pre_header
    _
  $region45: #{net_bulk_forward.1} parent=0 // loop_header
    %s2100 = sphi 0, %s2104
    %p2101 = scmp.ge.s32.totalorder %s2100, 5
  $region46: #{net_bulk_forward.1} parent=0 // loop_header_branch
    %2103 = sbr.rel (%p2101) target = $region50
  $region47: #{net_bulk_forward.1} parent=0 // loop_body
    %s2105 = smul.u32 %s2100, 16
    %v2106 = vld [vmem:[%s3] sm:$0xff]
    %v2107 = vld [vmem:[%s3 + $0x8] sm:$0xff]
    %v2108 = vld [vmem:[%s3 + $0x10] sm:$0xff]
    %v2109 = vld [vmem:[%s3 + $0x18] sm:$0xff]
    %v2110 = vld [vmem:[%s3 + $0x20] sm:$0xff]
    %v2111 = vld [vmem:[%s3 + $0x28] sm:$0xff]
    %v2112 = vld [vmem:[%s3 + $0x30] sm:$0xff]
    %v2113 = vld [vmem:[%s3 + $0x38] sm:$0xff]
    %v2114 = vld [vmem:[%s3 + $0x40] sm:$0xff]
    %v2115 = vld [vmem:[%s3 + $0x48] sm:$0xff]
    %v2116 = vld [vmem:[%s3 + $0x50] sm:$0xff]
    %v2117 = vld [vmem:[%s3 + $0x58] sm:$0xff]
    %v2118 = vld [vmem:[%s3 + $0x60] sm:$0xff]
    %v2119 = vld [vmem:[%s3 + $0x68] sm:$0xff]
    %v2120 = vld [vmem:[%s3 + $0x70] sm:$0xff]
    %v2121 = vld [vmem:[%s3 + $0x78] sm:$0xff]
    %s2122 = sshra.s32 %s2105, 4
    %s2123 = sand.u32 %s2105, 15
    %s2124 = smul.addr %s2122, 8
    %s2125 = scalar_lea.vmem [#allocation2], %s2124
    %v2126 = vld [vmem:[%s2125] sm:$0xff]
    %s2127 = sadd.s32 %s2122, 7
    %s2128 = smul.addr %s2127, 8
    %s2129 = scalar_lea.vmem [#allocation2], %s2128
    %v2130 = vld [vmem:[%s2129] sm:$0xff]
    %s2131 = scalar_lea.vmem %s3, 128
    %v2132 = vld [vmem:[%s2131] sm:$0xff]
    %v2133 = vld [vmem:[%s2131 + $0x8] sm:$0xff]
    %v2134 = vld [vmem:[%s2131 + $0x10] sm:$0xff]
    %v2135 = vld [vmem:[%s2131 + $0x18] sm:$0xff]
    %v2136 = vld [vmem:[%s2131 + $0x20] sm:$0xff]
    %v2137 = vld [vmem:[%s2131 + $0x28] sm:$0xff]
    %v2138 = vld [vmem:[%s2131 + $0x30] sm:$0xff]
    %v2139 = vld [vmem:[%s2131 + $0x38] sm:$0xff]
    %v2140 = vld [vmem:[%s2131 + $0x40] sm:$0xff]
    %v2141 = vld [vmem:[%s2131 + $0x48] sm:$0xff]
    %v2142 = vld [vmem:[%s2131 + $0x50] sm:$0xff]
    %v2143 = vld [vmem:[%s2131 + $0x58] sm:$0xff]
    %v2144 = vld [vmem:[%s2131 + $0x60] sm:$0xff]
    %v2145 = vld [vmem:[%s2131 + $0x68] sm:$0xff]
    %v2146 = vld [vmem:[%s2131 + $0x70] sm:$0xff]
    %v2147 = vld [vmem:[%s2131 + $0x78] sm:$0xff]
    %v2164 = vunpack.c.l.b16 %v2132
    %v2165 = vunpack.c.h.b16 %v2132
    %v2166 = vunpack.c.l.b16 %v2133
    %v2167 = vunpack.c.h.b16 %v2133
    %v2168 = vunpack.c.l.b16 %v2134
    %v2169 = vunpack.c.h.b16 %v2134
    %v2170 = vunpack.c.l.b16 %v2135
    %v2171 = vunpack.c.h.b16 %v2135
    %v2172 = vunpack.c.l.b16 %v2136
    %v2173 = vunpack.c.h.b16 %v2136
    %v2174 = vunpack.c.l.b16 %v2137
    %v2175 = vunpack.c.h.b16 %v2137
    %v2176 = vunpack.c.l.b16 %v2138
    %v2177 = vunpack.c.h.b16 %v2138
    %v2178 = vunpack.c.l.b16 %v2139
    %v2179 = vunpack.c.h.b16 %v2139
    %v2180 = vunpack.c.l.b16 %v2140
    %v2181 = vunpack.c.h.b16 %v2140
    %v2182 = vunpack.c.l.b16 %v2141
    %v2183 = vunpack.c.h.b16 %v2141
    %v2184 = vunpack.c.l.b16 %v2142
    %v2185 = vunpack.c.h.b16 %v2142
    %v2186 = vunpack.c.l.b16 %v2143
    %v2187 = vunpack.c.h.b16 %v2143
    %v2188 = vunpack.c.l.b16 %v2144
    %v2189 = vunpack.c.h.b16 %v2144
    %v2190 = vunpack.c.l.b16 %v2145
    %v2191 = vunpack.c.h.b16 %v2145
    %v2192 = vunpack.c.l.b16 %v2146
    %v2193 = vunpack.c.h.b16 %v2146
    %v2194 = vunpack.c.l.b16 %v2147
    %v2195 = vunpack.c.h.b16 %v2147
    %v2196 = vpack.c.b16 %v2166, %v2164
    %v2197 = vpack.c.b16 %v2167, %v2165
    %v2198 = vpack.c.b16 %v2170, %v2168
    %v2199 = vpack.c.b16 %v2171, %v2169
    %v2200 = vpack.c.b16 %v2174, %v2172
    %v2201 = vpack.c.b16 %v2175, %v2173
    %v2202 = vpack.c.b16 %v2178, %v2176
    %v2203 = vpack.c.b16 %v2179, %v2177
    %v2204 = vpack.c.b16 %v2182, %v2180
    %v2205 = vpack.c.b16 %v2183, %v2181
    %v2206 = vpack.c.b16 %v2186, %v2184
    %v2207 = vpack.c.b16 %v2187, %v2185
    %v2208 = vpack.c.b16 %v2190, %v2188
    %v2209 = vpack.c.b16 %v2191, %v2189
    %v2210 = vpack.c.b16 %v2194, %v2192
    %v2211 = vpack.c.b16 %v2195, %v2193
    %2228 = vmatprep.subr.bf16.mxu0 %v2197
    %2229 = vmatpush1.bf16.msra.mxu0 %v2196
    %2230 = vmatprep.subr.bf16.mxu0 %v2199
    %2231 = vmatpush1.bf16.msra.mxu0 %v2198
    %2232 = vmatprep.subr.bf16.mxu0 %v2201
    %2233 = vmatpush1.bf16.msra.mxu0 %v2200
    %2234 = vmatprep.subr.bf16.mxu0 %v2203
    %2235 = vmatpush1.bf16.msra.mxu0 %v2202
    %2236 = vmatprep.subr.bf16.mxu0 %v2205
    %2237 = vmatpush1.bf16.msra.mxu0 %v2204
    %2238 = vmatprep.subr.bf16.mxu0 %v2207
    %2239 = vmatpush1.bf16.msra.mxu0 %v2206
    %2240 = vmatprep.subr.bf16.mxu0 %v2209
    %2241 = vmatpush1.bf16.msra.mxu0 %v2208
    %2242 = vmatprep.subr.bf16.mxu0 %v2211
    %2243 = vmatpush1.bf16.msra.mxu0 %v2210
    %2244 = vmatprep.subr.bf16.mxu0 0
    %2245 = vmatpush1.bf16.msra.mxu0 0
    %2246 = vmatprep.subr.bf16.mxu0 0
    %2247 = vmatpush1.bf16.msra.mxu0 0
    %2248 = vmatprep.subr.bf16.mxu0 0
    %2249 = vmatpush1.bf16.msra.mxu0 0
    %2250 = vmatprep.subr.bf16.mxu0 0
    %2251 = vmatpush1.bf16.msra.mxu0 0
    %2252 = vmatprep.subr.bf16.mxu0 0
    %2253 = vmatpush1.bf16.msra.mxu0 0
    %2254 = vmatprep.subr.bf16.mxu0 0
    %2255 = vmatpush1.bf16.msra.mxu0 0
    %2256 = vmatprep.subr.bf16.mxu0 0
    %2257 = vmatpush1.bf16.msra.mxu0 0
    %2258 = vmatprep.subr.bf16.mxu0 0
    %2259 = vmatpush1.bf16.msra.mxu0 0
    %2260 = vmatprep.mubr.bf16.mxu0 0
    %2261 = vmatmul.mubr.bf16.gmra.mrb[0].mxu0 %v2130
    %v2262 = vpop.f32.mrb[0].mxu0
    %v2263 = vadd.f32 0.0, %v2262
    %v2264 = vpop.f32.mrb[0].mxu0
    %v2265 = vadd.f32 0.0, %v2264
    %v2266 = vpop.f32.mrb[0].mxu0
    %v2267 = vadd.f32 0.0, %v2266
    %v2268 = vpop.f32.mrb[0].mxu0
    %v2269 = vadd.f32 0.0, %v2268
    %2270 = vdwg.mxu0
    %v2287 = vunpack.c.l.b16 %v2106
    %v2288 = vunpack.c.h.b16 %v2106
    %v2289 = vunpack.c.l.b16 %v2107
    %v2290 = vunpack.c.h.b16 %v2107
    %v2291 = vunpack.c.l.b16 %v2108
    %v2292 = vunpack.c.h.b16 %v2108
    %v2293 = vunpack.c.l.b16 %v2109
    %v2294 = vunpack.c.h.b16 %v2109
    %v2295 = vunpack.c.l.b16 %v2110
    %v2296 = vunpack.c.h.b16 %v2110
    %v2297 = vunpack.c.l.b16 %v2111
    %v2298 = vunpack.c.h.b16 %v2111
    %v2299 = vunpack.c.l.b16 %v2112
    %v2300 = vunpack.c.h.b16 %v2112
    %v2301 = vunpack.c.l.b16 %v2113
    %v2302 = vunpack.c.h.b16 %v2113
    %v2303 = vunpack.c.l.b16 %v2114
    %v2304 = vunpack.c.h.b16 %v2114
    %v2305 = vunpack.c.l.b16 %v2115
    %v2306 = vunpack.c.h.b16 %v2115
    %v2307 = vunpack.c.l.b16 %v2116
    %v2308 = vunpack.c.h.b16 %v2116
    %v2309 = vunpack.c.l.b16 %v2117
    %v2310 = vunpack.c.h.b16 %v2117
    %v2311 = vunpack.c.l.b16 %v2118
    %v2312 = vunpack.c.h.b16 %v2118
    %v2313 = vunpack.c.l.b16 %v2119
    %v2314 = vunpack.c.h.b16 %v2119
    %v2315 = vunpack.c.l.b16 %v2120
    %v2316 = vunpack.c.h.b16 %v2120
    %v2317 = vunpack.c.l.b16 %v2121
    %v2318 = vunpack.c.h.b16 %v2121
    %v2319 = vpack.c.b16 %v2289, %v2287
    %v2320 = vpack.c.b16 %v2290, %v2288
    %v2321 = vpack.c.b16 %v2293, %v2291
    %v2322 = vpack.c.b16 %v2294, %v2292
    %v2323 = vpack.c.b16 %v2297, %v2295
    %v2324 = vpack.c.b16 %v2298, %v2296
    %v2325 = vpack.c.b16 %v2301, %v2299
    %v2326 = vpack.c.b16 %v2302, %v2300
    %v2327 = vpack.c.b16 %v2305, %v2303
    %v2328 = vpack.c.b16 %v2306, %v2304
    %v2329 = vpack.c.b16 %v2309, %v2307
    %v2330 = vpack.c.b16 %v2310, %v2308
    %v2331 = vpack.c.b16 %v2313, %v2311
    %v2332 = vpack.c.b16 %v2314, %v2312
    %v2333 = vpack.c.b16 %v2317, %v2315
    %v2334 = vpack.c.b16 %v2318, %v2316
    %2351 = vmatprep.subr.bf16.mxu0 %v2320
    %2352 = vmatpush1.bf16.msra.mxu0 %v2319
    %2353 = vmatprep.subr.bf16.mxu0 %v2322
    %2354 = vmatpush1.bf16.msra.mxu0 %v2321
    %2355 = vmatprep.subr.bf16.mxu0 %v2324
    %2356 = vmatpush1.bf16.msra.mxu0 %v2323
    %2357 = vmatprep.subr.bf16.mxu0 %v2326
    %2358 = vmatpush1.bf16.msra.mxu0 %v2325
    %2359 = vmatprep.subr.bf16.mxu0 %v2328
    %2360 = vmatpush1.bf16.msra.mxu0 %v2327
    %2361 = vmatprep.subr.bf16.mxu0 %v2330
    %2362 = vmatpush1.bf16.msra.mxu0 %v2329
    %2363 = vmatprep.subr.bf16.mxu0 %v2332
    %2364 = vmatpush1.bf16.msra.mxu0 %v2331
    %2365 = vmatprep.subr.bf16.mxu0 %v2334
    %2366 = vmatpush1.bf16.msra.mxu0 %v2333
    %2367 = vmatprep.subr.bf16.mxu0 0
    %2368 = vmatpush1.bf16.msra.mxu0 0
    %2369 = vmatprep.subr.bf16.mxu0 0
    %2370 = vmatpush1.bf16.msra.mxu0 0
    %2371 = vmatprep.subr.bf16.mxu0 0
    %2372 = vmatpush1.bf16.msra.mxu0 0
    %2373 = vmatprep.subr.bf16.mxu0 0
    %2374 = vmatpush1.bf16.msra.mxu0 0
    %2375 = vmatprep.subr.bf16.mxu0 0
    %2376 = vmatpush1.bf16.msra.mxu0 0
    %2377 = vmatprep.subr.bf16.mxu0 0
    %2378 = vmatpush1.bf16.msra.mxu0 0
    %2379 = vmatprep.subr.bf16.mxu0 0
    %2380 = vmatpush1.bf16.msra.mxu0 0
    %2381 = vmatprep.subr.bf16.mxu0 0
    %2382 = vmatpush1.bf16.msra.mxu0 0
    %2383 = vmatprep.mubr.bf16.mxu0 0
    %2384 = vmatmul.mubr.bf16.gmra.mrb[0].mxu0 %v2126
    %v2385 = vpop.f32.mrb[0].mxu0
    %v2386 = vadd.f32 %v2263, %v2385
    %v2387 = vpop.f32.mrb[0].mxu0
    %v2388 = vadd.f32 %v2265, %v2387
    %v2389 = vpop.f32.mrb[0].mxu0
    %v2390 = vadd.f32 %v2267, %v2389
    %v2391 = vpop.f32.mrb[0].mxu0
    %v2392 = vadd.f32 %v2269, %v2391
    %2393 = vdwg.mxu0
    %s2394 = sadd.s32 %s2105, 16
    %s2395 = sshra.s32 %s2394, 4
    %s2396 = sand.u32 %s2394, 15
    %s2397 = smul.addr %s2395, 8
    %s2398 = scalar_lea.vmem [#allocation2], %s2397
    %v2399 = vld [vmem:[%s2398] sm:$0xff]
    %2400 = vmatprep.subr.bf16.mxu0 %v2197
    %2401 = vmatpush1.bf16.msra.mxu0 %v2196
    %2402 = vmatprep.subr.bf16.mxu0 %v2199
    %2403 = vmatpush1.bf16.msra.mxu0 %v2198
    %2404 = vmatprep.subr.bf16.mxu0 %v2201
    %2405 = vmatpush1.bf16.msra.mxu0 %v2200
    %2406 = vmatprep.subr.bf16.mxu0 %v2203
    %2407 = vmatpush1.bf16.msra.mxu0 %v2202
    %2408 = vmatprep.subr.bf16.mxu0 %v2205
    %2409 = vmatpush1.bf16.msra.mxu0 %v2204
    %2410 = vmatprep.subr.bf16.mxu0 %v2207
    %2411 = vmatpush1.bf16.msra.mxu0 %v2206
    %2412 = vmatprep.subr.bf16.mxu0 %v2209
    %2413 = vmatpush1.bf16.msra.mxu0 %v2208
    %2414 = vmatprep.subr.bf16.mxu0 %v2211
    %2415 = vmatpush1.bf16.msra.mxu0 %v2210
    %2416 = vmatprep.subr.bf16.mxu0 0
    %2417 = vmatpush1.bf16.msra.mxu0 0
    %2418 = vmatprep.subr.bf16.mxu0 0
    %2419 = vmatpush1.bf16.msra.mxu0 0
    %2420 = vmatprep.subr.bf16.mxu0 0
    %2421 = vmatpush1.bf16.msra.mxu0 0
    %2422 = vmatprep.subr.bf16.mxu0 0
    %2423 = vmatpush1.bf16.msra.mxu0 0
    %2424 = vmatprep.subr.bf16.mxu0 0
    %2425 = vmatpush1.bf16.msra.mxu0 0
    %2426 = vmatprep.subr.bf16.mxu0 0
    %2427 = vmatpush1.bf16.msra.mxu0 0
    %2428 = vmatprep.subr.bf16.mxu0 0
    %2429 = vmatpush1.bf16.msra.mxu0 0
    %2430 = vmatprep.subr.bf16.mxu0 0
    %2431 = vmatpush1.bf16.msra.mxu0 0
    %2432 = vmatprep.mubr.bf16.mxu0 0
    %2433 = vmatmul.mubr.bf16.gmra.mrb[0].mxu0 %v2399
    %v2434 = vpop.f32.mrb[0].mxu0
    %v2435 = vadd.f32 0.0, %v2434
    %v2436 = vpop.f32.mrb[0].mxu0
    %v2437 = vadd.f32 0.0, %v2436
    %v2438 = vpop.f32.mrb[0].mxu0
    %v2439 = vadd.f32 0.0, %v2438
    %v2440 = vpop.f32.mrb[0].mxu0
    %v2441 = vadd.f32 0.0, %v2440
    %2442 = vdwg.mxu0
    %2443 = vmatprep.subr.bf16.mxu0 %v2320
    %2444 = vmatpush1.bf16.msra.mxu0 %v2319
    %2445 = vmatprep.subr.bf16.mxu0 %v2322
    %2446 = vmatpush1.bf16.msra.mxu0 %v2321
    %2447 = vmatprep.subr.bf16.mxu0 %v2324
    %2448 = vmatpush1.bf16.msra.mxu0 %v2323
    %2449 = vmatprep.subr.bf16.mxu0 %v2326
    %2450 = vmatpush1.bf16.msra.mxu0 %v2325
    %2451 = vmatprep.subr.bf16.mxu0 %v2328
    %2452 = vmatpush1.bf16.msra.mxu0 %v2327
    %2453 = vmatprep.subr.bf16.mxu0 %v2330
    %2454 = vmatpush1.bf16.msra.mxu0 %v2329
    %2455 = vmatprep.subr.bf16.mxu0 %v2332
    %2456 = vmatpush1.bf16.msra.mxu0 %v2331
    %2457 = vmatprep.subr.bf16.mxu0 %v2334
    %2458 = vmatpush1.bf16.msra.mxu0 %v2333
    %2459 = vmatprep.subr.bf16.mxu0 0
    %2460 = vmatpush1.bf16.msra.mxu0 0
    %2461 = vmatprep.subr.bf16.mxu0 0
    %2462 = vmatpush1.bf16.msra.mxu0 0
    %2463 = vmatprep.subr.bf16.mxu0 0
    %2464 = vmatpush1.bf16.msra.mxu0 0
    %2465 = vmatprep.subr.bf16.mxu0 0
    %2466 = vmatpush1.bf16.msra.mxu0 0
    %2467 = vmatprep.subr.bf16.mxu0 0
    %2468 = vmatpush1.bf16.msra.mxu0 0
    %2469 = vmatprep.subr.bf16.mxu0 0
    %2470 = vmatpush1.bf16.msra.mxu0 0
    %2471 = vmatprep.subr.bf16.mxu0 0
    %2472 = vmatpush1.bf16.msra.mxu0 0
    %2473 = vmatprep.subr.bf16.mxu0 0
    %2474 = vmatpush1.bf16.msra.mxu0 0
    %2475 = vmatprep.mubr.bf16.mxu0 0
    %2476 = vmatmul.mubr.bf16.gmra.mrb[0].mxu0 %v2130
    %v2477 = vpop.f32.mrb[0].mxu0
    %v2478 = vadd.f32 %v2435, %v2477
    %v2479 = vpop.f32.mrb[0].mxu0
    %v2480 = vadd.f32 %v2437, %v2479
    %v2481 = vpop.f32.mrb[0].mxu0
    %v2482 = vadd.f32 %v2439, %v2481
    %v2483 = vpop.f32.mrb[0].mxu0
    %v2484 = vadd.f32 %v2441, %v2483
    %2485 = vdwg.mxu0
    %s2486 = scalar_lea.vmem %s3, 256
    %v2487 = vld [vmem:[%s2486] sm:$0xff]
    %v2488 = vld [vmem:[%s2486 + $0x8] sm:$0xff]
    %v2489 = vld [vmem:[%s2486 + $0x10] sm:$0xff]
    %v2490 = vld [vmem:[%s2486 + $0x18] sm:$0xff]
    %v2491 = vld [vmem:[%s2486 + $0x20] sm:$0xff]
    %v2492 = vld [vmem:[%s2486 + $0x28] sm:$0xff]
    %v2493 = vld [vmem:[%s2486 + $0x30] sm:$0xff]
    %v2494 = vld [vmem:[%s2486 + $0x38] sm:$0xff]
    %v2495 = vld [vmem:[%s2486 + $0x40] sm:$0xff]
    %v2496 = vld [vmem:[%s2486 + $0x48] sm:$0xff]
    %v2497 = vld [vmem:[%s2486 + $0x50] sm:$0xff]
    %v2498 = vld [vmem:[%s2486 + $0x58] sm:$0xff]
    %v2499 = vld [vmem:[%s2486 + $0x60] sm:$0xff]
    %v2500 = vld [vmem:[%s2486 + $0x68] sm:$0xff]
    %v2501 = vld [vmem:[%s2486 + $0x70] sm:$0xff]
    %v2502 = vld [vmem:[%s2486 + $0x78] sm:$0xff]
    %v2519 = vunpack.c.l.b16 %v2487
    %v2520 = vunpack.c.h.b16 %v2487
    %v2521 = vunpack.c.l.b16 %v2488
    %v2522 = vunpack.c.h.b16 %v2488
    %v2523 = vunpack.c.l.b16 %v2489
    %v2524 = vunpack.c.h.b16 %v2489
    %v2525 = vunpack.c.l.b16 %v2490
    %v2526 = vunpack.c.h.b16 %v2490
    %v2527 = vunpack.c.l.b16 %v2491
    %v2528 = vunpack.c.h.b16 %v2491
    %v2529 = vunpack.c.l.b16 %v2492
    %v2530 = vunpack.c.h.b16 %v2492
    %v2531 = vunpack.c.l.b16 %v2493
    %v2532 = vunpack.c.h.b16 %v2493
    %v2533 = vunpack.c.l.b16 %v2494
    %v2534 = vunpack.c.h.b16 %v2494
    %v2535 = vunpack.c.l.b16 %v2495
    %v2536 = vunpack.c.h.b16 %v2495
    %v2537 = vunpack.c.l.b16 %v2496
    %v2538 = vunpack.c.h.b16 %v2496
    %v2539 = vunpack.c.l.b16 %v2497
    %v2540 = vunpack.c.h.b16 %v2497
    %v2541 = vunpack.c.l.b16 %v2498
    %v2542 = vunpack.c.h.b16 %v2498
    %v2543 = vunpack.c.l.b16 %v2499
    %v2544 = vunpack.c.h.b16 %v2499
    %v2545 = vunpack.c.l.b16 %v2500
    %v2546 = vunpack.c.h.b16 %v2500
    %v2547 = vunpack.c.l.b16 %v2501
    %v2548 = vunpack.c.h.b16 %v2501
    %v2549 = vunpack.c.l.b16 %v2502
    %v2550 = vunpack.c.h.b16 %v2502
    %v2551 = vpack.c.b16 %v2521, %v2519
    %v2552 = vpack.c.b16 %v2522, %v2520
    %v2553 = vpack.c.b16 %v2525, %v2523
    %v2554 = vpack.c.b16 %v2526, %v2524
    %v2555 = vpack.c.b16 %v2529, %v2527
    %v2556 = vpack.c.b16 %v2530, %v2528
    %v2557 = vpack.c.b16 %v2533, %v2531
    %v2558 = vpack.c.b16 %v2534, %v2532
    %v2559 = vpack.c.b16 %v2537, %v2535
    %v2560 = vpack.c.b16 %v2538, %v2536
    %v2561 = vpack.c.b16 %v2541, %v2539
    %v2562 = vpack.c.b16 %v2542, %v2540
    %v2563 = vpack.c.b16 %v2545, %v2543
    %v2564 = vpack.c.b16 %v2546, %v2544
    %v2565 = vpack.c.b16 %v2549, %v2547
    %v2566 = vpack.c.b16 %v2550, %v2548
    %2583 = vmatprep.subr.bf16.mxu0 %v2552
    %2584 = vmatpush1.bf16.msra.mxu0 %v2551
    %2585 = vmatprep.subr.bf16.mxu0 %v2554
    %2586 = vmatpush1.bf16.msra.mxu0 %v2553
    %2587 = vmatprep.subr.bf16.mxu0 %v2556
    %2588 = vmatpush1.bf16.msra.mxu0 %v2555
    %2589 = vmatprep.subr.bf16.mxu0 %v2558
    %2590 = vmatpush1.bf16.msra.mxu0 %v2557
    %2591 = vmatprep.subr.bf16.mxu0 %v2560
    %2592 = vmatpush1.bf16.msra.mxu0 %v2559
    %2593 = vmatprep.subr.bf16.mxu0 %v2562
    %2594 = vmatpush1.bf16.msra.mxu0 %v2561
    %2595 = vmatprep.subr.bf16.mxu0 %v2564
    %2596 = vmatpush1.bf16.msra.mxu0 %v2563
    %2597 = vmatprep.subr.bf16.mxu0 %v2566
    %2598 = vmatpush1.bf16.msra.mxu0 %v2565
    %2599 = vmatprep.subr.bf16.mxu0 0
    %2600 = vmatpush1.bf16.msra.mxu0 0
    %2601 = vmatprep.subr.bf16.mxu0 0
    %2602 = vmatpush1.bf16.msra.mxu0 0
    %2603 = vmatprep.subr.bf16.mxu0 0
    %2604 = vmatpush1.bf16.msra.mxu0 0
    %2605 = vmatprep.subr.bf16.mxu0 0
    %2606 = vmatpush1.bf16.msra.mxu0 0
    %2607 = vmatprep.subr.bf16.mxu0 0
    %2608 = vmatpush1.bf16.msra.mxu0 0
    %2609 = vmatprep.subr.bf16.mxu0 0
    %2610 = vmatpush1.bf16.msra.mxu0 0
    %2611 = vmatprep.subr.bf16.mxu0 0
    %2612 = vmatpush1.bf16.msra.mxu0 0
    %2613 = vmatprep.subr.bf16.mxu0 0
    %2614 = vmatpush1.bf16.msra.mxu0 0
    %2615 = vmatprep.mubr.bf16.mxu0 0
    %2616 = vmatmul.mubr.bf16.gmra.mrb[0].mxu0 %v2399
    %v2617 = vpop.f32.mrb[0].mxu0
    %v2618 = vadd.f32 0.0, %v2617
    %v2619 = vpop.f32.mrb[0].mxu0
    %v2620 = vadd.f32 0.0, %v2619
    %v2621 = vpop.f32.mrb[0].mxu0
    %v2622 = vadd.f32 0.0, %v2621
    %v2623 = vpop.f32.mrb[0].mxu0
    %v2624 = vadd.f32 0.0, %v2623
    %2625 = vdwg.mxu0
    %v2626 = vadd.f32 %v2386, %v2618
    %v2627 = vadd.f32 %v2388, %v2620
    %v2628 = vadd.f32 %v2390, %v2622
    %v2629 = vadd.f32 %v2392, %v2624
    %s2630 = sadd.s32 %s2395, 7
    %s2631 = smul.addr %s2630, 8
    %s2632 = scalar_lea.vmem [#allocation2], %s2631
    %v2633 = vld [vmem:[%s2632] sm:$0xff]
    %2634 = vmatprep.subr.bf16.mxu0 %v2552
    %2635 = vmatpush1.bf16.msra.mxu0 %v2551
    %2636 = vmatprep.subr.bf16.mxu0 %v2554
    %2637 = vmatpush1.bf16.msra.mxu0 %v2553
    %2638 = vmatprep.subr.bf16.mxu0 %v2556
    %2639 = vmatpush1.bf16.msra.mxu0 %v2555
    %2640 = vmatprep.subr.bf16.mxu0 %v2558
    %2641 = vmatpush1.bf16.msra.mxu0 %v2557
    %2642 = vmatprep.subr.bf16.mxu0 %v2560
    %2643 = vmatpush1.bf16.msra.mxu0 %v2559
    %2644 = vmatprep.subr.bf16.mxu0 %v2562
    %2645 = vmatpush1.bf16.msra.mxu0 %v2561
    %2646 = vmatprep.subr.bf16.mxu0 %v2564
    %2647 = vmatpush1.bf16.msra.mxu0 %v2563
    %2648 = vmatprep.subr.bf16.mxu0 %v2566
    %2649 = vmatpush1.bf16.msra.mxu0 %v2565
    %2650 = vmatprep.subr.bf16.mxu0 0
    %2651 = vmatpush1.bf16.msra.mxu0 0
    %2652 = vmatprep.subr.bf16.mxu0 0
    %2653 = vmatpush1.bf16.msra.mxu0 0
    %2654 = vmatprep.subr.bf16.mxu0 0
    %2655 = vmatpush1.bf16.msra.mxu0 0
    %2656 = vmatprep.subr.bf16.mxu0 0
    %2657 = vmatpush1.bf16.msra.mxu0 0
    %2658 = vmatprep.subr.bf16.mxu0 0
    %2659 = vmatpush1.bf16.msra.mxu0 0
    %2660 = vmatprep.subr.bf16.mxu0 0
    %2661 = vmatpush1.bf16.msra.mxu0 0
    %2662 = vmatprep.subr.bf16.mxu0 0
    %2663 = vmatpush1.bf16.msra.mxu0 0
    %2664 = vmatprep.subr.bf16.mxu0 0
    %2665 = vmatpush1.bf16.msra.mxu0 0
    %2666 = vmatprep.mubr.bf16.mxu0 0
    %2667 = vmatmul.mubr.bf16.gmra.mrb[0].mxu0 %v2633
    %v2668 = vpop.f32.mrb[0].mxu0
    %v2669 = vadd.f32 0.0, %v2668
    %v2670 = vpop.f32.mrb[0].mxu0
    %v2671 = vadd.f32 0.0, %v2670
    %v2672 = vpop.f32.mrb[0].mxu0
    %v2673 = vadd.f32 0.0, %v2672
    %v2674 = vpop.f32.mrb[0].mxu0
    %v2675 = vadd.f32 0.0, %v2674
    %2676 = vdwg.mxu0
    %v2677 = vadd.f32 %v2478, %v2669
    %v2678 = vadd.f32 %v2480, %v2671
    %v2679 = vadd.f32 %v2482, %v2673
    %v2680 = vadd.f32 %v2484, %v2675
    %s2681 = scalar_lea.vmem %s3, 384
    %v2682 = vld [vmem:[%s2681] sm:$0xff]
    %v2683 = vld [vmem:[%s2681 + $0x8] sm:$0xff]
    %v2684 = vld [vmem:[%s2681 + $0x10] sm:$0xff]
    %v2685 = vld [vmem:[%s2681 + $0x18] sm:$0xff]
    %v2686 = vld [vmem:[%s2681 + $0x20] sm:$0xff]
    %v2687 = vld [vmem:[%s2681 + $0x28] sm:$0xff]
    %v2688 = vld [vmem:[%s2681 + $0x30] sm:$0xff]
    %v2689 = vld [vmem:[%s2681 + $0x38] sm:$0xff]
    %v2690 = vld [vmem:[%s2681 + $0x40] sm:$0xff]
    %v2691 = vld [vmem:[%s2681 + $0x48] sm:$0xff]
    %v2692 = vld [vmem:[%s2681 + $0x50] sm:$0xff]
    %v2693 = vld [vmem:[%s2681 + $0x58] sm:$0xff]
    %v2694 = vld [vmem:[%s2681 + $0x60] sm:$0xff]
    %v2695 = vld [vmem:[%s2681 + $0x68] sm:$0xff]
    %v2696 = vld [vmem:[%s2681 + $0x70] sm:$0xff]
    %v2697 = vld [vmem:[%s2681 + $0x78] sm:$0xff]
    %v2714 = vunpack.c.l.b16 %v2682
    %v2715 = vunpack.c.h.b16 %v2682
    %v2716 = vunpack.c.l.b16 %v2683
    %v2717 = vunpack.c.h.b16 %v2683
    %v2718 = vunpack.c.l.b16 %v2684
    %v2719 = vunpack.c.h.b16 %v2684
    %v2720 = vunpack.c.l.b16 %v2685
    %v2721 = vunpack.c.h.b16 %v2685
    %v2722 = vunpack.c.l.b16 %v2686
    %v2723 = vunpack.c.h.b16 %v2686
    %v2724 = vunpack.c.l.b16 %v2687
    %v2725 = vunpack.c.h.b16 %v2687
    %v2726 = vunpack.c.l.b16 %v2688
    %v2727 = vunpack.c.h.b16 %v2688
    %v2728 = vunpack.c.l.b16 %v2689
    %v2729 = vunpack.c.h.b16 %v2689
    %v2730 = vunpack.c.l.b16 %v2690
    %v2731 = vunpack.c.h.b16 %v2690
    %v2732 = vunpack.c.l.b16 %v2691
    %v2733 = vunpack.c.h.b16 %v2691
    %v2734 = vunpack.c.l.b16 %v2692
    %v2735 = vunpack.c.h.b16 %v2692
    %v2736 = vunpack.c.l.b16 %v2693
    %v2737 = vunpack.c.h.b16 %v2693
    %v2738 = vunpack.c.l.b16 %v2694
    %v2739 = vunpack.c.h.b16 %v2694
    %v2740 = vunpack.c.l.b16 %v2695
    %v2741 = vunpack.c.h.b16 %v2695
    %v2742 = vunpack.c.l.b16 %v2696
    %v2743 = vunpack.c.h.b16 %v2696
    %v2744 = vunpack.c.l.b16 %v2697
    %v2745 = vunpack.c.h.b16 %v2697
    %v2746 = vpack.c.b16 %v2716, %v2714
    %v2747 = vpack.c.b16 %v2717, %v2715
    %v2748 = vpack.c.b16 %v2720, %v2718
    %v2749 = vpack.c.b16 %v2721, %v2719
    %v2750 = vpack.c.b16 %v2724, %v2722
    %v2751 = vpack.c.b16 %v2725, %v2723
    %v2752 = vpack.c.b16 %v2728, %v2726
    %v2753 = vpack.c.b16 %v2729, %v2727
    %v2754 = vpack.c.b16 %v2732, %v2730
    %v2755 = vpack.c.b16 %v2733, %v2731
    %v2756 = vpack.c.b16 %v2736, %v2734
    %v2757 = vpack.c.b16 %v2737, %v2735
    %v2758 = vpack.c.b16 %v2740, %v2738
    %v2759 = vpack.c.b16 %v2741, %v2739
    %v2760 = vpack.c.b16 %v2744, %v2742
    %v2761 = vpack.c.b16 %v2745, %v2743
    %2778 = vmatprep.subr.bf16.mxu0 %v2747
    %2779 = vmatpush1.bf16.msra.mxu0 %v2746
    %2780 = vmatprep.subr.bf16.mxu0 %v2749
    %2781 = vmatpush1.bf16.msra.mxu0 %v2748
    %2782 = vmatprep.subr.bf16.mxu0 %v2751
    %2783 = vmatpush1.bf16.msra.mxu0 %v2750
    %2784 = vmatprep.subr.bf16.mxu0 %v2753
    %2785 = vmatpush1.bf16.msra.mxu0 %v2752
    %2786 = vmatprep.subr.bf16.mxu0 %v2755
    %2787 = vmatpush1.bf16.msra.mxu0 %v2754
    %2788 = vmatprep.subr.bf16.mxu0 %v2757
    %2789 = vmatpush1.bf16.msra.mxu0 %v2756
    %2790 = vmatprep.subr.bf16.mxu0 %v2759
    %2791 = vmatpush1.bf16.msra.mxu0 %v2758
    %2792 = vmatprep.subr.bf16.mxu0 %v2761
    %2793 = vmatpush1.bf16.msra.mxu0 %v2760
    %2794 = vmatprep.subr.bf16.mxu0 0
    %2795 = vmatpush1.bf16.msra.mxu0 0
    %2796 = vmatprep.subr.bf16.mxu0 0
    %2797 = vmatpush1.bf16.msra.mxu0 0
    %2798 = vmatprep.subr.bf16.mxu0 0
    %2799 = vmatpush1.bf16.msra.mxu0 0
    %2800 = vmatprep.subr.bf16.mxu0 0
    %2801 = vmatpush1.bf16.msra.mxu0 0
    %2802 = vmatprep.subr.bf16.mxu0 0
    %2803 = vmatpush1.bf16.msra.mxu0 0
    %2804 = vmatprep.subr.bf16.mxu0 0
    %2805 = vmatpush1.bf16.msra.mxu0 0
    %2806 = vmatprep.subr.bf16.mxu0 0
    %2807 = vmatpush1.bf16.msra.mxu0 0
    %2808 = vmatprep.subr.bf16.mxu0 0
    %2809 = vmatpush1.bf16.msra.mxu0 0
    %2810 = vmatprep.mubr.bf16.mxu0 0
    %2811 = vmatmul.mubr.bf16.gmra.mrb[0].mxu0 %v2633
    %v2812 = vpop.f32.mrb[0].mxu0
    %v2813 = vadd.f32 0.0, %v2812
    %v2814 = vpop.f32.mrb[0].mxu0
    %v2815 = vadd.f32 0.0, %v2814
    %v2816 = vpop.f32.mrb[0].mxu0
    %v2817 = vadd.f32 0.0, %v2816
    %v2818 = vpop.f32.mrb[0].mxu0
    %v2819 = vadd.f32 0.0, %v2818
    %2820 = vdwg.mxu0
    %v2821 = vadd.f32 %v2626, %v2813
    %v2822 = vadd.f32 %v2627, %v2815
    %v2823 = vadd.f32 %v2628, %v2817
    %v2824 = vadd.f32 %v2629, %v2819
    %s2825 = sadd.s32 %s2105, 32
    %s2826 = sshra.s32 %s2825, 4
    %s2827 = sand.u32 %s2825, 15
    %s2828 = smul.addr %s2826, 8
    %s2829 = scalar_lea.vmem [#allocation2], %s2828
    %v2830 = vld [vmem:[%s2829] sm:$0xff]
    %2831 = vmatprep.subr.bf16.mxu0 %v2747
    %2832 = vmatpush1.bf16.msra.mxu0 %v2746
    %2833 = vmatprep.subr.bf16.mxu0 %v2749
    %2834 = vmatpush1.bf16.msra.mxu0 %v2748
    %2835 = vmatprep.subr.bf16.mxu0 %v2751
    %2836 = vmatpush1.bf16.msra.mxu0 %v2750
    %2837 = vmatprep.subr.bf16.mxu0 %v2753
    %2838 = vmatpush1.bf16.msra.mxu0 %v2752
    %2839 = vmatprep.subr.bf16.mxu0 %v2755
    %2840 = vmatpush1.bf16.msra.mxu0 %v2754
    %2841 = vmatprep.subr.bf16.mxu0 %v2757
    %2842 = vmatpush1.bf16.msra.mxu0 %v2756
    %2843 = vmatprep.subr.bf16.mxu0 %v2759
    %2844 = vmatpush1.bf16.msra.mxu0 %v2758
    %2845 = vmatprep.subr.bf16.mxu0 %v2761
    %2846 = vmatpush1.bf16.msra.mxu0 %v2760
    %2847 = vmatprep.subr.bf16.mxu0 0
    %2848 = vmatpush1.bf16.msra.mxu0 0
    %2849 = vmatprep.subr.bf16.mxu0 0
    %2850 = vmatpush1.bf16.msra.mxu0 0
    %2851 = vmatprep.subr.bf16.mxu0 0
    %2852 = vmatpush1.bf16.msra.mxu0 0
    %2853 = vmatprep.subr.bf16.mxu0 0
    %2854 = vmatpush1.bf16.msra.mxu0 0
    %2855 = vmatprep.subr.bf16.mxu0 0
    %2856 = vmatpush1.bf16.msra.mxu0 0
    %2857 = vmatprep.subr.bf16.mxu0 0
    %2858 = vmatpush1.bf16.msra.mxu0 0
    %2859 = vmatprep.subr.bf16.mxu0 0
    %2860 = vmatpush1.bf16.msra.mxu0 0
    %2861 = vmatprep.subr.bf16.mxu0 0
    %2862 = vmatpush1.bf16.msra.mxu0 0
    %2863 = vmatprep.mubr.bf16.mxu0 0
    %2864 = vmatmul.mubr.bf16.gmra.mrb[0].mxu0 %v2830
    %v2865 = vpop.f32.mrb[0].mxu0
    %v2866 = vadd.f32 0.0, %v2865
    %v2867 = vpop.f32.mrb[0].mxu0
    %v2868 = vadd.f32 0.0, %v2867
    %v2869 = vpop.f32.mrb[0].mxu0
    %v2870 = vadd.f32 0.0, %v2869
    %v2871 = vpop.f32.mrb[0].mxu0
    %v2872 = vadd.f32 0.0, %v2871
    %2873 = vdwg.mxu0
    %v2874 = vadd.f32 %v2677, %v2866
    %v2875 = vadd.f32 %v2678, %v2868
    %v2876 = vadd.f32 %v2679, %v2870
    %v2877 = vadd.f32 %v2680, %v2872
    %s2878 = scalar_lea.vmem %s3, 512
    %v2879 = vld [vmem:[%s2878] sm:$0xff]
    %v2880 = vld [vmem:[%s2878 + $0x8] sm:$0xff]
    %v2881 = vld [vmem:[%s2878 + $0x10] sm:$0xff]
    %v2882 = vld [vmem:[%s2878 + $0x18] sm:$0xff]
    %v2883 = vld [vmem:[%s2878 + $0x20] sm:$0xff]
    %v2884 = vld [vmem:[%s2878 + $0x28] sm:$0xff]
    %v2885 = vld [vmem:[%s2878 + $0x30] sm:$0xff]
    %v2886 = vld [vmem:[%s2878 + $0x38] sm:$0xff]
    %v2887 = vld [vmem:[%s2878 + $0x40] sm:$0xff]
    %v2888 = vld [vmem:[%s2878 + $0x48] sm:$0xff]
    %v2889 = vld [vmem:[%s2878 + $0x50] sm:$0xff]
    %v2890 = vld [vmem:[%s2878 + $0x58] sm:$0xff]
    %v2891 = vld [vmem:[%s2878 + $0x60] sm:$0xff]
    %v2892 = vld [vmem:[%s2878 + $0x68] sm:$0xff]
    %v2893 = vld [vmem:[%s2878 + $0x70] sm:$0xff]
    %v2894 = vld [vmem:[%s2878 + $0x78] sm:$0xff]
    %v2911 = vunpack.c.l.b16 %v2879
    %v2912 = vunpack.c.h.b16 %v2879
    %v2913 = vunpack.c.l.b16 %v2880
    %v2914 = vunpack.c.h.b16 %v2880
    %v2915 = vunpack.c.l.b16 %v2881
    %v2916 = vunpack.c.h.b16 %v2881
    %v2917 = vunpack.c.l.b16 %v2882
    %v2918 = vunpack.c.h.b16 %v2882
    %v2919 = vunpack.c.l.b16 %v2883
    %v2920 = vunpack.c.h.b16 %v2883
    %v2921 = vunpack.c.l.b16 %v2884
    %v2922 = vunpack.c.h.b16 %v2884
    %v2923 = vunpack.c.l.b16 %v2885
    %v2924 = vunpack.c.h.b16 %v2885
    %v2925 = vunpack.c.l.b16 %v2886
    %v2926 = vunpack.c.h.b16 %v2886
    %v2927 = vunpack.c.l.b16 %v2887
    %v2928 = vunpack.c.h.b16 %v2887
    %v2929 = vunpack.c.l.b16 %v2888
    %v2930 = vunpack.c.h.b16 %v2888
    %v2931 = vunpack.c.l.b16 %v2889
    %v2932 = vunpack.c.h.b16 %v2889
    %v2933 = vunpack.c.l.b16 %v2890
    %v2934 = vunpack.c.h.b16 %v2890
    %v2935 = vunpack.c.l.b16 %v2891
    %v2936 = vunpack.c.h.b16 %v2891
    %v2937 = vunpack.c.l.b16 %v2892
    %v2938 = vunpack.c.h.b16 %v2892
    %v2939 = vunpack.c.l.b16 %v2893
    %v2940 = vunpack.c.h.b16 %v2893
    %v2941 = vunpack.c.l.b16 %v2894
    %v2942 = vunpack.c.h.b16 %v2894
    %v2943 = vpack.c.b16 %v2913, %v2911
    %v2944 = vpack.c.b16 %v2914, %v2912
    %v2945 = vpack.c.b16 %v2917, %v2915
    %v2946 = vpack.c.b16 %v2918, %v2916
    %v2947 = vpack.c.b16 %v2921, %v2919
    %v2948 = vpack.c.b16 %v2922, %v2920
    %v2949 = vpack.c.b16 %v2925, %v2923
    %v2950 = vpack.c.b16 %v2926, %v2924
    %v2951 = vpack.c.b16 %v2929, %v2927
    %v2952 = vpack.c.b16 %v2930, %v2928
    %v2953 = vpack.c.b16 %v2933, %v2931
    %v2954 = vpack.c.b16 %v2934, %v2932
    %v2955 = vpack.c.b16 %v2937, %v2935
    %v2956 = vpack.c.b16 %v2938, %v2936
    %v2957 = vpack.c.b16 %v2941, %v2939
    %v2958 = vpack.c.b16 %v2942, %v2940
    %2975 = vmatprep.subr.bf16.mxu0 %v2944
    %2976 = vmatpush1.bf16.msra.mxu0 %v2943
    %2977 = vmatprep.subr.bf16.mxu0 %v2946
    %2978 = vmatpush1.bf16.msra.mxu0 %v2945
    %2979 = vmatprep.subr.bf16.mxu0 %v2948
    %2980 = vmatpush1.bf16.msra.mxu0 %v2947
    %2981 = vmatprep.subr.bf16.mxu0 %v2950
    %2982 = vmatpush1.bf16.msra.mxu0 %v2949
    %2983 = vmatprep.subr.bf16.mxu0 %v2952
    %2984 = vmatpush1.bf16.msra.mxu0 %v2951
    %2985 = vmatprep.subr.bf16.mxu0 %v2954
    %2986 = vmatpush1.bf16.msra.mxu0 %v2953
    %2987 = vmatprep.subr.bf16.mxu0 %v2956
    %2988 = vmatpush1.bf16.msra.mxu0 %v2955
    %2989 = vmatprep.subr.bf16.mxu0 %v2958
    %2990 = vmatpush1.bf16.msra.mxu0 %v2957
    %2991 = vmatprep.subr.bf16.mxu0 0
    %2992 = vmatpush1.bf16.msra.mxu0 0
    %2993 = vmatprep.subr.bf16.mxu0 0
    %2994 = vmatpush1.bf16.msra.mxu0 0
    %2995 = vmatprep.subr.bf16.mxu0 0
    %2996 = vmatpush1.bf16.msra.mxu0 0
    %2997 = vmatprep.subr.bf16.mxu0 0
    %2998 = vmatpush1.bf16.msra.mxu0 0
    %2999 = vmatprep.subr.bf16.mxu0 0
    %3000 = vmatpush1.bf16.msra.mxu0 0
    %3001 = vmatprep.subr.bf16.mxu0 0
    %3002 = vmatpush1.bf16.msra.mxu0 0
    %3003 = vmatprep.subr.bf16.mxu0 0
    %3004 = vmatpush1.bf16.msra.mxu0 0
    %3005 = vmatprep.subr.bf16.mxu0 0
    %3006 = vmatpush1.bf16.msra.mxu0 0
    %3007 = vmatprep.mubr.bf16.mxu0 0
    %3008 = vmatmul.mubr.bf16.gmra.mrb[0].mxu0 %v2830
    %v3009 = vpop.f32.mrb[0].mxu0
    %v3010 = vadd.f32 0.0, %v3009
    %v3011 = vpop.f32.mrb[0].mxu0
    %v3012 = vadd.f32 0.0, %v3011
    %v3013 = vpop.f32.mrb[0].mxu0
    %v3014 = vadd.f32 0.0, %v3013
    %v3015 = vpop.f32.mrb[0].mxu0
    %v3016 = vadd.f32 0.0, %v3015
    %3017 = vdwg.mxu0
    %v3018 = vadd.f32 %v2821, %v3010
    %v3019 = vadd.f32 %v2822, %v3012
    %v3020 = vadd.f32 %v2823, %v3014
    %v3021 = vadd.f32 %v2824, %v3016
    %s3022 = sadd.s32 %s2826, 7
    %s3023 = smul.addr %s3022, 8
    %s3024 = scalar_lea.vmem [#allocation2], %s3023
    %v3025 = vld [vmem:[%s3024] sm:$0xff]
    %3026 = vmatprep.subr.bf16.mxu0 %v2944
    %3027 = vmatpush1.bf16.msra.mxu0 %v2943
    %3028 = vmatprep.subr.bf16.mxu0 %v2946
    %3029 = vmatpush1.bf16.msra.mxu0 %v2945
    %3030 = vmatprep.subr.bf16.mxu0 %v2948
    %3031 = vmatpush1.bf16.msra.mxu0 %v2947
    %3032 = vmatprep.subr.bf16.mxu0 %v2950
    %3033 = vmatpush1.bf16.msra.mxu0 %v2949
    %3034 = vmatprep.subr.bf16.mxu0 %v2952
    %3035 = vmatpush1.bf16.msra.mxu0 %v2951
    %3036 = vmatprep.subr.bf16.mxu0 %v2954
    %3037 = vmatpush1.bf16.msra.mxu0 %v2953
    %3038 = vmatprep.subr.bf16.mxu0 %v2956
    %3039 = vmatpush1.bf16.msra.mxu0 %v2955
    %3040 = vmatprep.subr.bf16.mxu0 %v2958
    %3041 = vmatpush1.bf16.msra.mxu0 %v2957
    %3042 = vmatprep.subr.bf16.mxu0 0
    %3043 = vmatpush1.bf16.msra.mxu0 0
    %3044 = vmatprep.subr.bf16.mxu0 0
    %3045 = vmatpush1.bf16.msra.mxu0 0
    %3046 = vmatprep.subr.bf16.mxu0 0
    %3047 = vmatpush1.bf16.msra.mxu0 0
    %3048 = vmatprep.subr.bf16.mxu0 0
    %3049 = vmatpush1.bf16.msra.mxu0 0
    %3050 = vmatprep.subr.bf16.mxu0 0
    %3051 = vmatpush1.bf16.msra.mxu0 0
    %3052 = vmatprep.subr.bf16.mxu0 0
    %3053 = vmatpush1.bf16.msra.mxu0 0
    %3054 = vmatprep.subr.bf16.mxu0 0
    %3055 = vmatpush1.bf16.msra.mxu0 0
    %3056 = vmatprep.subr.bf16.mxu0 0
    %3057 = vmatpush1.bf16.msra.mxu0 0
    %3058 = vmatprep.mubr.bf16.mxu0 0
    %3059 = vmatmul.mubr.bf16.gmra.mrb[0].mxu0 %v3025
    %v3060 = vpop.f32.mrb[0].mxu0
    %v3061 = vadd.f32 0.0, %v3060
    %v3062 = vpop.f32.mrb[0].mxu0
    %v3063 = vadd.f32 0.0, %v3062
    %v3064 = vpop.f32.mrb[0].mxu0
    %v3065 = vadd.f32 0.0, %v3064
    %v3066 = vpop.f32.mrb[0].mxu0
    %v3067 = vadd.f32 0.0, %v3066
    %3068 = vdwg.mxu0
    %v3069 = vadd.f32 %v2874, %v3061
    %v3070 = vadd.f32 %v2875, %v3063
    %v3071 = vadd.f32 %v2876, %v3065
    %v3072 = vadd.f32 %v2877, %v3067
    %v3073 = vmax.f32 %v3018, %v3069
    %v3074 = vmax.f32 %v3019, %v3070
    %v3075 = vmax.f32 %v3020, %v3071
    %v3076 = vmax.f32 %v3021, %v3072
    %v3077 = vmax.f32 %v3073, %v3074
    %v3078 = vmax.f32 %v3075, %v3076
    %v3080 = vlaneseq
    %v3081 = vshrl.u32 %v3080, 7
    %v3082 = vsub.s32 0, %v3081
    %v3083 = vrot.slane %v28, %v3082
    %v3085 = vadd.f32 %v3077, %v3083
    %v3086 = vadd.f32 %v3078, %v3083
    %v3087 = vmax.f32 %v3085, 0.0
    %v3088 = vmax.f32 %v3086, 0.0
    %v3089 = vpack.c.bf16 %v3088, %v3087
    %s3090 = sshra.s32 %s2105, 4
    %s3091 = sand.u32 %s2105, 15
    %s3092 = smul.addr %s3090, 8
    %s3093 = scalar_lea.vmem [#allocation3], %s3092
    %3094 = vst [vmem:[%s3093] sm:$0xff] %v3089
  $region48: #{net_bulk_forward.1} parent=0 // loop_footer
    %s2104 = sadd.s32 1, %s2100
  $region49: #{net_bulk_forward.1} parent=0 // loop_footer_branch
    %2099 = sbr.rel target = $region45
  $region50: #{net_bulk_forward.1} parent=0 // loop_exit
    _
  %v3095 = vld [vmem:[#allocation3] sm:$0xff]
  %v3096 = vld [vmem:[%s5] sm:$0xf]
  %v3097 = vld [vmem:[%s5 + $0x4] sm:$0xf]
  %v3098 = vld [vmem:[%s5 + $0x8] sm:$0xf]
  %v3099 = vld [vmem:[%s5 + $0xc] sm:$0xf]
  %v3100 = vld [vmem:[%s5 + $0x10] sm:$0xf]
  %v3101 = vld [vmem:[%s5 + $0x14] sm:$0xf]
  %v3102 = vld [vmem:[%s5 + $0x18] sm:$0xf]
  %v3103 = vld [vmem:[%s5 + $0x1c] sm:$0xf]
  %v3104 = vld [vmem:[%s5 + $0x20] sm:$0xf]
  %v3105 = vld [vmem:[%s5 + $0x24] sm:$0xf]
  %v3106 = vld [vmem:[%s5 + $0x28] sm:$0xf]
  %v3107 = vld [vmem:[%s5 + $0x2c] sm:$0xf]
  %v3108 = vld [vmem:[%s5 + $0x30] sm:$0xf]
  %v3109 = vld [vmem:[%s5 + $0x34] sm:$0xf]
  %v3110 = vld [vmem:[%s5 + $0x38] sm:$0xf]
  %v3111 = vld [vmem:[%s5 + $0x3c] sm:$0xf]
  %v3112 = vld [vmem:[#allocation3 + $0x8] sm:$0xff]
  %s3113 = scalar_lea.vmem %s5, 64
  %v3114 = vld [vmem:[%s3113] sm:$0xf]
  %v3115 = vld [vmem:[%s3113 + $0x4] sm:$0xf]
  %v3116 = vld [vmem:[%s3113 + $0x8] sm:$0xf]
  %v3117 = vld [vmem:[%s3113 + $0xc] sm:$0xf]
  %v3118 = vld [vmem:[%s3113 + $0x10] sm:$0xf]
  %v3119 = vld [vmem:[%s3113 + $0x14] sm:$0xf]
  %v3120 = vld [vmem:[%s3113 + $0x18] sm:$0xf]
  %v3121 = vld [vmem:[%s3113 + $0x1c] sm:$0xf]
  %v3122 = vld [vmem:[%s3113 + $0x20] sm:$0xf]
  %v3123 = vld [vmem:[%s3113 + $0x24] sm:$0xf]
  %v3124 = vld [vmem:[%s3113 + $0x28] sm:$0xf]
  %v3125 = vld [vmem:[%s3113 + $0x2c] sm:$0xf]
  %v3126 = vld [vmem:[%s3113 + $0x30] sm:$0xf]
  %v3127 = vld [vmem:[%s3113 + $0x34] sm:$0xf]
  %v3128 = vld [vmem:[%s3113 + $0x38] sm:$0xf]
  %v3129 = vld [vmem:[%s3113 + $0x3c] sm:$0xf]
  %v3146 = vunpack.c.l.b16 %v3114
  %v3147 = vunpack.c.l.b16 %v3115
  %v3148 = vunpack.c.l.b16 %v3116
  %v3149 = vunpack.c.l.b16 %v3117
  %v3150 = vunpack.c.l.b16 %v3118
  %v3151 = vunpack.c.l.b16 %v3119
  %v3152 = vunpack.c.l.b16 %v3120
  %v3153 = vunpack.c.l.b16 %v3121
  %v3154 = vunpack.c.l.b16 %v3122
  %v3155 = vunpack.c.l.b16 %v3123
  %v3156 = vunpack.c.l.b16 %v3124
  %v3157 = vunpack.c.l.b16 %v3125
  %v3158 = vunpack.c.l.b16 %v3126
  %v3159 = vunpack.c.l.b16 %v3127
  %v3160 = vunpack.c.l.b16 %v3128
  %v3161 = vunpack.c.l.b16 %v3129
  %v3162 = vpack.c.b16 %v3147, %v3146
  %v3163 = vpack.c.b16 %v3149, %v3148
  %v3164 = vpack.c.b16 %v3151, %v3150
  %v3165 = vpack.c.b16 %v3153, %v3152
  %v3166 = vpack.c.b16 %v3155, %v3154
  %v3167 = vpack.c.b16 %v3157, %v3156
  %v3168 = vpack.c.b16 %v3159, %v3158
  %v3169 = vpack.c.b16 %v3161, %v3160
  %3178 = vmatprep.subr.bf16.mxu0 0
  %3179 = vmatpush1.bf16.msra.mxu0 %v3162
  %3180 = vmatprep.subr.bf16.mxu0 0
  %3181 = vmatpush1.bf16.msra.mxu0 %v3163
  %3182 = vmatprep.subr.bf16.mxu0 0
  %3183 = vmatpush1.bf16.msra.mxu0 %v3164
  %3184 = vmatprep.subr.bf16.mxu0 0
  %3185 = vmatpush1.bf16.msra.mxu0 %v3165
  %3186 = vmatprep.subr.bf16.mxu0 0
  %3187 = vmatpush1.bf16.msra.mxu0 %v3166
  %3188 = vmatprep.subr.bf16.mxu0 0
  %3189 = vmatpush1.bf16.msra.mxu0 %v3167
  %3190 = vmatprep.subr.bf16.mxu0 0
  %3191 = vmatpush1.bf16.msra.mxu0 %v3168
  %3192 = vmatprep.subr.bf16.mxu0 0
  %3193 = vmatpush1.bf16.msra.mxu0 %v3169
  %3194 = vmatprep.subr.bf16.mxu0 0
  %3195 = vmatpush1.bf16.msra.mxu0 0
  %3196 = vmatprep.subr.bf16.mxu0 0
  %3197 = vmatpush1.bf16.msra.mxu0 0
  %3198 = vmatprep.subr.bf16.mxu0 0
  %3199 = vmatpush1.bf16.msra.mxu0 0
  %3200 = vmatprep.subr.bf16.mxu0 0
  %3201 = vmatpush1.bf16.msra.mxu0 0
  %3202 = vmatprep.subr.bf16.mxu0 0
  %3203 = vmatpush1.bf16.msra.mxu0 0
  %3204 = vmatprep.subr.bf16.mxu0 0
  %3205 = vmatpush1.bf16.msra.mxu0 0
  %3206 = vmatprep.subr.bf16.mxu0 0
  %3207 = vmatpush1.bf16.msra.mxu0 0
  %3208 = vmatprep.subr.bf16.mxu0 0
  %3209 = vmatpush1.bf16.msra.mxu0 0
  %3210 = vmatprep.mubr.bf16.mxu0 0
  %3211 = vmatmul.mubr.bf16.gmra.mrb[0].mxu0 %v3112
  %v3212 = vpop.f32.mrb[0].mxu0
  %v3213 = vadd.f32 0.0, %v3212
  %v3214 = vpop.f32.mrb[0].mxu0
  %v3215 = vpop.f32.mrb[0].mxu0
  %v3216 = vadd.f32 0.0, %v3215
  %v3217 = vpop.f32.mrb[0].mxu0
  %3218 = vdwg.mxu0
  %v3235 = vunpack.c.l.b16 %v3096
  %v3236 = vunpack.c.l.b16 %v3097
  %v3237 = vunpack.c.l.b16 %v3098
  %v3238 = vunpack.c.l.b16 %v3099
  %v3239 = vunpack.c.l.b16 %v3100
  %v3240 = vunpack.c.l.b16 %v3101
  %v3241 = vunpack.c.l.b16 %v3102
  %v3242 = vunpack.c.l.b16 %v3103
  %v3243 = vunpack.c.l.b16 %v3104
  %v3244 = vunpack.c.l.b16 %v3105
  %v3245 = vunpack.c.l.b16 %v3106
  %v3246 = vunpack.c.l.b16 %v3107
  %v3247 = vunpack.c.l.b16 %v3108
  %v3248 = vunpack.c.l.b16 %v3109
  %v3249 = vunpack.c.l.b16 %v3110
  %v3250 = vunpack.c.l.b16 %v3111
  %v3251 = vpack.c.b16 %v3236, %v3235
  %v3252 = vpack.c.b16 %v3238, %v3237
  %v3253 = vpack.c.b16 %v3240, %v3239
  %v3254 = vpack.c.b16 %v3242, %v3241
  %v3255 = vpack.c.b16 %v3244, %v3243
  %v3256 = vpack.c.b16 %v3246, %v3245
  %v3257 = vpack.c.b16 %v3248, %v3247
  %v3258 = vpack.c.b16 %v3250, %v3249
  %3267 = vmatprep.subr.bf16.mxu0 0
  %3268 = vmatpush1.bf16.msra.mxu0 %v3251
  %3269 = vmatprep.subr.bf16.mxu0 0
  %3270 = vmatpush1.bf16.msra.mxu0 %v3252
  %3271 = vmatprep.subr.bf16.mxu0 0
  %3272 = vmatpush1.bf16.msra.mxu0 %v3253
  %3273 = vmatprep.subr.bf16.mxu0 0
  %3274 = vmatpush1.bf16.msra.mxu0 %v3254
  %3275 = vmatprep.subr.bf16.mxu0 0
  %3276 = vmatpush1.bf16.msra.mxu0 %v3255
  %3277 = vmatprep.subr.bf16.mxu0 0
  %3278 = vmatpush1.bf16.msra.mxu0 %v3256
  %3279 = vmatprep.subr.bf16.mxu0 0
  %3280 = vmatpush1.bf16.msra.mxu0 %v3257
  %3281 = vmatprep.subr.bf16.mxu0 0
  %3282 = vmatpush1.bf16.msra.mxu0 %v3258
  %3283 = vmatprep.subr.bf16.mxu0 0
  %3284 = vmatpush1.bf16.msra.mxu0 0
  %3285 = vmatprep.subr.bf16.mxu0 0
  %3286 = vmatpush1.bf16.msra.mxu0 0
  %3287 = vmatprep.subr.bf16.mxu0 0
  %3288 = vmatpush1.bf16.msra.mxu0 0
  %3289 = vmatprep.subr.bf16.mxu0 0
  %3290 = vmatpush1.bf16.msra.mxu0 0
  %3291 = vmatprep.subr.bf16.mxu0 0
  %3292 = vmatpush1.bf16.msra.mxu0 0
  %3293 = vmatprep.subr.bf16.mxu0 0
  %3294 = vmatpush1.bf16.msra.mxu0 0
  %3295 = vmatprep.subr.bf16.mxu0 0
  %3296 = vmatpush1.bf16.msra.mxu0 0
  %3297 = vmatprep.subr.bf16.mxu0 0
  %3298 = vmatpush1.bf16.msra.mxu0 0
  %3299 = vmatprep.mubr.bf16.mxu0 0
  %3300 = vmatmul.mubr.bf16.gmra.mrb[0].mxu0 %v3095
  %v3301 = vpop.f32.mrb[0].mxu0
  %v3302 = vadd.f32 %v3213, %v3301
  %v3303 = vpop.f32.mrb[0].mxu0
  %v3304 = vpop.f32.mrb[0].mxu0
  %v3305 = vadd.f32 %v3216, %v3304
  %v3306 = vpop.f32.mrb[0].mxu0
  %3307 = vdwg.mxu0
  %v3308 = vld [vmem:[#allocation3 + $0x10] sm:$0xff]
  %s3309 = scalar_lea.vmem %s5, 128
  %v3310 = vld [vmem:[%s3309] sm:$0xf]
  %v3311 = vld [vmem:[%s3309 + $0x4] sm:$0xf]
  %v3312 = vld [vmem:[%s3309 + $0x8] sm:$0xf]
  %v3313 = vld [vmem:[%s3309 + $0xc] sm:$0xf]
  %v3314 = vld [vmem:[%s3309 + $0x10] sm:$0xf]
  %v3315 = vld [vmem:[%s3309 + $0x14] sm:$0xf]
  %v3316 = vld [vmem:[%s3309 + $0x18] sm:$0xf]
  %v3317 = vld [vmem:[%s3309 + $0x1c] sm:$0xf]
  %v3318 = vld [vmem:[%s3309 + $0x20] sm:$0xf]
  %v3319 = vld [vmem:[%s3309 + $0x24] sm:$0xf]
  %v3320 = vld [vmem:[%s3309 + $0x28] sm:$0xf]
  %v3321 = vld [vmem:[%s3309 + $0x2c] sm:$0xf]
  %v3322 = vld [vmem:[%s3309 + $0x30] sm:$0xf]
  %v3323 = vld [vmem:[%s3309 + $0x34] sm:$0xf]
  %v3324 = vld [vmem:[%s3309 + $0x38] sm:$0xf]
  %v3325 = vld [vmem:[%s3309 + $0x3c] sm:$0xf]
  %v3342 = vunpack.c.l.b16 %v3310
  %v3343 = vunpack.c.l.b16 %v3311
  %v3344 = vunpack.c.l.b16 %v3312
  %v3345 = vunpack.c.l.b16 %v3313
  %v3346 = vunpack.c.l.b16 %v3314
  %v3347 = vunpack.c.l.b16 %v3315
  %v3348 = vunpack.c.l.b16 %v3316
  %v3349 = vunpack.c.l.b16 %v3317
  %v3350 = vunpack.c.l.b16 %v3318
  %v3351 = vunpack.c.l.b16 %v3319
  %v3352 = vunpack.c.l.b16 %v3320
  %v3353 = vunpack.c.l.b16 %v3321
  %v3354 = vunpack.c.l.b16 %v3322
  %v3355 = vunpack.c.l.b16 %v3323
  %v3356 = vunpack.c.l.b16 %v3324
  %v3357 = vunpack.c.l.b16 %v3325
  %v3358 = vpack.c.b16 %v3343, %v3342
  %v3359 = vpack.c.b16 %v3345, %v3344
  %v3360 = vpack.c.b16 %v3347, %v3346
  %v3361 = vpack.c.b16 %v3349, %v3348
  %v3362 = vpack.c.b16 %v3351, %v3350
  %v3363 = vpack.c.b16 %v3353, %v3352
  %v3364 = vpack.c.b16 %v3355, %v3354
  %v3365 = vpack.c.b16 %v3357, %v3356
  %3374 = vmatprep.subr.bf16.mxu0 0
  %3375 = vmatpush1.bf16.msra.mxu0 %v3358
  %3376 = vmatprep.subr.bf16.mxu0 0
  %3377 = vmatpush1.bf16.msra.mxu0 %v3359
  %3378 = vmatprep.subr.bf16.mxu0 0
  %3379 = vmatpush1.bf16.msra.mxu0 %v3360
  %3380 = vmatprep.subr.bf16.mxu0 0
  %3381 = vmatpush1.bf16.msra.mxu0 %v3361
  %3382 = vmatprep.subr.bf16.mxu0 0
  %3383 = vmatpush1.bf16.msra.mxu0 %v3362
  %3384 = vmatprep.subr.bf16.mxu0 0
  %3385 = vmatpush1.bf16.msra.mxu0 %v3363
  %3386 = vmatprep.subr.bf16.mxu0 0
  %3387 = vmatpush1.bf16.msra.mxu0 %v3364
  %3388 = vmatprep.subr.bf16.mxu0 0
  %3389 = vmatpush1.bf16.msra.mxu0 %v3365
  %3390 = vmatprep.subr.bf16.mxu0 0
  %3391 = vmatpush1.bf16.msra.mxu0 0
  %3392 = vmatprep.subr.bf16.mxu0 0
  %3393 = vmatpush1.bf16.msra.mxu0 0
  %3394 = vmatprep.subr.bf16.mxu0 0
  %3395 = vmatpush1.bf16.msra.mxu0 0
  %3396 = vmatprep.subr.bf16.mxu0 0
  %3397 = vmatpush1.bf16.msra.mxu0 0
  %3398 = vmatprep.subr.bf16.mxu0 0
  %3399 = vmatpush1.bf16.msra.mxu0 0
  %3400 = vmatprep.subr.bf16.mxu0 0
  %3401 = vmatpush1.bf16.msra.mxu0 0
  %3402 = vmatprep.subr.bf16.mxu0 0
  %3403 = vmatpush1.bf16.msra.mxu0 0
  %3404 = vmatprep.subr.bf16.mxu0 0
  %3405 = vmatpush1.bf16.msra.mxu0 0
  %3406 = vmatprep.mubr.bf16.mxu0 0
  %3407 = vmatmul.mubr.bf16.gmra.mrb[0].mxu0 %v3308
  %v3408 = vpop.f32.mrb[0].mxu0
  %v3409 = vadd.f32 0.0, %v3408
  %v3410 = vpop.f32.mrb[0].mxu0
  %v3411 = vpop.f32.mrb[0].mxu0
  %v3412 = vadd.f32 0.0, %v3411
  %v3413 = vpop.f32.mrb[0].mxu0
  %3414 = vdwg.mxu0
  %v3415 = vadd.f32 %v3302, %v3409
  %v3416 = vadd.f32 %v3305, %v3412
  %v3417 = vld [vmem:[#allocation3 + $0x18] sm:$0xff]
  %s3418 = scalar_lea.vmem %s5, 192
  %v3419 = vld [vmem:[%s3418] sm:$0xf]
  %v3420 = vld [vmem:[%s3418 + $0x4] sm:$0xf]
  %v3421 = vld [vmem:[%s3418 + $0x8] sm:$0xf]
  %v3422 = vld [vmem:[%s3418 + $0xc] sm:$0xf]
  %v3423 = vld [vmem:[%s3418 + $0x10] sm:$0xf]
  %v3424 = vld [vmem:[%s3418 + $0x14] sm:$0xf]
  %v3425 = vld [vmem:[%s3418 + $0x18] sm:$0xf]
  %v3426 = vld [vmem:[%s3418 + $0x1c] sm:$0xf]
  %v3427 = vld [vmem:[%s3418 + $0x20] sm:$0xf]
  %v3428 = vld [vmem:[%s3418 + $0x24] sm:$0xf]
  %v3429 = vld [vmem:[%s3418 + $0x28] sm:$0xf]
  %v3430 = vld [vmem:[%s3418 + $0x2c] sm:$0xf]
  %v3431 = vld [vmem:[%s3418 + $0x30] sm:$0xf]
  %v3432 = vld [vmem:[%s3418 + $0x34] sm:$0xf]
  %v3433 = vld [vmem:[%s3418 + $0x38] sm:$0xf]
  %v3434 = vld [vmem:[%s3418 + $0x3c] sm:$0xf]
  %v3451 = vunpack.c.l.b16 %v3419
  %v3452 = vunpack.c.l.b16 %v3420
  %v3453 = vunpack.c.l.b16 %v3421
  %v3454 = vunpack.c.l.b16 %v3422
  %v3455 = vunpack.c.l.b16 %v3423
  %v3456 = vunpack.c.l.b16 %v3424
  %v3457 = vunpack.c.l.b16 %v3425
  %v3458 = vunpack.c.l.b16 %v3426
  %v3459 = vunpack.c.l.b16 %v3427
  %v3460 = vunpack.c.l.b16 %v3428
  %v3461 = vunpack.c.l.b16 %v3429
  %v3462 = vunpack.c.l.b16 %v3430
  %v3463 = vunpack.c.l.b16 %v3431
  %v3464 = vunpack.c.l.b16 %v3432
  %v3465 = vunpack.c.l.b16 %v3433
  %v3466 = vunpack.c.l.b16 %v3434
  %v3467 = vpack.c.b16 %v3452, %v3451
  %v3468 = vpack.c.b16 %v3454, %v3453
  %v3469 = vpack.c.b16 %v3456, %v3455
  %v3470 = vpack.c.b16 %v3458, %v3457
  %v3471 = vpack.c.b16 %v3460, %v3459
  %v3472 = vpack.c.b16 %v3462, %v3461
  %v3473 = vpack.c.b16 %v3464, %v3463
  %v3474 = vpack.c.b16 %v3466, %v3465
  %3483 = vmatprep.subr.bf16.mxu0 0
  %3484 = vmatpush1.bf16.msra.mxu0 %v3467
  %3485 = vmatprep.subr.bf16.mxu0 0
  %3486 = vmatpush1.bf16.msra.mxu0 %v3468
  %3487 = vmatprep.subr.bf16.mxu0 0
  %3488 = vmatpush1.bf16.msra.mxu0 %v3469
  %3489 = vmatprep.subr.bf16.mxu0 0
  %3490 = vmatpush1.bf16.msra.mxu0 %v3470
  %3491 = vmatprep.subr.bf16.mxu0 0
  %3492 = vmatpush1.bf16.msra.mxu0 %v3471
  %3493 = vmatprep.subr.bf16.mxu0 0
  %3494 = vmatpush1.bf16.msra.mxu0 %v3472
  %3495 = vmatprep.subr.bf16.mxu0 0
  %3496 = vmatpush1.bf16.msra.mxu0 %v3473
  %3497 = vmatprep.subr.bf16.mxu0 0
  %3498 = vmatpush1.bf16.msra.mxu0 %v3474
  %3499 = vmatprep.subr.bf16.mxu0 0
  %3500 = vmatpush1.bf16.msra.mxu0 0
  %3501 = vmatprep.subr.bf16.mxu0 0
  %3502 = vmatpush1.bf16.msra.mxu0 0
  %3503 = vmatprep.subr.bf16.mxu0 0
  %3504 = vmatpush1.bf16.msra.mxu0 0
  %3505 = vmatprep.subr.bf16.mxu0 0
  %3506 = vmatpush1.bf16.msra.mxu0 0
  %3507 = vmatprep.subr.bf16.mxu0 0
  %3508 = vmatpush1.bf16.msra.mxu0 0
  %3509 = vmatprep.subr.bf16.mxu0 0
  %3510 = vmatpush1.bf16.msra.mxu0 0
  %3511 = vmatprep.subr.bf16.mxu0 0
  %3512 = vmatpush1.bf16.msra.mxu0 0
  %3513 = vmatprep.subr.bf16.mxu0 0
  %3514 = vmatpush1.bf16.msra.mxu0 0
  %3515 = vmatprep.mubr.bf16.mxu0 0
  %3516 = vmatmul.mubr.bf16.gmra.mrb[0].mxu0 %v3417
  %v3517 = vpop.f32.mrb[0].mxu0
  %v3518 = vadd.f32 0.0, %v3517
  %v3519 = vpop.f32.mrb[0].mxu0
  %v3520 = vpop.f32.mrb[0].mxu0
  %v3521 = vadd.f32 0.0, %v3520
  %v3522 = vpop.f32.mrb[0].mxu0
  %3523 = vdwg.mxu0
  %v3524 = vadd.f32 %v3415, %v3518
  %v3525 = vadd.f32 %v3416, %v3521
  %v3526 = vld [vmem:[#allocation3 + $0x20] sm:$0xff]
  %s3527 = scalar_lea.vmem %s5, 256
  %v3528 = vld [vmem:[%s3527] sm:$0xf]
  %v3529 = vld [vmem:[%s3527 + $0x4] sm:$0xf]
  %v3530 = vld [vmem:[%s3527 + $0x8] sm:$0xf]
  %v3531 = vld [vmem:[%s3527 + $0xc] sm:$0xf]
  %v3532 = vld [vmem:[%s3527 + $0x10] sm:$0xf]
  %v3533 = vld [vmem:[%s3527 + $0x14] sm:$0xf]
  %v3534 = vld [vmem:[%s3527 + $0x18] sm:$0xf]
  %v3535 = vld [vmem:[%s3527 + $0x1c] sm:$0xf]
  %v3536 = vld [vmem:[%s3527 + $0x20] sm:$0xf]
  %v3537 = vld [vmem:[%s3527 + $0x24] sm:$0xf]
  %v3538 = vld [vmem:[%s3527 + $0x28] sm:$0xf]
  %v3539 = vld [vmem:[%s3527 + $0x2c] sm:$0xf]
  %v3540 = vld [vmem:[%s3527 + $0x30] sm:$0xf]
  %v3541 = vld [vmem:[%s3527 + $0x34] sm:$0xf]
  %v3542 = vld [vmem:[%s3527 + $0x38] sm:$0xf]
  %v3543 = vld [vmem:[%s3527 + $0x3c] sm:$0xf]
  %v3560 = vunpack.c.l.b16 %v3528
  %v3561 = vunpack.c.l.b16 %v3529
  %v3562 = vunpack.c.l.b16 %v3530
  %v3563 = vunpack.c.l.b16 %v3531
  %v3564 = vunpack.c.l.b16 %v3532
  %v3565 = vunpack.c.l.b16 %v3533
  %v3566 = vunpack.c.l.b16 %v3534
  %v3567 = vunpack.c.l.b16 %v3535
  %v3568 = vunpack.c.l.b16 %v3536
  %v3569 = vunpack.c.l.b16 %v3537
  %v3570 = vunpack.c.l.b16 %v3538
  %v3571 = vunpack.c.l.b16 %v3539
  %v3572 = vunpack.c.l.b16 %v3540
  %v3573 = vunpack.c.l.b16 %v3541
  %v3574 = vunpack.c.l.b16 %v3542
  %v3575 = vunpack.c.l.b16 %v3543
  %v3576 = vpack.c.b16 %v3561, %v3560
  %v3577 = vpack.c.b16 %v3563, %v3562
  %v3578 = vpack.c.b16 %v3565, %v3564
  %v3579 = vpack.c.b16 %v3567, %v3566
  %v3580 = vpack.c.b16 %v3569, %v3568
  %v3581 = vpack.c.b16 %v3571, %v3570
  %v3582 = vpack.c.b16 %v3573, %v3572
  %v3583 = vpack.c.b16 %v3575, %v3574
  %3592 = vmatprep.subr.bf16.mxu0 0
  %3593 = vmatpush1.bf16.msra.mxu0 %v3576
  %3594 = vmatprep.subr.bf16.mxu0 0
  %3595 = vmatpush1.bf16.msra.mxu0 %v3577
  %3596 = vmatprep.subr.bf16.mxu0 0
  %3597 = vmatpush1.bf16.msra.mxu0 %v3578
  %3598 = vmatprep.subr.bf16.mxu0 0
  %3599 = vmatpush1.bf16.msra.mxu0 %v3579
  %3600 = vmatprep.subr.bf16.mxu0 0
  %3601 = vmatpush1.bf16.msra.mxu0 %v3580
  %3602 = vmatprep.subr.bf16.mxu0 0
  %3603 = vmatpush1.bf16.msra.mxu0 %v3581
  %3604 = vmatprep.subr.bf16.mxu0 0
  %3605 = vmatpush1.bf16.msra.mxu0 %v3582
  %3606 = vmatprep.subr.bf16.mxu0 0
  %3607 = vmatpush1.bf16.msra.mxu0 %v3583
  %3608 = vmatprep.subr.bf16.mxu0 0
  %3609 = vmatpush1.bf16.msra.mxu0 0
  %3610 = vmatprep.subr.bf16.mxu0 0
  %3611 = vmatpush1.bf16.msra.mxu0 0
  %3612 = vmatprep.subr.bf16.mxu0 0
  %3613 = vmatpush1.bf16.msra.mxu0 0
  %3614 = vmatprep.subr.bf16.mxu0 0
  %3615 = vmatpush1.bf16.msra.mxu0 0
  %3616 = vmatprep.subr.bf16.mxu0 0
  %3617 = vmatpush1.bf16.msra.mxu0 0
  %3618 = vmatprep.subr.bf16.mxu0 0
  %3619 = vmatpush1.bf16.msra.mxu0 0
  %3620 = vmatprep.subr.bf16.mxu0 0
  %3621 = vmatpush1.bf16.msra.mxu0 0
  %3622 = vmatprep.subr.bf16.mxu0 0
  %3623 = vmatpush1.bf16.msra.mxu0 0
  %3624 = vmatprep.mubr.bf16.mxu0 0
  %3625 = vmatmul.mubr.bf16.gmra.mrb[0].mxu0 %v3526
  %v3626 = vpop.f32.mrb[0].mxu0
  %v3627 = vadd.f32 0.0, %v3626
  %v3628 = vpop.f32.mrb[0].mxu0
  %v3629 = vpop.f32.mrb[0].mxu0
  %v3630 = vadd.f32 0.0, %v3629
  %v3631 = vpop.f32.mrb[0].mxu0
  %3632 = vdwg.mxu0
  %v3633 = vadd.f32 %v3524, %v3627
  %v3634 = vadd.f32 %v3525, %v3630
  %v3635 = vld [vmem:[%s6] sm:$0x1]
  %v3637 = vlaneseq
  %v3638 = vshrl.u32 %v3637, 7
  %v3639 = vsub.s32 0, %v3638
  %v3640 = vrot.slane %v3635, %v3639
  %v3642 = vadd.f32 %v3633, %v3640
  %v3643 = vadd.f32 %v3634, %v3640
  %v3644 = vtanh.pop %v3642
  %v3645 = vtanh.pop %v3643
  %3646 = vst [vmem:[%s7] sm:$0xff] %v3644
  %3647 = vst [vmem:[%s7 + $0x8] sm:$0xff] %v3645
  // Predicated region
  $region51: #{net_bulk_forward.1} parent=0 // pred_check
    _
  $region52: #{net_bulk_forward.1} parent=0 // pred_check_branch
    %3649 = sbr.rel (0) target = $region54
  $region53: #{net_bulk_forward.1} parent=0 // pred_region
    _
  $region54: #{net_bulk_forward.1} parent=0 // pred_fallthru
    _
  // Predicated region
  $region55: #{net_bulk_forward.1} parent=0 // pred_check
    _
  $region56: #{net_bulk_forward.1} parent=0 // pred_check_branch
    %3651 = sbr.rel (0) target = $region58
  $region57: #{net_bulk_forward.1} parent=0 // pred_region
    _
  $region58: #{net_bulk_forward.1} parent=0 // pred_fallthru
    _

</llo_original>
